<compile_context>
chip_gen: v7x
topology: tpu7x:2x2x1
jax: 0.10.0
libtpu: 0.0.40
codegen_flags: <defaults>
</compile_context>

<pallas_src>
import functools

import jax
import jax.numpy as jnp
import numpy as np
from jax import lax
from jax.experimental import pallas as pl
from jax.experimental.pallas import tpu as pltpu

_MASK_VALUE = -1e30  # large finite negative: exact zero attention weight after exp()


# --------------------------------- kernel -----------------------------------


def mhsa_kernel(*refs, heads, dim_head, matmul_dtype, has_mask):
    if has_mask:
        (q_ref, k_ref, v_ref, wq_ref, bq_ref, wk_ref, bk_ref, wv_ref, bv_ref,
         w0_ref, bias_ref, o_ref, qp_scr, m_scr, l_scr, acc_scr) = refs
    else:
        (q_ref, k_ref, v_ref, wq_ref, bq_ref, wk_ref, bk_ref, wv_ref, bv_ref,
         w0_ref, o_ref, qp_scr, m_scr, l_scr, acc_scr) = refs
        bias_ref = None

    f32 = jnp.float32
    ki = pl.program_id(2)
    nk = pl.num_programs(2)

    # ---- first kv step for this (batch, q-tile): init stats, project Q once ----
    @pl.when(ki == 0)
    def _init():
        m_scr[...] = jnp.full(m_scr.shape, -jnp.inf, f32)
        l_scr[...] = jnp.zeros(l_scr.shape, f32)
        acc_scr[...] = jnp.zeros(acc_scr.shape, f32)
        xq = q_ref[0].astype(matmul_dtype)                          # (tq, D)
        qp = jnp.dot(xq, wq_ref[...], preferred_element_type=f32) + bq_ref[...]
        qp_scr[...] = qp.astype(matmul_dtype)                       # scale pre-folded

    # ---- project this K/V tile (single cast to matmul_dtype, f32 accumulate) ----
    xk = k_ref[0].astype(matmul_dtype)                              # (tk, D)
    xv = v_ref[0].astype(matmul_dtype)
    kp = (jnp.dot(xk, wk_ref[...], preferred_element_type=f32)
          + bk_ref[...]).astype(matmul_dtype)                       # (tk, _dim)
    vp = (jnp.dot(xv, wv_ref[...], preferred_element_type=f32)
          + bv_ref[...]).astype(matmul_dtype)                       # (tk, _dim)

    qp = qp_scr[...]                                                # (tq, _dim)
    bias = bias_ref[...] if has_mask else None                      # (tq, tk) f32

    # ---- per-head online softmax (static unroll over heads) ----
    for h in range(heads):
        lo = h * dim_head
        hi = lo + dim_head
        s = lax.dot_general(qp[:, lo:hi], kp[:, lo:hi],
                            (((1,), (1,)), ((), ())),
                            preferred_element_type=f32)             # (tq, tk)
        if has_mask:
            s = s + bias
        m_prev = m_scr[h]                                           # (tq, 1)
        m_new = jnp.maximum(m_prev, jnp.max(s, axis=-1, keepdims=True))
        alpha = jnp.exp(m_prev - m_new)
        p = jnp.exp(s - m_new)                                      # (tq, tk) f32
        l_scr[h] = alpha * l_scr[h] + jnp.sum(p, axis=-1, keepdims=True)
        acc_scr[h] = alpha * acc_scr[h] + jnp.dot(
            p.astype(matmul_dtype), vp[:, lo:hi], preferred_element_type=f32)
        m_scr[h] = m_new

    # ---- last kv step: normalize per head, ONE matmul against W0, store ----
    @pl.when(ki == nk - 1)
    def _finalize():
        parts = [acc_scr[h] * pl.reciprocal(l_scr[h], approx=True)  # EUP recip
                 for h in range(heads)]
        o_heads = jnp.concatenate(parts, axis=-1).astype(matmul_dtype)  # (tq, _dim)
        o_ref[0] = jnp.dot(o_heads, w0_ref[...],
                           preferred_element_type=f32).astype(o_ref.dtype)


# --------------------------------- wrapper -----------------------------------


def mhsa_pallas(q, k, v, params, *, heads, dim_head, mask=None,
                q_tile=None, kv_tile=None):
    """Forward of MultiHeadSelfAttention.  q,k,v: (B,T,D).  mask: optional
    (T,T) bool, True = masked out (PyTorch masked_fill semantics)."""
    assert q.shape == k.shape == v.shape
    B, T, D = q.shape
    _dim = heads * dim_head

    wq, bq = params["wq"], params["bq"]
    wk, bk = params["wk"], params["bk"]
    wv, bv = params["wv"], params["bv"]
    w0 = params["w0"]
    Dp = w0.shape[-1]
    matmul_dtype = w0.dtype

    tq = T if q_tile is None else q_tile
    tk = T if kv_tile is None else kv_tile
    assert T % tq == 0 and T % tk == 0
    nq, nk = T // tq, T // tk
    has_mask = mask is not None
    if has_mask:
        assert mask.shape == (T, T), "mask must have shape (T, T)"
        # Lane constraint on the mask block: tk must be a lane-dense width.
        assert nk == 1 or tk % 128 == 0, "with a mask, kv_tile must be T or a multiple of 128"

    def const_spec(arr):
        shape = arr.shape
        return pl.BlockSpec(shape, lambda b, qi, ki: (0,) * len(shape))

    in_specs = [
        pl.BlockSpec((1, tq, D), lambda b, qi, ki: (b, qi, 0)),     # q tile
        pl.BlockSpec((1, tk, D), lambda b, qi, ki: (b, ki, 0)),     # k tile
        pl.BlockSpec((1, tk, D), lambda b, qi, ki: (b, ki, 0)),     # v tile
        const_spec(wq), const_spec(bq),                             # invariant weights
        const_spec(wk), const_spec(bk),
        const_spec(wv), const_spec(bv),
        const_spec(w0),
    ]
    inputs = [q, k, v, wq, bq, wk, bk, wv, bv, w0]

    if has_mask:
        attn_bias = jnp.where(mask, _MASK_VALUE, 0.0).astype(jnp.float32)  # (T, T)
        in_specs.append(pl.BlockSpec((tq, tk), lambda b, qi, ki: (qi, ki)))
        inputs.append(attn_bias)

    kernel = functools.partial(mhsa_kernel, heads=heads, dim_head=dim_head,
                               matmul_dtype=matmul_dtype, has_mask=has_mask)

    out = pl.pallas_call(
        kernel,
        out_shape=jax.ShapeDtypeStruct((B, T, Dp), q.dtype),
        grid_spec=pltpu.PrefetchScalarGridSpec(
            num_scalar_prefetch=0,
            grid=(B, nq, nk),
            in_specs=in_specs,
            out_specs=pl.BlockSpec((1, tq, Dp), lambda b, qi, ki: (b, qi, 0)),
            scratch_shapes=[
                pltpu.VMEM((tq, _dim), matmul_dtype),                # projected Q
                pltpu.VMEM((heads, tq, 1), jnp.float32),             # running max
                pltpu.VMEM((heads, tq, 1), jnp.float32),             # running sum
                pltpu.VMEM((heads, tq, dim_head), jnp.float32),      # PV accumulator
            ]),
        compiler_params=pltpu.CompilerParams(
            dimension_semantics=("parallel", "parallel", "arbitrary"),
            vmem_limit_bytes=32 * 1024 * 1024),
    )(*inputs)

    # Drop lane padding.
    return out[:, :, :D]


# --------------------- parameter setup / glue / reference --------------------


def init_torch_style_params(key, dim, heads, dim_head):
    """Weights in nn.Linear layout: (out_features, in_features)."""
    ks = jax.random.split(key, 7)
    _dim = heads * dim_head

    def w(kk, o, i):
        return jax.random.normal(kk, (o, i), jnp.float32) * 0.05

    def b(kk, o):
        return jax.random.normal(kk, (o,), jnp.float32) * 0.02

    return dict(
        Wq=w(ks[0], _dim, dim), bq=b(ks[1], _dim),
        Wk=w(ks[2], _dim, dim), bk=b(ks[3], _dim),
        Wv=w(ks[4], _dim, dim), bv=b(ks[5], _dim),
        W0=w(ks[6], dim, _dim),                      # bias=False
    )


def to_kernel_params(torch_params, heads, dim_head, matmul_dtype=jnp.bfloat16):
    """Transpose nn.Linear weights to (in, out); fold the einops head split into a
    head-major column permutation; fold the softmax scale into the Q projection;
    zero-pad W_0's output columns to a multiple of 128 (lane-dense store).
    bf16 MXU operands by default on all TPU generations (f32 accum/softmax)."""
    p = {n: np.asarray(v, np.float32) for n, v in torch_params.items()}
    _dim = heads * dim_head
    dim = p["Wq"].shape[1]
    Dp = ((dim + 127) // 128) * 128
    scale = float(dim_head) ** (-0.5)

    # new column h*dim_head + d  <-  old column d*heads + h  ('b t (d h) -> b h t d')
    perm = np.array([d * heads + h for h in range(heads) for d in range(dim_head)],
                    dtype=np.int32)

    def prep(W, b, s=1.0):
        return W[perm].T * s, (b[perm] * s)[None, :]

    wq, bq = prep(p["Wq"], p["bq"], scale)     # softmax scale folded into Q proj
    wk, bk = prep(p["Wk"], p["bk"])
    wv, bv = prep(p["Wv"], p["bv"])

    w0_pad = np.zeros((_dim, Dp), np.float32)
    w0_pad[:, :dim] = p["W0"].T                # 'b t (h d)' is already head-major

    return dict(
        wq=jnp.asarray(wq, matmul_dtype), bq=jnp.asarray(bq, jnp.float32),
        wk=jnp.asarray(wk, matmul_dtype), bk=jnp.asarray(bk, jnp.float32),
        wv=jnp.asarray(wv, matmul_dtype), bv=jnp.asarray(bv, jnp.float32),
        w0=jnp.asarray(w0_pad, matmul_dtype),
    )


def reference_forward(p, q, k, v, heads, dim_head, mask=None):
    """Pure-JAX mirror of the PyTorch MultiHeadSelfAttention.forward."""
    B, T, D = q.shape
    scale = float(dim_head) ** (-0.5)

    def lin(x, W, b=None):
        y = x @ W.T
        return y if b is None else y + b

    qp = lin(q, p["Wq"], p["bq"])
    kp = lin(k, p["Wk"], p["bk"])
    vp = lin(v, p["Wv"], p["bv"])

    def split(t):  # 'b t (d h) -> b h t d'
        return t.reshape(B, T, dim_head, heads).transpose(0, 3, 1, 2)

    qh, kh, vh = split(qp), split(kp), split(vp)
    s = jnp.einsum("bhid,bhjd->bhij", qh, kh) * scale
    if mask is not None:
        s = jnp.where(mask, -jnp.inf, s)
    attn = jax.nn.softmax(s, axis=-1)
    o = jnp.einsum("bhij,bhjd->bhid", attn, vh)
    o = o.transpose(0, 2, 1, 3).reshape(B, T, heads * dim_head)  # 'b h t d -> b t (h d)'
    return lin(o, p["W0"])


# ----------------------------------- main ------------------------------------


if __name__ == "__main__":
    B, T, dim = 2, 8, 32
    heads = 8
    dim_head = dim // heads          # 4

    key = jax.random.PRNGKey(0)
    kx, kq, kk, kv, kx2, kparam = jax.random.split(key, 6)
    x = jax.random.normal(kx, (B, T, dim), jnp.float32)
    q = jax.random.normal(kq, (B, T, dim), jnp.float32)
    k = jax.random.normal(kk, (B, T, dim), jnp.float32)
    v = jax.random.normal(kv, (B, T, dim), jnp.float32)

    torch_params = init_torch_style_params(kparam, dim, heads, dim_head)

    # 1) self-attention, f32 MXU operands (tolerance also covers the approximate
    #    EUP reciprocal in the softmax normalization).
    params_f32 = to_kernel_params(torch_params, heads, dim_head, jnp.float32)
    out = jax.block_until_ready(
        mhsa_pallas(x, x, x, params_f32, heads=heads, dim_head=dim_head))
    ref = reference_forward(torch_params, x, x, x, heads, dim_head)
    assert out.shape == (B, T, dim)
    assert jnp.allclose(out, ref, atol=5e-3, rtol=5e-3), "f32 path mismatch"

    # 2) self-attention, bf16 MXU operands (default on all generations), f32
    #    accumulation/softmax: loose check vs the f32 reference.
    params_bf16 = to_kernel_params(torch_params, heads, dim_head, jnp.bfloat16)
    out_bf16 = jax.block_until_ready(
        mhsa_pallas(x, x, x, params_bf16, heads=heads, dim_head=dim_head))
    assert jnp.allclose(out_bf16, ref, atol=3e-2, rtol=3e-2), "bf16 path mismatch"

    # 3) distinct q/k/v with a causal mask.
    causal = jnp.triu(jnp.ones((T, T), dtype=bool), k=1)   # True above diag = masked
    out_g = jax.block_until_ready(
        mhsa_pallas(q, k, v, params_f32, heads=heads, dim_head=dim_head, mask=causal))
    ref_g = reference_forward(torch_params, q, k, v, heads, dim_head, mask=causal)
    assert jnp.allclose(out_g, ref_g, atol=5e-3, rtol=5e-3), "general/mask path mismatch"

    # 4) multi-tile grid: T=16 split into 2 q-tiles x 2 kv-tiles (exercises the
    #    flash-style online-softmax accumulation across kv grid steps).
    T2 = 16
    x2 = jax.random.normal(kx2, (B, T2, dim), jnp.float32)
    out_t = jax.block_until_ready(
        mhsa_pallas(x2, x2, x2, params_f32, heads=heads, dim_head=dim_head,
                    q_tile=8, kv_tile=8))
    ref_t = reference_forward(torch_params, x2, x2, x2, heads, dim_head)
    assert jnp.allclose(out_t, ref_t, atol=5e-3, rtol=5e-3), "tiled grid mismatch"

    # 5) q-tiled with mask (kv kept full so the mask block stays lane-dense).
    causal2 = jnp.triu(jnp.ones((T2, T2), dtype=bool), k=1)
    out_tm = jax.block_until_ready(
        mhsa_pallas(x2, x2, x2, params_f32, heads=heads, dim_head=dim_head,
                    mask=causal2, q_tile=8, kv_tile=T2))
    ref_tm = reference_forward(torch_params, x2, x2, x2, heads, dim_head, mask=causal2)
    assert jnp.allclose(out_tm, ref_tm, atol=5e-3, rtol=5e-3), "tiled+mask mismatch"

    print("KERNEL_OK")
</pallas_src>

<mosaic_0001>
module attributes {stable_mosaic.version = 11 : i64} {
  func.func @mhsa_kernel(%arg0: i32, %arg1: i32, %arg2: i32, %arg3: memref<1x8x32xf32, #tpu.memory_space<vmem>>, %arg4: memref<1x8x32xf32, #tpu.memory_space<vmem>>, %arg5: memref<1x8x32xf32, #tpu.memory_space<vmem>>, %arg6: memref<32x32xf32, #tpu.memory_space<vmem>>, %arg7: memref<1x32xf32, #tpu.memory_space<vmem>>, %arg8: memref<32x32xf32, #tpu.memory_space<vmem>>, %arg9: memref<1x32xf32, #tpu.memory_space<vmem>>, %arg10: memref<32x32xf32, #tpu.memory_space<vmem>>, %arg11: memref<1x32xf32, #tpu.memory_space<vmem>>, %arg12: memref<32x128xf32, #tpu.memory_space<vmem>>, %arg13: memref<1x8x128xf32, #tpu.memory_space<vmem>>, %arg14: memref<8x32xf32, #tpu.memory_space<vmem>>, %arg15: memref<8x8x1xf32, #tpu.memory_space<vmem>>, %arg16: memref<8x8x1xf32, #tpu.memory_space<vmem>>, %arg17: memref<8x8x4xf32, #tpu.memory_space<vmem>>) attributes {dimension_semantics = [#tpu.dimension_semantics<parallel>, #tpu.dimension_semantics<parallel>, #tpu.dimension_semantics<arbitrary>], iteration_bounds = array<i64: 2, 1, 1>, scalar_prefetch = 0 : i64, scratch_operands = 4 : i64, tpu.core_type = #tpu.core_type<tc>, window_params = [{transform_indices = @transform_0, window_bounds = array<i64: 1, 8, 32>}, {transform_indices = @transform_1, window_bounds = array<i64: 1, 8, 32>}, {transform_indices = @transform_2, window_bounds = array<i64: 1, 8, 32>}, {pipeline_mode = #tpu.pipeline_mode<synchronous>, transform_indices = @transform_3, window_bounds = array<i64: 32, 32>}, {pipeline_mode = #tpu.pipeline_mode<synchronous>, transform_indices = @transform_4, window_bounds = array<i64: 1, 32>}, {pipeline_mode = #tpu.pipeline_mode<synchronous>, transform_indices = @transform_5, window_bounds = array<i64: 32, 32>}, {pipeline_mode = #tpu.pipeline_mode<synchronous>, transform_indices = @transform_6, window_bounds = array<i64: 1, 32>}, {pipeline_mode = #tpu.pipeline_mode<synchronous>, transform_indices = @transform_7, window_bounds = array<i64: 32, 32>}, {pipeline_mode = #tpu.pipeline_mode<synchronous>, transform_indices = @transform_8, window_bounds = array<i64: 1, 32>}, {pipeline_mode = #tpu.pipeline_mode<synchronous>, transform_indices = @transform_9, window_bounds = array<i64: 32, 128>}, {transform_indices = @transform_10, window_bounds = array<i64: 1, 8, 128>}]} {
    %c0_i32 = arith.constant 0 : i32
    %0 = arith.cmpi eq, %arg2, %c0_i32 : i32
    %1 = arith.extui %0 : i1 to i32
    %c0_i32_0 = arith.constant 0 : i32
    %2 = arith.cmpi ne, %1, %c0_i32_0 : i32
    scf.if %2 {
      %cst_188 = arith.constant 0xFF800000 : f32
      %301 = vector.broadcast %cst_188 : f32 to vector<8x8x1xf32>
      %c0_189 = arith.constant 0 : index
      %c0_190 = arith.constant 0 : index
      %c0_191 = arith.constant 0 : index
      %302 = vector.load %arg15[%c0_189, %c0_190, %c0_191] : memref<8x8x1xf32, #tpu.memory_space<vmem>>, vector<8x8x1xf32>
      tpu.vector_store %arg15[%c0_189, %c0_190, %c0_191], %301 {strides = array<i32>} : memref<8x8x1xf32, #tpu.memory_space<vmem>>, vector<8x8x1xf32>,
      %cst_192 = arith.constant 0.000000e+00 : f32
      %303 = vector.broadcast %cst_192 : f32 to vector<8x8x1xf32>
      %c0_193 = arith.constant 0 : index
      %c0_194 = arith.constant 0 : index
      %c0_195 = arith.constant 0 : index
      %304 = vector.load %arg16[%c0_193, %c0_194, %c0_195] : memref<8x8x1xf32, #tpu.memory_space<vmem>>, vector<8x8x1xf32>
      tpu.vector_store %arg16[%c0_193, %c0_194, %c0_195], %303 {strides = array<i32>} : memref<8x8x1xf32, #tpu.memory_space<vmem>>, vector<8x8x1xf32>,
      %cst_196 = arith.constant 0.000000e+00 : f32
      %305 = vector.broadcast %cst_196 : f32 to vector<8x8x4xf32>
      %c0_197 = arith.constant 0 : index
      %c0_198 = arith.constant 0 : index
      %c0_199 = arith.constant 0 : index
      %306 = vector.load %arg17[%c0_197, %c0_198, %c0_199] : memref<8x8x4xf32, #tpu.memory_space<vmem>>, vector<8x8x4xf32>
      tpu.vector_store %arg17[%c0_197, %c0_198, %c0_199], %305 {strides = array<i32>} : memref<8x8x4xf32, #tpu.memory_space<vmem>>, vector<8x8x4xf32>,
      %c0_200 = arith.constant 0 : index
      %c0_201 = arith.constant 0 : index
      %c0_202 = arith.constant 0 : index
      %307 = vector.load %arg3[%c0_200, %c0_201, %c0_202] : memref<1x8x32xf32, #tpu.memory_space<vmem>>, vector<1x8x32xf32>
      %308 = vector.shape_cast %307 : vector<1x8x32xf32> to vector<8x32xf32>
      %c0_203 = arith.constant 0 : index
      %c0_204 = arith.constant 0 : index
      %309 = vector.load %arg6[%c0_203, %c0_204] : memref<32x32xf32, #tpu.memory_space<vmem>>, vector<32x32xf32>
      %cst_205 = arith.constant dense<0.000000e+00> : vector<8x32xf32>
      %310 = tpu.matmul %308, %309, %cst_205 {dimension_numbers = #tpu.dot_dimension_numbers<[1], [0], [0], [1], [0, 0, 1, 1], [], []>} : vector<8x32xf32>, vector<32x32xf32>, vector<8x32xf32> -> vector<8x32xf32>
      %c0_206 = arith.constant 0 : index
      %c0_207 = arith.constant 0 : index
      %311 = vector.load %arg7[%c0_206, %c0_207] : memref<1x32xf32, #tpu.memory_space<vmem>>, vector<1x32xf32>
      %312 = vector.broadcast %311 : vector<1x32xf32> to vector<8x32xf32>
      %313 = arith.addf %310, %312 : vector<8x32xf32>
      %c0_208 = arith.constant 0 : index
      %c0_209 = arith.constant 0 : index
      %314 = vector.load %arg14[%c0_208, %c0_209] : memref<8x32xf32, #tpu.memory_space<vmem>>, vector<8x32xf32>
      tpu.vector_store %arg14[%c0_208, %c0_209], %313 {strides = array<i32>} : memref<8x32xf32, #tpu.memory_space<vmem>>, vector<8x32xf32>,
    } else {
    }
    %c0 = arith.constant 0 : index
    %c0_1 = arith.constant 0 : index
    %c0_2 = arith.constant 0 : index
    %3 = vector.load %arg4[%c0, %c0_1, %c0_2] : memref<1x8x32xf32, #tpu.memory_space<vmem>>, vector<1x8x32xf32>
    %4 = vector.shape_cast %3 : vector<1x8x32xf32> to vector<8x32xf32>
    %c0_3 = arith.constant 0 : index
    %c0_4 = arith.constant 0 : index
    %c0_5 = arith.constant 0 : index
    %5 = vector.load %arg5[%c0_3, %c0_4, %c0_5] : memref<1x8x32xf32, #tpu.memory_space<vmem>>, vector<1x8x32xf32>
    %6 = vector.shape_cast %5 : vector<1x8x32xf32> to vector<8x32xf32>
    %c0_6 = arith.constant 0 : index
    %c0_7 = arith.constant 0 : index
    %7 = vector.load %arg8[%c0_6, %c0_7] : memref<32x32xf32, #tpu.memory_space<vmem>>, vector<32x32xf32>
    %cst = arith.constant dense<0.000000e+00> : vector<8x32xf32>
    %8 = tpu.matmul %4, %7, %cst {dimension_numbers = #tpu.dot_dimension_numbers<[1], [0], [0], [1], [0, 0, 1, 1], [], []>} : vector<8x32xf32>, vector<32x32xf32>, vector<8x32xf32> -> vector<8x32xf32>
    %c0_8 = arith.constant 0 : index
    %c0_9 = arith.constant 0 : index
    %9 = vector.load %arg9[%c0_8, %c0_9] : memref<1x32xf32, #tpu.memory_space<vmem>>, vector<1x32xf32>
    %10 = vector.broadcast %9 : vector<1x32xf32> to vector<8x32xf32>
    %11 = arith.addf %8, %10 : vector<8x32xf32>
    %c0_10 = arith.constant 0 : index
    %c0_11 = arith.constant 0 : index
    %12 = vector.load %arg10[%c0_10, %c0_11] : memref<32x32xf32, #tpu.memory_space<vmem>>, vector<32x32xf32>
    %cst_12 = arith.constant dense<0.000000e+00> : vector<8x32xf32>
    %13 = tpu.matmul %6, %12, %cst_12 {dimension_numbers = #tpu.dot_dimension_numbers<[1], [0], [0], [1], [0, 0, 1, 1], [], []>} : vector<8x32xf32>, vector<32x32xf32>, vector<8x32xf32> -> vector<8x32xf32>
    %c0_13 = arith.constant 0 : index
    %c0_14 = arith.constant 0 : index
    %14 = vector.load %arg11[%c0_13, %c0_14] : memref<1x32xf32, #tpu.memory_space<vmem>>, vector<1x32xf32>
    %15 = vector.broadcast %14 : vector<1x32xf32> to vector<8x32xf32>
    %16 = arith.addf %13, %15 : vector<8x32xf32>
    %c0_15 = arith.constant 0 : index
    %c0_16 = arith.constant 0 : index
    %17 = vector.load %arg14[%c0_15, %c0_16] : memref<8x32xf32, #tpu.memory_space<vmem>>, vector<8x32xf32>
    %18 = vector.extract_strided_slice %17 {offsets = [0, 0], sizes = [8, 4], strides = [1, 1]} : vector<8x32xf32> to vector<8x4xf32>
    %19 = vector.extract_strided_slice %11 {offsets = [0, 0], sizes = [8, 4], strides = [1, 1]} : vector<8x32xf32> to vector<8x4xf32>
    %cst_17 = arith.constant dense<0.000000e+00> : vector<8x8xf32>
    %20 = tpu.matmul %18, %19, %cst_17 {dimension_numbers = #tpu.dot_dimension_numbers<[1], [1], [0], [0], [0, 0, 1, 0], [], []>} : vector<8x4xf32>, vector<8x4xf32>, vector<8x8xf32> -> vector<8x8xf32>
    %c0_18 = arith.constant 0 : index
    %c0_19 = arith.constant 0 : index
    %c0_20 = arith.constant 0 : index
    %21 = vector.load %arg15[%c0_18, %c0_19, %c0_20] : memref<8x8x1xf32, #tpu.memory_space<vmem>>, vector<1x8x1xf32>
    %22 = vector.shape_cast %21 : vector<1x8x1xf32> to vector<8x1xf32>
    %cst_21 = arith.constant dense<0xFF800000> : vector<8xf32>
    %23 = vector.multi_reduction <maximumf>, %20, %cst_21 [1] : vector<8x8xf32> to vector<8xf32>
    %24 = vector.shape_cast %23 : vector<8xf32> to vector<8x1xf32>
    %25 = arith.maximumf %22, %24 : vector<8x1xf32>
    %26 = arith.subf %22, %25 : vector<8x1xf32>
    %27 = math.exp %26 : vector<8x1xf32>
    %28 = vector.broadcast %25 : vector<8x1xf32> to vector<8x8xf32>
    %29 = arith.subf %20, %28 : vector<8x8xf32>
    %30 = math.exp %29 : vector<8x8xf32>
    %c0_22 = arith.constant 0 : index
    %c0_23 = arith.constant 0 : index
    %c0_24 = arith.constant 0 : index
    %31 = vector.load %arg16[%c0_22, %c0_23, %c0_24] : memref<8x8x1xf32, #tpu.memory_space<vmem>>, vector<1x8x1xf32>
    %32 = vector.shape_cast %31 : vector<1x8x1xf32> to vector<8x1xf32>
    %33 = arith.mulf %27, %32 : vector<8x1xf32>
    %cst_25 = arith.constant dense<0.000000e+00> : vector<8xf32>
    %34 = vector.multi_reduction <add>, %30, %cst_25 [1] : vector<8x8xf32> to vector<8xf32>
    %35 = vector.shape_cast %34 : vector<8xf32> to vector<8x1xf32>
    %36 = arith.addf %33, %35 : vector<8x1xf32>
    %c0_26 = arith.constant 0 : index
    %c0_27 = arith.constant 0 : index
    %c0_28 = arith.constant 0 : index
    %37 = vector.load %arg16[%c0_26, %c0_27, %c0_28] : memref<8x8x1xf32, #tpu.memory_space<vmem>>, vector<1x8x1xf32>
    %38 = vector.shape_cast %37 : vector<1x8x1xf32> to vector<8x1xf32>
    %39 = vector.shape_cast %36 : vector<8x1xf32> to vector<1x8x1xf32>
    tpu.vector_store %arg16[%c0_26, %c0_27, %c0_28], %39 {strides = array<i32>} : memref<8x8x1xf32, #tpu.memory_space<vmem>>, vector<1x8x1xf32>,
    %c0_29 = arith.constant 0 : index
    %c0_30 = arith.constant 0 : index
    %c0_31 = arith.constant 0 : index
    %40 = vector.load %arg17[%c0_29, %c0_30, %c0_31] : memref<8x8x4xf32, #tpu.memory_space<vmem>>, vector<1x8x4xf32>
    %41 = vector.shape_cast %40 : vector<1x8x4xf32> to vector<8x4xf32>
    %42 = vector.broadcast %27 : vector<8x1xf32> to vector<8x4xf32>
    %43 = arith.mulf %42, %41 : vector<8x4xf32>
    %44 = vector.extract_strided_slice %16 {offsets = [0, 0], sizes = [8, 4], strides = [1, 1]} : vector<8x32xf32> to vector<8x4xf32>
    %cst_32 = arith.constant dense<0.000000e+00> : vector<8x4xf32>
    %45 = tpu.matmul %30, %44, %cst_32 {dimension_numbers = #tpu.dot_dimension_numbers<[1], [0], [0], [1], [0, 0, 1, 1], [], []>} : vector<8x8xf32>, vector<8x4xf32>, vector<8x4xf32> -> vector<8x4xf32>
    %46 = arith.addf %43, %45 : vector<8x4xf32>
    %c0_33 = arith.constant 0 : index
    %c0_34 = arith.constant 0 : index
    %c0_35 = arith.constant 0 : index
    %47 = vector.load %arg17[%c0_33, %c0_34, %c0_35] : memref<8x8x4xf32, #tpu.memory_space<vmem>>, vector<1x8x4xf32>
    %48 = vector.shape_cast %47 : vector<1x8x4xf32> to vector<8x4xf32>
    %49 = vector.shape_cast %46 : vector<8x4xf32> to vector<1x8x4xf32>
    tpu.vector_store %arg17[%c0_33, %c0_34, %c0_35], %49 {strides = array<i32>} : memref<8x8x4xf32, #tpu.memory_space<vmem>>, vector<1x8x4xf32>,
    %c0_36 = arith.constant 0 : index
    %c0_37 = arith.constant 0 : index
    %c0_38 = arith.constant 0 : index
    %50 = vector.load %arg15[%c0_36, %c0_37, %c0_38] : memref<8x8x1xf32, #tpu.memory_space<vmem>>, vector<1x8x1xf32>
    %51 = vector.shape_cast %50 : vector<1x8x1xf32> to vector<8x1xf32>
    %52 = vector.shape_cast %25 : vector<8x1xf32> to vector<1x8x1xf32>
    tpu.vector_store %arg15[%c0_36, %c0_37, %c0_38], %52 {strides = array<i32>} : memref<8x8x1xf32, #tpu.memory_space<vmem>>, vector<1x8x1xf32>,
    %53 = vector.extract_strided_slice %17 {offsets = [0, 4], sizes = [8, 4], strides = [1, 1]} : vector<8x32xf32> to vector<8x4xf32>
    %54 = vector.extract_strided_slice %11 {offsets = [0, 4], sizes = [8, 4], strides = [1, 1]} : vector<8x32xf32> to vector<8x4xf32>
    %cst_39 = arith.constant dense<0.000000e+00> : vector<8x8xf32>
    %55 = tpu.matmul %53, %54, %cst_39 {dimension_numbers = #tpu.dot_dimension_numbers<[1], [1], [0], [0], [0, 0, 1, 0], [], []>} : vector<8x4xf32>, vector<8x4xf32>, vector<8x8xf32> -> vector<8x8xf32>
    %c1 = arith.constant 1 : index
    %c0_40 = arith.constant 0 : index
    %c0_41 = arith.constant 0 : index
    %56 = vector.load %arg15[%c1, %c0_40, %c0_41] : memref<8x8x1xf32, #tpu.memory_space<vmem>>, vector<1x8x1xf32>
    %57 = vector.shape_cast %56 : vector<1x8x1xf32> to vector<8x1xf32>
    %cst_42 = arith.constant dense<0xFF800000> : vector<8xf32>
    %58 = vector.multi_reduction <maximumf>, %55, %cst_42 [1] : vector<8x8xf32> to vector<8xf32>
    %59 = vector.shape_cast %58 : vector<8xf32> to vector<8x1xf32>
    %60 = arith.maximumf %57, %59 : vector<8x1xf32>
    %61 = arith.subf %57, %60 : vector<8x1xf32>
    %62 = math.exp %61 : vector<8x1xf32>
    %63 = vector.broadcast %60 : vector<8x1xf32> to vector<8x8xf32>
    %64 = arith.subf %55, %63 : vector<8x8xf32>
    %65 = math.exp %64 : vector<8x8xf32>
    %c1_43 = arith.constant 1 : index
    %c0_44 = arith.constant 0 : index
    %c0_45 = arith.constant 0 : index
    %66 = vector.load %arg16[%c1_43, %c0_44, %c0_45] : memref<8x8x1xf32, #tpu.memory_space<vmem>>, vector<1x8x1xf32>
    %67 = vector.shape_cast %66 : vector<1x8x1xf32> to vector<8x1xf32>
    %68 = arith.mulf %62, %67 : vector<8x1xf32>
    %cst_46 = arith.constant dense<0.000000e+00> : vector<8xf32>
    %69 = vector.multi_reduction <add>, %65, %cst_46 [1] : vector<8x8xf32> to vector<8xf32>
    %70 = vector.shape_cast %69 : vector<8xf32> to vector<8x1xf32>
    %71 = arith.addf %68, %70 : vector<8x1xf32>
    %c1_47 = arith.constant 1 : index
    %c0_48 = arith.constant 0 : index
    %c0_49 = arith.constant 0 : index
    %72 = vector.load %arg16[%c1_47, %c0_48, %c0_49] : memref<8x8x1xf32, #tpu.memory_space<vmem>>, vector<1x8x1xf32>
    %73 = vector.shape_cast %72 : vector<1x8x1xf32> to vector<8x1xf32>
    %74 = vector.shape_cast %71 : vector<8x1xf32> to vector<1x8x1xf32>
    tpu.vector_store %arg16[%c1_47, %c0_48, %c0_49], %74 {strides = array<i32>} : memref<8x8x1xf32, #tpu.memory_space<vmem>>, vector<1x8x1xf32>,
    %c1_50 = arith.constant 1 : index
    %c0_51 = arith.constant 0 : index
    %c0_52 = arith.constant 0 : index
    %75 = vector.load %arg17[%c1_50, %c0_51, %c0_52] : memref<8x8x4xf32, #tpu.memory_space<vmem>>, vector<1x8x4xf32>
    %76 = vector.shape_cast %75 : vector<1x8x4xf32> to vector<8x4xf32>
    %77 = vector.broadcast %62 : vector<8x1xf32> to vector<8x4xf32>
    %78 = arith.mulf %77, %76 : vector<8x4xf32>
    %79 = vector.extract_strided_slice %16 {offsets = [0, 4], sizes = [8, 4], strides = [1, 1]} : vector<8x32xf32> to vector<8x4xf32>
    %cst_53 = arith.constant dense<0.000000e+00> : vector<8x4xf32>
    %80 = tpu.matmul %65, %79, %cst_53 {dimension_numbers = #tpu.dot_dimension_numbers<[1], [0], [0], [1], [0, 0, 1, 1], [], []>} : vector<8x8xf32>, vector<8x4xf32>, vector<8x4xf32> -> vector<8x4xf32>
    %81 = arith.addf %78, %80 : vector<8x4xf32>
    %c1_54 = arith.constant 1 : index
    %c0_55 = arith.constant 0 : index
    %c0_56 = arith.constant 0 : index
    %82 = vector.load %arg17[%c1_54, %c0_55, %c0_56] : memref<8x8x4xf32, #tpu.memory_space<vmem>>, vector<1x8x4xf32>
    %83 = vector.shape_cast %82 : vector<1x8x4xf32> to vector<8x4xf32>
    %84 = vector.shape_cast %81 : vector<8x4xf32> to vector<1x8x4xf32>
    tpu.vector_store %arg17[%c1_54, %c0_55, %c0_56], %84 {strides = array<i32>} : memref<8x8x4xf32, #tpu.memory_space<vmem>>, vector<1x8x4xf32>,
    %c1_57 = arith.constant 1 : index
    %c0_58 = arith.constant 0 : index
    %c0_59 = arith.constant 0 : index
    %85 = vector.load %arg15[%c1_57, %c0_58, %c0_59] : memref<8x8x1xf32, #tpu.memory_space<vmem>>, vector<1x8x1xf32>
    %86 = vector.shape_cast %85 : vector<1x8x1xf32> to vector<8x1xf32>
    %87 = vector.shape_cast %60 : vector<8x1xf32> to vector<1x8x1xf32>
    tpu.vector_store %arg15[%c1_57, %c0_58, %c0_59], %87 {strides = array<i32>} : memref<8x8x1xf32, #tpu.memory_space<vmem>>, vector<1x8x1xf32>,
    %88 = vector.extract_strided_slice %17 {offsets = [0, 8], sizes = [8, 4], strides = [1, 1]} : vector<8x32xf32> to vector<8x4xf32>
    %89 = vector.extract_strided_slice %11 {offsets = [0, 8], sizes = [8, 4], strides = [1, 1]} : vector<8x32xf32> to vector<8x4xf32>
    %cst_60 = arith.constant dense<0.000000e+00> : vector<8x8xf32>
    %90 = tpu.matmul %88, %89, %cst_60 {dimension_numbers = #tpu.dot_dimension_numbers<[1], [1], [0], [0], [0, 0, 1, 0], [], []>} : vector<8x4xf32>, vector<8x4xf32>, vector<8x8xf32> -> vector<8x8xf32>
    %c2 = arith.constant 2 : index
    %c0_61 = arith.constant 0 : index
    %c0_62 = arith.constant 0 : index
    %91 = vector.load %arg15[%c2, %c0_61, %c0_62] : memref<8x8x1xf32, #tpu.memory_space<vmem>>, vector<1x8x1xf32>
    %92 = vector.shape_cast %91 : vector<1x8x1xf32> to vector<8x1xf32>
    %cst_63 = arith.constant dense<0xFF800000> : vector<8xf32>
    %93 = vector.multi_reduction <maximumf>, %90, %cst_63 [1] : vector<8x8xf32> to vector<8xf32>
    %94 = vector.shape_cast %93 : vector<8xf32> to vector<8x1xf32>
    %95 = arith.maximumf %92, %94 : vector<8x1xf32>
    %96 = arith.subf %92, %95 : vector<8x1xf32>
    %97 = math.exp %96 : vector<8x1xf32>
    %98 = vector.broadcast %95 : vector<8x1xf32> to vector<8x8xf32>
    %99 = arith.subf %90, %98 : vector<8x8xf32>
    %100 = math.exp %99 : vector<8x8xf32>
    %c2_64 = arith.constant 2 : index
    %c0_65 = arith.constant 0 : index
    %c0_66 = arith.constant 0 : index
    %101 = vector.load %arg16[%c2_64, %c0_65, %c0_66] : memref<8x8x1xf32, #tpu.memory_space<vmem>>, vector<1x8x1xf32>
    %102 = vector.shape_cast %101 : vector<1x8x1xf32> to vector<8x1xf32>
    %103 = arith.mulf %97, %102 : vector<8x1xf32>
    %cst_67 = arith.constant dense<0.000000e+00> : vector<8xf32>
    %104 = vector.multi_reduction <add>, %100, %cst_67 [1] : vector<8x8xf32> to vector<8xf32>
    %105 = vector.shape_cast %104 : vector<8xf32> to vector<8x1xf32>
    %106 = arith.addf %103, %105 : vector<8x1xf32>
    %c2_68 = arith.constant 2 : index
    %c0_69 = arith.constant 0 : index
    %c0_70 = arith.constant 0 : index
    %107 = vector.load %arg16[%c2_68, %c0_69, %c0_70] : memref<8x8x1xf32, #tpu.memory_space<vmem>>, vector<1x8x1xf32>
    %108 = vector.shape_cast %107 : vector<1x8x1xf32> to vector<8x1xf32>
    %109 = vector.shape_cast %106 : vector<8x1xf32> to vector<1x8x1xf32>
    tpu.vector_store %arg16[%c2_68, %c0_69, %c0_70], %109 {strides = array<i32>} : memref<8x8x1xf32, #tpu.memory_space<vmem>>, vector<1x8x1xf32>,
    %c2_71 = arith.constant 2 : index
    %c0_72 = arith.constant 0 : index
    %c0_73 = arith.constant 0 : index
    %110 = vector.load %arg17[%c2_71, %c0_72, %c0_73] : memref<8x8x4xf32, #tpu.memory_space<vmem>>, vector<1x8x4xf32>
    %111 = vector.shape_cast %110 : vector<1x8x4xf32> to vector<8x4xf32>
    %112 = vector.broadcast %97 : vector<8x1xf32> to vector<8x4xf32>
    %113 = arith.mulf %112, %111 : vector<8x4xf32>
    %114 = vector.extract_strided_slice %16 {offsets = [0, 8], sizes = [8, 4], strides = [1, 1]} : vector<8x32xf32> to vector<8x4xf32>
    %cst_74 = arith.constant dense<0.000000e+00> : vector<8x4xf32>
    %115 = tpu.matmul %100, %114, %cst_74 {dimension_numbers = #tpu.dot_dimension_numbers<[1], [0], [0], [1], [0, 0, 1, 1], [], []>} : vector<8x8xf32>, vector<8x4xf32>, vector<8x4xf32> -> vector<8x4xf32>
    %116 = arith.addf %113, %115 : vector<8x4xf32>
    %c2_75 = arith.constant 2 : index
    %c0_76 = arith.constant 0 : index
    %c0_77 = arith.constant 0 : index
    %117 = vector.load %arg17[%c2_75, %c0_76, %c0_77] : memref<8x8x4xf32, #tpu.memory_space<vmem>>, vector<1x8x4xf32>
    %118 = vector.shape_cast %117 : vector<1x8x4xf32> to vector<8x4xf32>
    %119 = vector.shape_cast %116 : vector<8x4xf32> to vector<1x8x4xf32>
    tpu.vector_store %arg17[%c2_75, %c0_76, %c0_77], %119 {strides = array<i32>} : memref<8x8x4xf32, #tpu.memory_space<vmem>>, vector<1x8x4xf32>,
    %c2_78 = arith.constant 2 : index
    %c0_79 = arith.constant 0 : index
    %c0_80 = arith.constant 0 : index
    %120 = vector.load %arg15[%c2_78, %c0_79, %c0_80] : memref<8x8x1xf32, #tpu.memory_space<vmem>>, vector<1x8x1xf32>
    %121 = vector.shape_cast %120 : vector<1x8x1xf32> to vector<8x1xf32>
    %122 = vector.shape_cast %95 : vector<8x1xf32> to vector<1x8x1xf32>
    tpu.vector_store %arg15[%c2_78, %c0_79, %c0_80], %122 {strides = array<i32>} : memref<8x8x1xf32, #tpu.memory_space<vmem>>, vector<1x8x1xf32>,
    %123 = vector.extract_strided_slice %17 {offsets = [0, 12], sizes = [8, 4], strides = [1, 1]} : vector<8x32xf32> to vector<8x4xf32>
    %124 = vector.extract_strided_slice %11 {offsets = [0, 12], sizes = [8, 4], strides = [1, 1]} : vector<8x32xf32> to vector<8x4xf32>
    %cst_81 = arith.constant dense<0.000000e+00> : vector<8x8xf32>
    %125 = tpu.matmul %123, %124, %cst_81 {dimension_numbers = #tpu.dot_dimension_numbers<[1], [1], [0], [0], [0, 0, 1, 0], [], []>} : vector<8x4xf32>, vector<8x4xf32>, vector<8x8xf32> -> vector<8x8xf32>
    %c3 = arith.constant 3 : index
    %c0_82 = arith.constant 0 : index
    %c0_83 = arith.constant 0 : index
    %126 = vector.load %arg15[%c3, %c0_82, %c0_83] : memref<8x8x1xf32, #tpu.memory_space<vmem>>, vector<1x8x1xf32>
    %127 = vector.shape_cast %126 : vector<1x8x1xf32> to vector<8x1xf32>
    %cst_84 = arith.constant dense<0xFF800000> : vector<8xf32>
    %128 = vector.multi_reduction <maximumf>, %125, %cst_84 [1] : vector<8x8xf32> to vector<8xf32>
    %129 = vector.shape_cast %128 : vector<8xf32> to vector<8x1xf32>
    %130 = arith.maximumf %127, %129 : vector<8x1xf32>
    %131 = arith.subf %127, %130 : vector<8x1xf32>
    %132 = math.exp %131 : vector<8x1xf32>
    %133 = vector.broadcast %130 : vector<8x1xf32> to vector<8x8xf32>
    %134 = arith.subf %125, %133 : vector<8x8xf32>
    %135 = math.exp %134 : vector<8x8xf32>
    %c3_85 = arith.constant 3 : index
    %c0_86 = arith.constant 0 : index
    %c0_87 = arith.constant 0 : index
    %136 = vector.load %arg16[%c3_85, %c0_86, %c0_87] : memref<8x8x1xf32, #tpu.memory_space<vmem>>, vector<1x8x1xf32>
    %137 = vector.shape_cast %136 : vector<1x8x1xf32> to vector<8x1xf32>
    %138 = arith.mulf %132, %137 : vector<8x1xf32>
    %cst_88 = arith.constant dense<0.000000e+00> : vector<8xf32>
    %139 = vector.multi_reduction <add>, %135, %cst_88 [1] : vector<8x8xf32> to vector<8xf32>
    %140 = vector.shape_cast %139 : vector<8xf32> to vector<8x1xf32>
    %141 = arith.addf %138, %140 : vector<8x1xf32>
    %c3_89 = arith.constant 3 : index
    %c0_90 = arith.constant 0 : index
    %c0_91 = arith.constant 0 : index
    %142 = vector.load %arg16[%c3_89, %c0_90, %c0_91] : memref<8x8x1xf32, #tpu.memory_space<vmem>>, vector<1x8x1xf32>
    %143 = vector.shape_cast %142 : vector<1x8x1xf32> to vector<8x1xf32>
    %144 = vector.shape_cast %141 : vector<8x1xf32> to vector<1x8x1xf32>
    tpu.vector_store %arg16[%c3_89, %c0_90, %c0_91], %144 {strides = array<i32>} : memref<8x8x1xf32, #tpu.memory_space<vmem>>, vector<1x8x1xf32>,
    %c3_92 = arith.constant 3 : index
    %c0_93 = arith.constant 0 : index
    %c0_94 = arith.constant 0 : index
    %145 = vector.load %arg17[%c3_92, %c0_93, %c0_94] : memref<8x8x4xf32, #tpu.memory_space<vmem>>, vector<1x8x4xf32>
    %146 = vector.shape_cast %145 : vector<1x8x4xf32> to vector<8x4xf32>
    %147 = vector.broadcast %132 : vector<8x1xf32> to vector<8x4xf32>
    %148 = arith.mulf %147, %146 : vector<8x4xf32>
    %149 = vector.extract_strided_slice %16 {offsets = [0, 12], sizes = [8, 4], strides = [1, 1]} : vector<8x32xf32> to vector<8x4xf32>
    %cst_95 = arith.constant dense<0.000000e+00> : vector<8x4xf32>
    %150 = tpu.matmul %135, %149, %cst_95 {dimension_numbers = #tpu.dot_dimension_numbers<[1], [0], [0], [1], [0, 0, 1, 1], [], []>} : vector<8x8xf32>, vector<8x4xf32>, vector<8x4xf32> -> vector<8x4xf32>
    %151 = arith.addf %148, %150 : vector<8x4xf32>
    %c3_96 = arith.constant 3 : index
    %c0_97 = arith.constant 0 : index
    %c0_98 = arith.constant 0 : index
    %152 = vector.load %arg17[%c3_96, %c0_97, %c0_98] : memref<8x8x4xf32, #tpu.memory_space<vmem>>, vector<1x8x4xf32>
    %153 = vector.shape_cast %152 : vector<1x8x4xf32> to vector<8x4xf32>
    %154 = vector.shape_cast %151 : vector<8x4xf32> to vector<1x8x4xf32>
    tpu.vector_store %arg17[%c3_96, %c0_97, %c0_98], %154 {strides = array<i32>} : memref<8x8x4xf32, #tpu.memory_space<vmem>>, vector<1x8x4xf32>,
    %c3_99 = arith.constant 3 : index
    %c0_100 = arith.constant 0 : index
    %c0_101 = arith.constant 0 : index
    %155 = vector.load %arg15[%c3_99, %c0_100, %c0_101] : memref<8x8x1xf32, #tpu.memory_space<vmem>>, vector<1x8x1xf32>
    %156 = vector.shape_cast %155 : vector<1x8x1xf32> to vector<8x1xf32>
    %157 = vector.shape_cast %130 : vector<8x1xf32> to vector<1x8x1xf32>
    tpu.vector_store %arg15[%c3_99, %c0_100, %c0_101], %157 {strides = array<i32>} : memref<8x8x1xf32, #tpu.memory_space<vmem>>, vector<1x8x1xf32>,
    %158 = vector.extract_strided_slice %17 {offsets = [0, 16], sizes = [8, 4], strides = [1, 1]} : vector<8x32xf32> to vector<8x4xf32>
    %159 = vector.extract_strided_slice %11 {offsets = [0, 16], sizes = [8, 4], strides = [1, 1]} : vector<8x32xf32> to vector<8x4xf32>
    %cst_102 = arith.constant dense<0.000000e+00> : vector<8x8xf32>
    %160 = tpu.matmul %158, %159, %cst_102 {dimension_numbers = #tpu.dot_dimension_numbers<[1], [1], [0], [0], [0, 0, 1, 0], [], []>} : vector<8x4xf32>, vector<8x4xf32>, vector<8x8xf32> -> vector<8x8xf32>
    %c4 = arith.constant 4 : index
    %c0_103 = arith.constant 0 : index
    %c0_104 = arith.constant 0 : index
    %161 = vector.load %arg15[%c4, %c0_103, %c0_104] : memref<8x8x1xf32, #tpu.memory_space<vmem>>, vector<1x8x1xf32>
    %162 = vector.shape_cast %161 : vector<1x8x1xf32> to vector<8x1xf32>
    %cst_105 = arith.constant dense<0xFF800000> : vector<8xf32>
    %163 = vector.multi_reduction <maximumf>, %160, %cst_105 [1] : vector<8x8xf32> to vector<8xf32>
    %164 = vector.shape_cast %163 : vector<8xf32> to vector<8x1xf32>
    %165 = arith.maximumf %162, %164 : vector<8x1xf32>
    %166 = arith.subf %162, %165 : vector<8x1xf32>
    %167 = math.exp %166 : vector<8x1xf32>
    %168 = vector.broadcast %165 : vector<8x1xf32> to vector<8x8xf32>
    %169 = arith.subf %160, %168 : vector<8x8xf32>
    %170 = math.exp %169 : vector<8x8xf32>
    %c4_106 = arith.constant 4 : index
    %c0_107 = arith.constant 0 : index
    %c0_108 = arith.constant 0 : index
    %171 = vector.load %arg16[%c4_106, %c0_107, %c0_108] : memref<8x8x1xf32, #tpu.memory_space<vmem>>, vector<1x8x1xf32>
    %172 = vector.shape_cast %171 : vector<1x8x1xf32> to vector<8x1xf32>
    %173 = arith.mulf %167, %172 : vector<8x1xf32>
    %cst_109 = arith.constant dense<0.000000e+00> : vector<8xf32>
    %174 = vector.multi_reduction <add>, %170, %cst_109 [1] : vector<8x8xf32> to vector<8xf32>
    %175 = vector.shape_cast %174 : vector<8xf32> to vector<8x1xf32>
    %176 = arith.addf %173, %175 : vector<8x1xf32>
    %c4_110 = arith.constant 4 : index
    %c0_111 = arith.constant 0 : index
    %c0_112 = arith.constant 0 : index
    %177 = vector.load %arg16[%c4_110, %c0_111, %c0_112] : memref<8x8x1xf32, #tpu.memory_space<vmem>>, vector<1x8x1xf32>
    %178 = vector.shape_cast %177 : vector<1x8x1xf32> to vector<8x1xf32>
    %179 = vector.shape_cast %176 : vector<8x1xf32> to vector<1x8x1xf32>
    tpu.vector_store %arg16[%c4_110, %c0_111, %c0_112], %179 {strides = array<i32>} : memref<8x8x1xf32, #tpu.memory_space<vmem>>, vector<1x8x1xf32>,
    %c4_113 = arith.constant 4 : index
    %c0_114 = arith.constant 0 : index
    %c0_115 = arith.constant 0 : index
    %180 = vector.load %arg17[%c4_113, %c0_114, %c0_115] : memref<8x8x4xf32, #tpu.memory_space<vmem>>, vector<1x8x4xf32>
    %181 = vector.shape_cast %180 : vector<1x8x4xf32> to vector<8x4xf32>
    %182 = vector.broadcast %167 : vector<8x1xf32> to vector<8x4xf32>
    %183 = arith.mulf %182, %181 : vector<8x4xf32>
    %184 = vector.extract_strided_slice %16 {offsets = [0, 16], sizes = [8, 4], strides = [1, 1]} : vector<8x32xf32> to vector<8x4xf32>
    %cst_116 = arith.constant dense<0.000000e+00> : vector<8x4xf32>
    %185 = tpu.matmul %170, %184, %cst_116 {dimension_numbers = #tpu.dot_dimension_numbers<[1], [0], [0], [1], [0, 0, 1, 1], [], []>} : vector<8x8xf32>, vector<8x4xf32>, vector<8x4xf32> -> vector<8x4xf32>
    %186 = arith.addf %183, %185 : vector<8x4xf32>
    %c4_117 = arith.constant 4 : index
    %c0_118 = arith.constant 0 : index
    %c0_119 = arith.constant 0 : index
    %187 = vector.load %arg17[%c4_117, %c0_118, %c0_119] : memref<8x8x4xf32, #tpu.memory_space<vmem>>, vector<1x8x4xf32>
    %188 = vector.shape_cast %187 : vector<1x8x4xf32> to vector<8x4xf32>
    %189 = vector.shape_cast %186 : vector<8x4xf32> to vector<1x8x4xf32>
    tpu.vector_store %arg17[%c4_117, %c0_118, %c0_119], %189 {strides = array<i32>} : memref<8x8x4xf32, #tpu.memory_space<vmem>>, vector<1x8x4xf32>,
    %c4_120 = arith.constant 4 : index
    %c0_121 = arith.constant 0 : index
    %c0_122 = arith.constant 0 : index
    %190 = vector.load %arg15[%c4_120, %c0_121, %c0_122] : memref<8x8x1xf32, #tpu.memory_space<vmem>>, vector<1x8x1xf32>
    %191 = vector.shape_cast %190 : vector<1x8x1xf32> to vector<8x1xf32>
    %192 = vector.shape_cast %165 : vector<8x1xf32> to vector<1x8x1xf32>
    tpu.vector_store %arg15[%c4_120, %c0_121, %c0_122], %192 {strides = array<i32>} : memref<8x8x1xf32, #tpu.memory_space<vmem>>, vector<1x8x1xf32>,
    %193 = vector.extract_strided_slice %17 {offsets = [0, 20], sizes = [8, 4], strides = [1, 1]} : vector<8x32xf32> to vector<8x4xf32>
    %194 = vector.extract_strided_slice %11 {offsets = [0, 20], sizes = [8, 4], strides = [1, 1]} : vector<8x32xf32> to vector<8x4xf32>
    %cst_123 = arith.constant dense<0.000000e+00> : vector<8x8xf32>
    %195 = tpu.matmul %193, %194, %cst_123 {dimension_numbers = #tpu.dot_dimension_numbers<[1], [1], [0], [0], [0, 0, 1, 0], [], []>} : vector<8x4xf32>, vector<8x4xf32>, vector<8x8xf32> -> vector<8x8xf32>
    %c5 = arith.constant 5 : index
    %c0_124 = arith.constant 0 : index
    %c0_125 = arith.constant 0 : index
    %196 = vector.load %arg15[%c5, %c0_124, %c0_125] : memref<8x8x1xf32, #tpu.memory_space<vmem>>, vector<1x8x1xf32>
    %197 = vector.shape_cast %196 : vector<1x8x1xf32> to vector<8x1xf32>
    %cst_126 = arith.constant dense<0xFF800000> : vector<8xf32>
    %198 = vector.multi_reduction <maximumf>, %195, %cst_126 [1] : vector<8x8xf32> to vector<8xf32>
    %199 = vector.shape_cast %198 : vector<8xf32> to vector<8x1xf32>
    %200 = arith.maximumf %197, %199 : vector<8x1xf32>
    %201 = arith.subf %197, %200 : vector<8x1xf32>
    %202 = math.exp %201 : vector<8x1xf32>
    %203 = vector.broadcast %200 : vector<8x1xf32> to vector<8x8xf32>
    %204 = arith.subf %195, %203 : vector<8x8xf32>
    %205 = math.exp %204 : vector<8x8xf32>
    %c5_127 = arith.constant 5 : index
    %c0_128 = arith.constant 0 : index
    %c0_129 = arith.constant 0 : index
    %206 = vector.load %arg16[%c5_127, %c0_128, %c0_129] : memref<8x8x1xf32, #tpu.memory_space<vmem>>, vector<1x8x1xf32>
    %207 = vector.shape_cast %206 : vector<1x8x1xf32> to vector<8x1xf32>
    %208 = arith.mulf %202, %207 : vector<8x1xf32>
    %cst_130 = arith.constant dense<0.000000e+00> : vector<8xf32>
    %209 = vector.multi_reduction <add>, %205, %cst_130 [1] : vector<8x8xf32> to vector<8xf32>
    %210 = vector.shape_cast %209 : vector<8xf32> to vector<8x1xf32>
    %211 = arith.addf %208, %210 : vector<8x1xf32>
    %c5_131 = arith.constant 5 : index
    %c0_132 = arith.constant 0 : index
    %c0_133 = arith.constant 0 : index
    %212 = vector.load %arg16[%c5_131, %c0_132, %c0_133] : memref<8x8x1xf32, #tpu.memory_space<vmem>>, vector<1x8x1xf32>
    %213 = vector.shape_cast %212 : vector<1x8x1xf32> to vector<8x1xf32>
    %214 = vector.shape_cast %211 : vector<8x1xf32> to vector<1x8x1xf32>
    tpu.vector_store %arg16[%c5_131, %c0_132, %c0_133], %214 {strides = array<i32>} : memref<8x8x1xf32, #tpu.memory_space<vmem>>, vector<1x8x1xf32>,
    %c5_134 = arith.constant 5 : index
    %c0_135 = arith.constant 0 : index
    %c0_136 = arith.constant 0 : index
    %215 = vector.load %arg17[%c5_134, %c0_135, %c0_136] : memref<8x8x4xf32, #tpu.memory_space<vmem>>, vector<1x8x4xf32>
    %216 = vector.shape_cast %215 : vector<1x8x4xf32> to vector<8x4xf32>
    %217 = vector.broadcast %202 : vector<8x1xf32> to vector<8x4xf32>
    %218 = arith.mulf %217, %216 : vector<8x4xf32>
    %219 = vector.extract_strided_slice %16 {offsets = [0, 20], sizes = [8, 4], strides = [1, 1]} : vector<8x32xf32> to vector<8x4xf32>
    %cst_137 = arith.constant dense<0.000000e+00> : vector<8x4xf32>
    %220 = tpu.matmul %205, %219, %cst_137 {dimension_numbers = #tpu.dot_dimension_numbers<[1], [0], [0], [1], [0, 0, 1, 1], [], []>} : vector<8x8xf32>, vector<8x4xf32>, vector<8x4xf32> -> vector<8x4xf32>
    %221 = arith.addf %218, %220 : vector<8x4xf32>
    %c5_138 = arith.constant 5 : index
    %c0_139 = arith.constant 0 : index
    %c0_140 = arith.constant 0 : index
    %222 = vector.load %arg17[%c5_138, %c0_139, %c0_140] : memref<8x8x4xf32, #tpu.memory_space<vmem>>, vector<1x8x4xf32>
    %223 = vector.shape_cast %222 : vector<1x8x4xf32> to vector<8x4xf32>
    %224 = vector.shape_cast %221 : vector<8x4xf32> to vector<1x8x4xf32>
    tpu.vector_store %arg17[%c5_138, %c0_139, %c0_140], %224 {strides = array<i32>} : memref<8x8x4xf32, #tpu.memory_space<vmem>>, vector<1x8x4xf32>,
    %c5_141 = arith.constant 5 : index
    %c0_142 = arith.constant 0 : index
    %c0_143 = arith.constant 0 : index
    %225 = vector.load %arg15[%c5_141, %c0_142, %c0_143] : memref<8x8x1xf32, #tpu.memory_space<vmem>>, vector<1x8x1xf32>
    %226 = vector.shape_cast %225 : vector<1x8x1xf32> to vector<8x1xf32>
    %227 = vector.shape_cast %200 : vector<8x1xf32> to vector<1x8x1xf32>
    tpu.vector_store %arg15[%c5_141, %c0_142, %c0_143], %227 {strides = array<i32>} : memref<8x8x1xf32, #tpu.memory_space<vmem>>, vector<1x8x1xf32>,
    %228 = vector.extract_strided_slice %17 {offsets = [0, 24], sizes = [8, 4], strides = [1, 1]} : vector<8x32xf32> to vector<8x4xf32>
    %229 = vector.extract_strided_slice %11 {offsets = [0, 24], sizes = [8, 4], strides = [1, 1]} : vector<8x32xf32> to vector<8x4xf32>
    %cst_144 = arith.constant dense<0.000000e+00> : vector<8x8xf32>
    %230 = tpu.matmul %228, %229, %cst_144 {dimension_numbers = #tpu.dot_dimension_numbers<[1], [1], [0], [0], [0, 0, 1, 0], [], []>} : vector<8x4xf32>, vector<8x4xf32>, vector<8x8xf32> -> vector<8x8xf32>
    %c6 = arith.constant 6 : index
    %c0_145 = arith.constant 0 : index
    %c0_146 = arith.constant 0 : index
    %231 = vector.load %arg15[%c6, %c0_145, %c0_146] : memref<8x8x1xf32, #tpu.memory_space<vmem>>, vector<1x8x1xf32>
    %232 = vector.shape_cast %231 : vector<1x8x1xf32> to vector<8x1xf32>
    %cst_147 = arith.constant dense<0xFF800000> : vector<8xf32>
    %233 = vector.multi_reduction <maximumf>, %230, %cst_147 [1] : vector<8x8xf32> to vector<8xf32>
    %234 = vector.shape_cast %233 : vector<8xf32> to vector<8x1xf32>
    %235 = arith.maximumf %232, %234 : vector<8x1xf32>
    %236 = arith.subf %232, %235 : vector<8x1xf32>
    %237 = math.exp %236 : vector<8x1xf32>
    %238 = vector.broadcast %235 : vector<8x1xf32> to vector<8x8xf32>
    %239 = arith.subf %230, %238 : vector<8x8xf32>
    %240 = math.exp %239 : vector<8x8xf32>
    %c6_148 = arith.constant 6 : index
    %c0_149 = arith.constant 0 : index
    %c0_150 = arith.constant 0 : index
    %241 = vector.load %arg16[%c6_148, %c0_149, %c0_150] : memref<8x8x1xf32, #tpu.memory_space<vmem>>, vector<1x8x1xf32>
    %242 = vector.shape_cast %241 : vector<1x8x1xf32> to vector<8x1xf32>
    %243 = arith.mulf %237, %242 : vector<8x1xf32>
    %cst_151 = arith.constant dense<0.000000e+00> : vector<8xf32>
    %244 = vector.multi_reduction <add>, %240, %cst_151 [1] : vector<8x8xf32> to vector<8xf32>
    %245 = vector.shape_cast %244 : vector<8xf32> to vector<8x1xf32>
    %246 = arith.addf %243, %245 : vector<8x1xf32>
    %c6_152 = arith.constant 6 : index
    %c0_153 = arith.constant 0 : index
    %c0_154 = arith.constant 0 : index
    %247 = vector.load %arg16[%c6_152, %c0_153, %c0_154] : memref<8x8x1xf32, #tpu.memory_space<vmem>>, vector<1x8x1xf32>
    %248 = vector.shape_cast %247 : vector<1x8x1xf32> to vector<8x1xf32>
    %249 = vector.shape_cast %246 : vector<8x1xf32> to vector<1x8x1xf32>
    tpu.vector_store %arg16[%c6_152, %c0_153, %c0_154], %249 {strides = array<i32>} : memref<8x8x1xf32, #tpu.memory_space<vmem>>, vector<1x8x1xf32>,
    %c6_155 = arith.constant 6 : index
    %c0_156 = arith.constant 0 : index
    %c0_157 = arith.constant 0 : index
    %250 = vector.load %arg17[%c6_155, %c0_156, %c0_157] : memref<8x8x4xf32, #tpu.memory_space<vmem>>, vector<1x8x4xf32>
    %251 = vector.shape_cast %250 : vector<1x8x4xf32> to vector<8x4xf32>
    %252 = vector.broadcast %237 : vector<8x1xf32> to vector<8x4xf32>
    %253 = arith.mulf %252, %251 : vector<8x4xf32>
    %254 = vector.extract_strided_slice %16 {offsets = [0, 24], sizes = [8, 4], strides = [1, 1]} : vector<8x32xf32> to vector<8x4xf32>
    %cst_158 = arith.constant dense<0.000000e+00> : vector<8x4xf32>
    %255 = tpu.matmul %240, %254, %cst_158 {dimension_numbers = #tpu.dot_dimension_numbers<[1], [0], [0], [1], [0, 0, 1, 1], [], []>} : vector<8x8xf32>, vector<8x4xf32>, vector<8x4xf32> -> vector<8x4xf32>
    %256 = arith.addf %253, %255 : vector<8x4xf32>
    %c6_159 = arith.constant 6 : index
    %c0_160 = arith.constant 0 : index
    %c0_161 = arith.constant 0 : index
    %257 = vector.load %arg17[%c6_159, %c0_160, %c0_161] : memref<8x8x4xf32, #tpu.memory_space<vmem>>, vector<1x8x4xf32>
    %258 = vector.shape_cast %257 : vector<1x8x4xf32> to vector<8x4xf32>
    %259 = vector.shape_cast %256 : vector<8x4xf32> to vector<1x8x4xf32>
    tpu.vector_store %arg17[%c6_159, %c0_160, %c0_161], %259 {strides = array<i32>} : memref<8x8x4xf32, #tpu.memory_space<vmem>>, vector<1x8x4xf32>,
    %c6_162 = arith.constant 6 : index
    %c0_163 = arith.constant 0 : index
    %c0_164 = arith.constant 0 : index
    %260 = vector.load %arg15[%c6_162, %c0_163, %c0_164] : memref<8x8x1xf32, #tpu.memory_space<vmem>>, vector<1x8x1xf32>
    %261 = vector.shape_cast %260 : vector<1x8x1xf32> to vector<8x1xf32>
    %262 = vector.shape_cast %235 : vector<8x1xf32> to vector<1x8x1xf32>
    tpu.vector_store %arg15[%c6_162, %c0_163, %c0_164], %262 {strides = array<i32>} : memref<8x8x1xf32, #tpu.memory_space<vmem>>, vector<1x8x1xf32>,
    %263 = vector.extract_strided_slice %17 {offsets = [0, 28], sizes = [8, 4], strides = [1, 1]} : vector<8x32xf32> to vector<8x4xf32>
    %264 = vector.extract_strided_slice %11 {offsets = [0, 28], sizes = [8, 4], strides = [1, 1]} : vector<8x32xf32> to vector<8x4xf32>
    %cst_165 = arith.constant dense<0.000000e+00> : vector<8x8xf32>
    %265 = tpu.matmul %263, %264, %cst_165 {dimension_numbers = #tpu.dot_dimension_numbers<[1], [1], [0], [0], [0, 0, 1, 0], [], []>} : vector<8x4xf32>, vector<8x4xf32>, vector<8x8xf32> -> vector<8x8xf32>
    %c7 = arith.constant 7 : index
    %c0_166 = arith.constant 0 : index
    %c0_167 = arith.constant 0 : index
    %266 = vector.load %arg15[%c7, %c0_166, %c0_167] : memref<8x8x1xf32, #tpu.memory_space<vmem>>, vector<1x8x1xf32>
    %267 = vector.shape_cast %266 : vector<1x8x1xf32> to vector<8x1xf32>
    %cst_168 = arith.constant dense<0xFF800000> : vector<8xf32>
    %268 = vector.multi_reduction <maximumf>, %265, %cst_168 [1] : vector<8x8xf32> to vector<8xf32>
    %269 = vector.shape_cast %268 : vector<8xf32> to vector<8x1xf32>
    %270 = arith.maximumf %267, %269 : vector<8x1xf32>
    %271 = arith.subf %267, %270 : vector<8x1xf32>
    %272 = math.exp %271 : vector<8x1xf32>
    %273 = vector.broadcast %270 : vector<8x1xf32> to vector<8x8xf32>
    %274 = arith.subf %265, %273 : vector<8x8xf32>
    %275 = math.exp %274 : vector<8x8xf32>
    %c7_169 = arith.constant 7 : index
    %c0_170 = arith.constant 0 : index
    %c0_171 = arith.constant 0 : index
    %276 = vector.load %arg16[%c7_169, %c0_170, %c0_171] : memref<8x8x1xf32, #tpu.memory_space<vmem>>, vector<1x8x1xf32>
    %277 = vector.shape_cast %276 : vector<1x8x1xf32> to vector<8x1xf32>
    %278 = arith.mulf %272, %277 : vector<8x1xf32>
    %cst_172 = arith.constant dense<0.000000e+00> : vector<8xf32>
    %279 = vector.multi_reduction <add>, %275, %cst_172 [1] : vector<8x8xf32> to vector<8xf32>
    %280 = vector.shape_cast %279 : vector<8xf32> to vector<8x1xf32>
    %281 = arith.addf %278, %280 : vector<8x1xf32>
    %c7_173 = arith.constant 7 : index
    %c0_174 = arith.constant 0 : index
    %c0_175 = arith.constant 0 : index
    %282 = vector.load %arg16[%c7_173, %c0_174, %c0_175] : memref<8x8x1xf32, #tpu.memory_space<vmem>>, vector<1x8x1xf32>
    %283 = vector.shape_cast %282 : vector<1x8x1xf32> to vector<8x1xf32>
    %284 = vector.shape_cast %281 : vector<8x1xf32> to vector<1x8x1xf32>
    tpu.vector_store %arg16[%c7_173, %c0_174, %c0_175], %284 {strides = array<i32>} : memref<8x8x1xf32, #tpu.memory_space<vmem>>, vector<1x8x1xf32>,
    %c7_176 = arith.constant 7 : index
    %c0_177 = arith.constant 0 : index
    %c0_178 = arith.constant 0 : index
    %285 = vector.load %arg17[%c7_176, %c0_177, %c0_178] : memref<8x8x4xf32, #tpu.memory_space<vmem>>, vector<1x8x4xf32>
    %286 = vector.shape_cast %285 : vector<1x8x4xf32> to vector<8x4xf32>
    %287 = vector.broadcast %272 : vector<8x1xf32> to vector<8x4xf32>
    %288 = arith.mulf %287, %286 : vector<8x4xf32>
    %289 = vector.extract_strided_slice %16 {offsets = [0, 28], sizes = [8, 4], strides = [1, 1]} : vector<8x32xf32> to vector<8x4xf32>
    %cst_179 = arith.constant dense<0.000000e+00> : vector<8x4xf32>
    %290 = tpu.matmul %275, %289, %cst_179 {dimension_numbers = #tpu.dot_dimension_numbers<[1], [0], [0], [1], [0, 0, 1, 1], [], []>} : vector<8x8xf32>, vector<8x4xf32>, vector<8x4xf32> -> vector<8x4xf32>
    %291 = arith.addf %288, %290 : vector<8x4xf32>
    %c7_180 = arith.constant 7 : index
    %c0_181 = arith.constant 0 : index
    %c0_182 = arith.constant 0 : index
    %292 = vector.load %arg17[%c7_180, %c0_181, %c0_182] : memref<8x8x4xf32, #tpu.memory_space<vmem>>, vector<1x8x4xf32>
    %293 = vector.shape_cast %292 : vector<1x8x4xf32> to vector<8x4xf32>
    %294 = vector.shape_cast %291 : vector<8x4xf32> to vector<1x8x4xf32>
    tpu.vector_store %arg17[%c7_180, %c0_181, %c0_182], %294 {strides = array<i32>} : memref<8x8x4xf32, #tpu.memory_space<vmem>>, vector<1x8x4xf32>,
    %c7_183 = arith.constant 7 : index
    %c0_184 = arith.constant 0 : index
    %c0_185 = arith.constant 0 : index
    %295 = vector.load %arg15[%c7_183, %c0_184, %c0_185] : memref<8x8x1xf32, #tpu.memory_space<vmem>>, vector<1x8x1xf32>
    %296 = vector.shape_cast %295 : vector<1x8x1xf32> to vector<8x1xf32>
    %297 = vector.shape_cast %270 : vector<8x1xf32> to vector<1x8x1xf32>
    tpu.vector_store %arg15[%c7_183, %c0_184, %c0_185], %297 {strides = array<i32>} : memref<8x8x1xf32, #tpu.memory_space<vmem>>, vector<1x8x1xf32>,
    %c0_i32_186 = arith.constant 0 : i32
    %298 = arith.cmpi eq, %arg2, %c0_i32_186 : i32
    %299 = arith.extui %298 : i1 to i32
    %c0_i32_187 = arith.constant 0 : i32
    %300 = arith.cmpi ne, %299, %c0_i32_187 : i32
    scf.if %300 {
      %c0_188 = arith.constant 0 : index
      %c0_189 = arith.constant 0 : index
      %c0_190 = arith.constant 0 : index
      %301 = vector.load %arg17[%c0_188, %c0_189, %c0_190] : memref<8x8x4xf32, #tpu.memory_space<vmem>>, vector<1x8x4xf32>
      %302 = vector.shape_cast %301 : vector<1x8x4xf32> to vector<8x4xf32>
      %c0_191 = arith.constant 0 : index
      %c0_192 = arith.constant 0 : index
      %c0_193 = arith.constant 0 : index
      %303 = vector.load %arg16[%c0_191, %c0_192, %c0_193] : memref<8x8x1xf32, #tpu.memory_space<vmem>>, vector<1x8x1xf32>
      %304 = vector.shape_cast %303 : vector<1x8x1xf32> to vector<8x1xf32>
      %305 = tpu.reciprocal %304 {approx = true} : vector<8x1xf32> -> vector<8x1xf32>
      %306 = vector.broadcast %305 : vector<8x1xf32> to vector<8x4xf32>
      %307 = arith.mulf %302, %306 : vector<8x4xf32>
      %c1_194 = arith.constant 1 : index
      %c0_195 = arith.constant 0 : index
      %c0_196 = arith.constant 0 : index
      %308 = vector.load %arg17[%c1_194, %c0_195, %c0_196] : memref<8x8x4xf32, #tpu.memory_space<vmem>>, vector<1x8x4xf32>
      %309 = vector.shape_cast %308 : vector<1x8x4xf32> to vector<8x4xf32>
      %c1_197 = arith.constant 1 : index
      %c0_198 = arith.constant 0 : index
      %c0_199 = arith.constant 0 : index
      %310 = vector.load %arg16[%c1_197, %c0_198, %c0_199] : memref<8x8x1xf32, #tpu.memory_space<vmem>>, vector<1x8x1xf32>
      %311 = vector.shape_cast %310 : vector<1x8x1xf32> to vector<8x1xf32>
      %312 = tpu.reciprocal %311 {approx = true} : vector<8x1xf32> -> vector<8x1xf32>
      %313 = vector.broadcast %312 : vector<8x1xf32> to vector<8x4xf32>
      %314 = arith.mulf %309, %313 : vector<8x4xf32>
      %c2_200 = arith.constant 2 : index
      %c0_201 = arith.constant 0 : index
      %c0_202 = arith.constant 0 : index
      %315 = vector.load %arg17[%c2_200, %c0_201, %c0_202] : memref<8x8x4xf32, #tpu.memory_space<vmem>>, vector<1x8x4xf32>
      %316 = vector.shape_cast %315 : vector<1x8x4xf32> to vector<8x4xf32>
      %c2_203 = arith.constant 2 : index
      %c0_204 = arith.constant 0 : index
      %c0_205 = arith.constant 0 : index
      %317 = vector.load %arg16[%c2_203, %c0_204, %c0_205] : memref<8x8x1xf32, #tpu.memory_space<vmem>>, vector<1x8x1xf32>
      %318 = vector.shape_cast %317 : vector<1x8x1xf32> to vector<8x1xf32>
      %319 = tpu.reciprocal %318 {approx = true} : vector<8x1xf32> -> vector<8x1xf32>
      %320 = vector.broadcast %319 : vector<8x1xf32> to vector<8x4xf32>
      %321 = arith.mulf %316, %320 : vector<8x4xf32>
      %c3_206 = arith.constant 3 : index
      %c0_207 = arith.constant 0 : index
      %c0_208 = arith.constant 0 : index
      %322 = vector.load %arg17[%c3_206, %c0_207, %c0_208] : memref<8x8x4xf32, #tpu.memory_space<vmem>>, vector<1x8x4xf32>
      %323 = vector.shape_cast %322 : vector<1x8x4xf32> to vector<8x4xf32>
      %c3_209 = arith.constant 3 : index
      %c0_210 = arith.constant 0 : index
      %c0_211 = arith.constant 0 : index
      %324 = vector.load %arg16[%c3_209, %c0_210, %c0_211] : memref<8x8x1xf32, #tpu.memory_space<vmem>>, vector<1x8x1xf32>
      %325 = vector.shape_cast %324 : vector<1x8x1xf32> to vector<8x1xf32>
      %326 = tpu.reciprocal %325 {approx = true} : vector<8x1xf32> -> vector<8x1xf32>
      %327 = vector.broadcast %326 : vector<8x1xf32> to vector<8x4xf32>
      %328 = arith.mulf %323, %327 : vector<8x4xf32>
      %c4_212 = arith.constant 4 : index
      %c0_213 = arith.constant 0 : index
      %c0_214 = arith.constant 0 : index
      %329 = vector.load %arg17[%c4_212, %c0_213, %c0_214] : memref<8x8x4xf32, #tpu.memory_space<vmem>>, vector<1x8x4xf32>
      %330 = vector.shape_cast %329 : vector<1x8x4xf32> to vector<8x4xf32>
      %c4_215 = arith.constant 4 : index
      %c0_216 = arith.constant 0 : index
      %c0_217 = arith.constant 0 : index
      %331 = vector.load %arg16[%c4_215, %c0_216, %c0_217] : memref<8x8x1xf32, #tpu.memory_space<vmem>>, vector<1x8x1xf32>
      %332 = vector.shape_cast %331 : vector<1x8x1xf32> to vector<8x1xf32>
      %333 = tpu.reciprocal %332 {approx = true} : vector<8x1xf32> -> vector<8x1xf32>
      %334 = vector.broadcast %333 : vector<8x1xf32> to vector<8x4xf32>
      %335 = arith.mulf %330, %334 : vector<8x4xf32>
      %c5_218 = arith.constant 5 : index
      %c0_219 = arith.constant 0 : index
      %c0_220 = arith.constant 0 : index
      %336 = vector.load %arg17[%c5_218, %c0_219, %c0_220] : memref<8x8x4xf32, #tpu.memory_space<vmem>>, vector<1x8x4xf32>
      %337 = vector.shape_cast %336 : vector<1x8x4xf32> to vector<8x4xf32>
      %c5_221 = arith.constant 5 : index
      %c0_222 = arith.constant 0 : index
      %c0_223 = arith.constant 0 : index
      %338 = vector.load %arg16[%c5_221, %c0_222, %c0_223] : memref<8x8x1xf32, #tpu.memory_space<vmem>>, vector<1x8x1xf32>
      %339 = vector.shape_cast %338 : vector<1x8x1xf32> to vector<8x1xf32>
      %340 = tpu.reciprocal %339 {approx = true} : vector<8x1xf32> -> vector<8x1xf32>
      %341 = vector.broadcast %340 : vector<8x1xf32> to vector<8x4xf32>
      %342 = arith.mulf %337, %341 : vector<8x4xf32>
      %c6_224 = arith.constant 6 : index
      %c0_225 = arith.constant 0 : index
      %c0_226 = arith.constant 0 : index
      %343 = vector.load %arg17[%c6_224, %c0_225, %c0_226] : memref<8x8x4xf32, #tpu.memory_space<vmem>>, vector<1x8x4xf32>
      %344 = vector.shape_cast %343 : vector<1x8x4xf32> to vector<8x4xf32>
      %c6_227 = arith.constant 6 : index
      %c0_228 = arith.constant 0 : index
      %c0_229 = arith.constant 0 : index
      %345 = vector.load %arg16[%c6_227, %c0_228, %c0_229] : memref<8x8x1xf32, #tpu.memory_space<vmem>>, vector<1x8x1xf32>
      %346 = vector.shape_cast %345 : vector<1x8x1xf32> to vector<8x1xf32>
      %347 = tpu.reciprocal %346 {approx = true} : vector<8x1xf32> -> vector<8x1xf32>
      %348 = vector.broadcast %347 : vector<8x1xf32> to vector<8x4xf32>
      %349 = arith.mulf %344, %348 : vector<8x4xf32>
      %c7_230 = arith.constant 7 : index
      %c0_231 = arith.constant 0 : index
      %c0_232 = arith.constant 0 : index
      %350 = vector.load %arg17[%c7_230, %c0_231, %c0_232] : memref<8x8x4xf32, #tpu.memory_space<vmem>>, vector<1x8x4xf32>
      %351 = vector.shape_cast %350 : vector<1x8x4xf32> to vector<8x4xf32>
      %c7_233 = arith.constant 7 : index
      %c0_234 = arith.constant 0 : index
      %c0_235 = arith.constant 0 : index
      %352 = vector.load %arg16[%c7_233, %c0_234, %c0_235] : memref<8x8x1xf32, #tpu.memory_space<vmem>>, vector<1x8x1xf32>
      %353 = vector.shape_cast %352 : vector<1x8x1xf32> to vector<8x1xf32>
      %354 = tpu.reciprocal %353 {approx = true} : vector<8x1xf32> -> vector<8x1xf32>
      %355 = vector.broadcast %354 : vector<8x1xf32> to vector<8x4xf32>
      %356 = arith.mulf %351, %355 : vector<8x4xf32>
      %357 = tpu.concatenate %307, %314, %321, %328, %335, %342, %349, %356 in 1 : vector<8x4xf32>, vector<8x4xf32>, vector<8x4xf32>, vector<8x4xf32>, vector<8x4xf32>, vector<8x4xf32>, vector<8x4xf32>, vector<8x4xf32> -> vector<8x32xf32>
      %c0_236 = arith.constant 0 : index
      %c0_237 = arith.constant 0 : index
      %358 = vector.load %arg12[%c0_236, %c0_237] : memref<32x128xf32, #tpu.memory_space<vmem>>, vector<32x128xf32>
      %cst_238 = arith.constant dense<0.000000e+00> : vector<8x128xf32>
      %359 = tpu.matmul %357, %358, %cst_238 {dimension_numbers = #tpu.dot_dimension_numbers<[1], [0], [0], [1], [0, 0, 1, 1], [], []>} : vector<8x32xf32>, vector<32x128xf32>, vector<8x128xf32> -> vector<8x128xf32>
      %c0_239 = arith.constant 0 : index
      %c0_240 = arith.constant 0 : index
      %c0_241 = arith.constant 0 : index
      %360 = vector.load %arg13[%c0_239, %c0_240, %c0_241] : memref<1x8x128xf32, #tpu.memory_space<vmem>>, vector<1x8x128xf32>
      %361 = vector.shape_cast %360 : vector<1x8x128xf32> to vector<8x128xf32>
      %362 = vector.shape_cast %359 : vector<8x128xf32> to vector<1x8x128xf32>
      tpu.vector_store %arg13[%c0_239, %c0_240, %c0_241], %362 {strides = array<i32>} : memref<1x8x128xf32, #tpu.memory_space<vmem>>, vector<1x8x128xf32>,
    } else {
    }
    return
  }
  func.func @transform_0(%arg0: i32, %arg1: i32, %arg2: i32) -> (i32, i32, i32) {
    %c0_i32 = arith.constant 0 : i32
    %c0_i32_0 = arith.constant 0 : i32
    return %arg0, %arg1, %c0_i32 : i32, i32, i32
  }
  func.func @transform_1(%arg0: i32, %arg1: i32, %arg2: i32) -> (i32, i32, i32) {
    %c0_i32 = arith.constant 0 : i32
    %c0_i32_0 = arith.constant 0 : i32
    return %arg0, %arg2, %c0_i32 : i32, i32, i32
  }
  func.func @transform_2(%arg0: i32, %arg1: i32, %arg2: i32) -> (i32, i32, i32) {
    %c0_i32 = arith.constant 0 : i32
    %c0_i32_0 = arith.constant 0 : i32
    return %arg0, %arg2, %c0_i32 : i32, i32, i32
  }
  func.func @transform_3(%arg0: i32, %arg1: i32, %arg2: i32) -> (i32, i32) {
    %c0_i32 = arith.constant 0 : i32
    %c0_i32_0 = arith.constant 0 : i32
    %c0_i32_1 = arith.constant 0 : i32
    return %c0_i32, %c0_i32_0 : i32, i32
  }
  func.func @transform_4(%arg0: i32, %arg1: i32, %arg2: i32) -> (i32, i32) {
    %c0_i32 = arith.constant 0 : i32
    %c0_i32_0 = arith.constant 0 : i32
    %c0_i32_1 = arith.constant 0 : i32
    return %c0_i32, %c0_i32_0 : i32, i32
  }
  func.func @transform_5(%arg0: i32, %arg1: i32, %arg2: i32) -> (i32, i32) {
    %c0_i32 = arith.constant 0 : i32
    %c0_i32_0 = arith.constant 0 : i32
    %c0_i32_1 = arith.constant 0 : i32
    return %c0_i32, %c0_i32_0 : i32, i32
  }
  func.func @transform_6(%arg0: i32, %arg1: i32, %arg2: i32) -> (i32, i32) {
    %c0_i32 = arith.constant 0 : i32
    %c0_i32_0 = arith.constant 0 : i32
    %c0_i32_1 = arith.constant 0 : i32
    return %c0_i32, %c0_i32_0 : i32, i32
  }
  func.func @transform_7(%arg0: i32, %arg1: i32, %arg2: i32) -> (i32, i32) {
    %c0_i32 = arith.constant 0 : i32
    %c0_i32_0 = arith.constant 0 : i32
    %c0_i32_1 = arith.constant 0 : i32
    return %c0_i32, %c0_i32_0 : i32, i32
  }
  func.func @transform_8(%arg0: i32, %arg1: i32, %arg2: i32) -> (i32, i32) {
    %c0_i32 = arith.constant 0 : i32
    %c0_i32_0 = arith.constant 0 : i32
    %c0_i32_1 = arith.constant 0 : i32
    return %c0_i32, %c0_i32_0 : i32, i32
  }
  func.func @transform_9(%arg0: i32, %arg1: i32, %arg2: i32) -> (i32, i32) {
    %c0_i32 = arith.constant 0 : i32
    %c0_i32_0 = arith.constant 0 : i32
    %c0_i32_1 = arith.constant 0 : i32
    return %c0_i32, %c0_i32_0 : i32, i32
  }
  func.func @transform_10(%arg0: i32, %arg1: i32, %arg2: i32) -> (i32, i32, i32) {
    %c0_i32 = arith.constant 0 : i32
    %c0_i32_0 = arith.constant 0 : i32
    return %arg0, %arg1, %c0_i32 : i32, i32, i32
  }
}

</mosaic_0001>

<llo_original>
// kernel: tpu_custom_call.1
$region0: #{tpu_custom_call.1}
  #allocation0 [shape = 'u32[]', space=smem, size = 0x4, offset = 0x4, fixed_abs, tag = 'smem constant byte address 0x4 - core index']
  #allocation1 [shape = 'u32[144,128]{1,0:T(1,128)}', space=vmem, size = 0x12000, scoped, tag = 'internal scratch']
  #allocation2 [shape = 'f32[8,32]{1,0:T(8,128)}', space=vmem, size = 0x1000, scoped, tag = 'scratch operand']
  #allocation3 [shape = 'f32[8,8,1]{2,1,0:T(8,128)}', space=vmem, size = 0x8000, scoped, tag = 'scratch operand']
  #allocation4 [shape = 'f32[8,8,1]{2,1,0:T(8,128)}', space=vmem, size = 0x8000, scoped, tag = 'scratch operand']
  #allocation5 [shape = 'f32[8,8,4]{2,1,0:T(8,128)}', space=vmem, size = 0x8000, scoped, tag = 'scratch operand']
  %s0 = inlined_call_operand.hbm [shape: f32[2,8,32], index: 0, kind: input, shape index: {}]
  %s1 = inlined_call_operand.hbm [shape: f32[2,8,32], index: 1, kind: input, shape index: {}]
  %s2 = inlined_call_operand.hbm [shape: f32[2,8,32], index: 2, kind: input, shape index: {}]
  %s3 = inlined_call_operand.hbm [shape: f32[32,32], index: 3, kind: input, shape index: {}]
  %s4 = inlined_call_operand.vmem [shape: f32[1,32], index: 4, kind: input, shape index: {}]
  %s5 = inlined_call_operand.hbm [shape: f32[32,32], index: 5, kind: input, shape index: {}]
  %s6 = inlined_call_operand.vmem [shape: f32[1,32], index: 6, kind: input, shape index: {}]
  %s7 = inlined_call_operand.hbm [shape: f32[32,32], index: 7, kind: input, shape index: {}]
  %s8 = inlined_call_operand.hbm [shape: f32[1,32], index: 8, kind: input, shape index: {}]
  %s9 = inlined_call_operand.vmem [shape: f32[32,128], index: 9, kind: input, shape index: {}]
  %s10 = inlined_call_operand.hbm [shape: f32[2,8,128], index: 10, kind: output, shape index: {}]
  %s11 = sld [smem:[#allocation0]]
  $region109: #{tpu_custom_call.1} parent=0
    _
  %s13 = ssub.s32 1, %s11
  %s14 = scalar_select 0, %s13, %s11
  $region1: #{tpu_custom_call.1} parent=0
    #allocation6 [shape = 'u8[8192]{0}', space=vmem, size = 0x2000, scoped, tag = 'input window, operand 0']
    #allocation7 [shape = 's32[2]{0}', space=sflag, size = 0x8, scoped, tag = 'scoped memory for tpu_custom_call.1']
    #allocation8 [shape = 's32[2]{0}', space=sflag, size = 0x8, scoped, tag = 'scoped memory for tpu_custom_call.1']
    #allocation9 [shape = 'u8[8192]{0}', space=vmem, size = 0x2000, scoped, tag = 'input window, operand 1']
    #allocation10 [shape = 's32[2]{0}', space=sflag, size = 0x8, scoped, tag = 'scoped memory for tpu_custom_call.1']
    #allocation11 [shape = 'u8[8192]{0}', space=vmem, size = 0x2000, scoped, tag = 'input window, operand 2']
    #allocation12 [shape = 'u8[16384]{0}', space=vmem, size = 0x4000, scoped, tag = 'input window, operand 3, single buffered']
    #allocation13 [shape = 's32[1]{0}', space=sflag, size = 0x4, scoped, tag = 'scoped memory for tpu_custom_call.1']
    #allocation14 [shape = 'u8[16384]{0}', space=vmem, size = 0x4000, scoped, tag = 'input window, operand 5, single buffered']
    #allocation15 [shape = 'u8[16384]{0}', space=vmem, size = 0x4000, scoped, tag = 'input window, operand 7, single buffered']
    #allocation16 [shape = 's32[1]{0}', space=sflag, size = 0x4, scoped, tag = 'scoped memory for tpu_custom_call.1']
    #allocation17 [shape = 'u8[512]{0}', space=vmem, size = 0x400, scoped, tag = 'input window, operand 8, single buffered']
    #allocation18 [shape = 'u8[8192]{0}', space=vmem, size = 0x2000, scoped, tag = 'output window, operand 0']
    %15 = vsyncpa [#allocation7], 0
    %s16 = scalar_lea.sflag [#allocation7], 1
    %17 = vsyncpa %s16, 0
    %18 = vsyncpa [#allocation10], 0
    %s19 = scalar_lea.sflag [#allocation10], 1
    %20 = vsyncpa %s19, 0
    %21 = vsyncpa [#allocation13], 0
    %22 = vsyncpa [#allocation16], 0
    %23 = vsyncpa [#allocation8], 0
    %s24 = scalar_lea.sflag [#allocation8], 1
    %25 = vsyncpa %s24, 0
    loop: start=0, step=1, limit=4
    $region2: #{tpu_custom_call.1} parent=1 // loop_pre_header
      _
    $region3: #{tpu_custom_call.1} parent=1 // loop_header
      %s27 = sphi 0, %s31
      %p28 = scmp.ge.s32.totalorder %s27, 4
      %s34 = sphi 0, %s53
      %s35 = sphi 0, %s49
      %s36 = sphi 0, %s45
      %s37 = sphi 0, %s34
      %s38 = sphi 0, %s35
      %s39 = sphi 0, %s36
      %s40 = sphi 0, %s37
      %s41 = sphi 0, %s38
      %s42 = sphi 0, %s39
      %s58 = sphi 0, %s60
      %s61 = sphi 0, %s58
      %s62 = sphi 0, %s61
      %s78 = sphi 0, %s62
      %s86 = sphi 0, %s88
      %s89 = sphi 0, %s86
      %s90 = sphi 0, %s89
      %s106 = sphi 0, %s90
      %s114 = sphi 0, %s116
      %s117 = sphi 0, %s114
      %s118 = sphi 0, %s117
      %s134 = sphi 0, %s118
      %s138 = sphi 0, %s138
      %s140 = sphi 0, %s138
      %s141 = sphi 0, %s140
      %s155 = sphi 0, %s141
      %s159 = sphi 0, %s159
      %s161 = sphi 0, %s159
      %s162 = sphi 0, %s161
      %s176 = sphi 0, %s162
      %s180 = sphi 0, %s180
      %s182 = sphi 0, %s180
      %s183 = sphi 0, %s182
      %s197 = sphi 0, %s183
      %s201 = sphi 0, %s201
      %s203 = sphi 0, %s201
      %s204 = sphi 0, %s203
      %s218 = sphi 0, %s204
      %s222 = sphi 0, %s222
      %s224 = sphi 0, %s222
      %s225 = sphi 0, %s224
      %s239 = sphi 0, %s225
      %s243 = sphi 0, %s243
      %s245 = sphi 0, %s243
      %s246 = sphi 0, %s245
      %s260 = sphi 0, %s246
      %s264 = sphi 0, %s264
      %s266 = sphi 0, %s264
      %s267 = sphi 0, %s266
      %s281 = sphi 0, %s267
      %s289 = sphi 0, %s291
      %s292 = sphi 0, %s289
      %s293 = sphi 0, %s292
      %s309 = sphi 0, %s293
    $region4: #{tpu_custom_call.1} parent=1 // loop_header_branch
      %30 = sbr.rel (%p28) target = $region8
    $region5: #{tpu_custom_call.1} parent=1 // loop_body
      %s32 = ssub.s32 %s27, 1
      %s33 = ssub.s32 %s27, 2
      %s43 = sadd.s32 1, %s36
      %p44 = scmp.ge.s32.totalorder %s43, 1
      %s45 = scalar_select %p44, 0, %s43
      %s46 = sadd.s32 1, %s35
      %s47 = scalar_select %p44, %s46, %s35
      %p48 = scmp.ge.s32.totalorder %s47, 1
      %s49 = scalar_select %p48, 0, %s47
      %s50 = sadd.s32 1, %s34
      %s51 = scalar_select %p48, %s50, %s34
      %p52 = scmp.ge.s32.totalorder %s51, 2
      %s53 = scalar_select %p52, 0, %s51
      %s54 = ssub.s32 %s34, %s53
      %s55 = ssub.s32 %s35, %s49
      %s56 = sor.u32 %s54, %s55
      %p57 = scmp.eq.s32.totalorder %s56, 0
      %s59 = sadd.s32 %s58, 1
      %s60 = scalar_select %p57, %s58, %s59
      %p63 = pneg %p57
      %p64 = scmp.eq.s32.totalorder %s27, 1
      %p65 = por %p63, %p64
      %p66 = scmp.ne.s32.totalorder %s58, %s61
      %p67 = scmp.eq.s32.totalorder %s27, 0
      %p68 = por %p66, %p67
      %p69 = scmp.ne.s32.totalorder %s58, %s61
      %p70 = scmp.eq.s32.totalorder %s32, 1
      %p71 = por %p69, %p70
      %p72 = scmp.ne.s32.totalorder %s61, %s62
      %p73 = scmp.eq.s32.totalorder %s32, 0
      %p74 = por %p72, %p73
      %p75 = scmp.ne.s32.totalorder %s61, %s62
      %p76 = scmp.eq.s32.totalorder %s33, 1
      %p77 = por %p75, %p76
      %p79 = scmp.ne.s32.totalorder %s62, %s78
      %p80 = scmp.eq.s32.totalorder %s33, 0
      %p81 = por %p79, %p80
      %s82 = ssub.s32 %s34, %s53
      %s83 = ssub.s32 %s36, %s45
      %s84 = sor.u32 %s82, %s83
      %p85 = scmp.eq.s32.totalorder %s84, 0
      %s87 = sadd.s32 %s86, 1
      %s88 = scalar_select %p85, %s86, %s87
      %p91 = pneg %p85
      %p92 = scmp.eq.s32.totalorder %s27, 1
      %p93 = por %p91, %p92
      %p94 = scmp.ne.s32.totalorder %s86, %s89
      %p95 = scmp.eq.s32.totalorder %s27, 0
      %p96 = por %p94, %p95
      %p97 = scmp.ne.s32.totalorder %s86, %s89
      %p98 = scmp.eq.s32.totalorder %s32, 1
      %p99 = por %p97, %p98
      %p100 = scmp.ne.s32.totalorder %s89, %s90
      %p101 = scmp.eq.s32.totalorder %s32, 0
      %p102 = por %p100, %p101
      %p103 = scmp.ne.s32.totalorder %s89, %s90
      %p104 = scmp.eq.s32.totalorder %s33, 1
      %p105 = por %p103, %p104
      %p107 = scmp.ne.s32.totalorder %s90, %s106
      %p108 = scmp.eq.s32.totalorder %s33, 0
      %p109 = por %p107, %p108
      %s110 = ssub.s32 %s34, %s53
      %s111 = ssub.s32 %s36, %s45
      %s112 = sor.u32 %s110, %s111
      %p113 = scmp.eq.s32.totalorder %s112, 0
      %s115 = sadd.s32 %s114, 1
      %s116 = scalar_select %p113, %s114, %s115
      %p119 = pneg %p113
      %p120 = scmp.eq.s32.totalorder %s27, 1
      %p121 = por %p119, %p120
      %p122 = scmp.ne.s32.totalorder %s114, %s117
      %p123 = scmp.eq.s32.totalorder %s27, 0
      %p124 = por %p122, %p123
      %p125 = scmp.ne.s32.totalorder %s114, %s117
      %p126 = scmp.eq.s32.totalorder %s32, 1
      %p127 = por %p125, %p126
      %p128 = scmp.ne.s32.totalorder %s117, %s118
      %p129 = scmp.eq.s32.totalorder %s32, 0
      %p130 = por %p128, %p129
      %p131 = scmp.ne.s32.totalorder %s117, %s118
      %p132 = scmp.eq.s32.totalorder %s33, 1
      %p133 = por %p131, %p132
      %p135 = scmp.ne.s32.totalorder %s118, %s134
      %p136 = scmp.eq.s32.totalorder %s33, 0
      %p137 = por %p135, %p136
      %s139 = sadd.s32 %s138, 1
      %p142 = scmp.eq.s32.totalorder %s27, 1
      %p143 = scmp.ne.s32.totalorder %s138, %s140
      %p144 = scmp.eq.s32.totalorder %s27, 0
      %p145 = por %p143, %p144
      %p146 = scmp.ne.s32.totalorder %s138, %s140
      %p147 = scmp.eq.s32.totalorder %s32, 1
      %p148 = por %p146, %p147
      %p149 = scmp.ne.s32.totalorder %s140, %s141
      %p150 = scmp.eq.s32.totalorder %s32, 0
      %p151 = por %p149, %p150
      %p152 = scmp.ne.s32.totalorder %s140, %s141
      %p153 = scmp.eq.s32.totalorder %s33, 1
      %p154 = por %p152, %p153
      %p156 = scmp.ne.s32.totalorder %s141, %s155
      %p157 = scmp.eq.s32.totalorder %s33, 0
      %p158 = por %p156, %p157
      %s160 = sadd.s32 %s159, 1
      %p163 = scmp.eq.s32.totalorder %s27, 1
      %p164 = scmp.ne.s32.totalorder %s159, %s161
      %p165 = scmp.eq.s32.totalorder %s27, 0
      %p166 = por %p164, %p165
      %p167 = scmp.ne.s32.totalorder %s159, %s161
      %p168 = scmp.eq.s32.totalorder %s32, 1
      %p169 = por %p167, %p168
      %p170 = scmp.ne.s32.totalorder %s161, %s162
      %p171 = scmp.eq.s32.totalorder %s32, 0
      %p172 = por %p170, %p171
      %p173 = scmp.ne.s32.totalorder %s161, %s162
      %p174 = scmp.eq.s32.totalorder %s33, 1
      %p175 = por %p173, %p174
      %p177 = scmp.ne.s32.totalorder %s162, %s176
      %p178 = scmp.eq.s32.totalorder %s33, 0
      %p179 = por %p177, %p178
      %s181 = sadd.s32 %s180, 1
      %p184 = scmp.eq.s32.totalorder %s27, 1
      %p185 = scmp.ne.s32.totalorder %s180, %s182
      %p186 = scmp.eq.s32.totalorder %s27, 0
      %p187 = por %p185, %p186
      %p188 = scmp.ne.s32.totalorder %s180, %s182
      %p189 = scmp.eq.s32.totalorder %s32, 1
      %p190 = por %p188, %p189
      %p191 = scmp.ne.s32.totalorder %s182, %s183
      %p192 = scmp.eq.s32.totalorder %s32, 0
      %p193 = por %p191, %p192
      %p194 = scmp.ne.s32.totalorder %s182, %s183
      %p195 = scmp.eq.s32.totalorder %s33, 1
      %p196 = por %p194, %p195
      %p198 = scmp.ne.s32.totalorder %s183, %s197
      %p199 = scmp.eq.s32.totalorder %s33, 0
      %p200 = por %p198, %p199
      %s202 = sadd.s32 %s201, 1
      %p205 = scmp.eq.s32.totalorder %s27, 1
      %p206 = scmp.ne.s32.totalorder %s201, %s203
      %p207 = scmp.eq.s32.totalorder %s27, 0
      %p208 = por %p206, %p207
      %p209 = scmp.ne.s32.totalorder %s201, %s203
      %p210 = scmp.eq.s32.totalorder %s32, 1
      %p211 = por %p209, %p210
      %p212 = scmp.ne.s32.totalorder %s203, %s204
      %p213 = scmp.eq.s32.totalorder %s32, 0
      %p214 = por %p212, %p213
      %p215 = scmp.ne.s32.totalorder %s203, %s204
      %p216 = scmp.eq.s32.totalorder %s33, 1
      %p217 = por %p215, %p216
      %p219 = scmp.ne.s32.totalorder %s204, %s218
      %p220 = scmp.eq.s32.totalorder %s33, 0
      %p221 = por %p219, %p220
      %s223 = sadd.s32 %s222, 1
      %p226 = scmp.eq.s32.totalorder %s27, 1
      %p227 = scmp.ne.s32.totalorder %s222, %s224
      %p228 = scmp.eq.s32.totalorder %s27, 0
      %p229 = por %p227, %p228
      %p230 = scmp.ne.s32.totalorder %s222, %s224
      %p231 = scmp.eq.s32.totalorder %s32, 1
      %p232 = por %p230, %p231
      %p233 = scmp.ne.s32.totalorder %s224, %s225
      %p234 = scmp.eq.s32.totalorder %s32, 0
      %p235 = por %p233, %p234
      %p236 = scmp.ne.s32.totalorder %s224, %s225
      %p237 = scmp.eq.s32.totalorder %s33, 1
      %p238 = por %p236, %p237
      %p240 = scmp.ne.s32.totalorder %s225, %s239
      %p241 = scmp.eq.s32.totalorder %s33, 0
      %p242 = por %p240, %p241
      %s244 = sadd.s32 %s243, 1
      %p247 = scmp.eq.s32.totalorder %s27, 1
      %p248 = scmp.ne.s32.totalorder %s243, %s245
      %p249 = scmp.eq.s32.totalorder %s27, 0
      %p250 = por %p248, %p249
      %p251 = scmp.ne.s32.totalorder %s243, %s245
      %p252 = scmp.eq.s32.totalorder %s32, 1
      %p253 = por %p251, %p252
      %p254 = scmp.ne.s32.totalorder %s245, %s246
      %p255 = scmp.eq.s32.totalorder %s32, 0
      %p256 = por %p254, %p255
      %p257 = scmp.ne.s32.totalorder %s245, %s246
      %p258 = scmp.eq.s32.totalorder %s33, 1
      %p259 = por %p257, %p258
      %p261 = scmp.ne.s32.totalorder %s246, %s260
      %p262 = scmp.eq.s32.totalorder %s33, 0
      %p263 = por %p261, %p262
      %s265 = sadd.s32 %s264, 1
      %p268 = scmp.eq.s32.totalorder %s27, 1
      %p269 = scmp.ne.s32.totalorder %s264, %s266
      %p270 = scmp.eq.s32.totalorder %s27, 0
      %p271 = por %p269, %p270
      %p272 = scmp.ne.s32.totalorder %s264, %s266
      %p273 = scmp.eq.s32.totalorder %s32, 1
      %p274 = por %p272, %p273
      %p275 = scmp.ne.s32.totalorder %s266, %s267
      %p276 = scmp.eq.s32.totalorder %s32, 0
      %p277 = por %p275, %p276
      %p278 = scmp.ne.s32.totalorder %s266, %s267
      %p279 = scmp.eq.s32.totalorder %s33, 1
      %p280 = por %p278, %p279
      %p282 = scmp.ne.s32.totalorder %s267, %s281
      %p283 = scmp.eq.s32.totalorder %s33, 0
      %p284 = por %p282, %p283
      %s285 = ssub.s32 %s34, %s53
      %s286 = ssub.s32 %s35, %s49
      %s287 = sor.u32 %s285, %s286
      %p288 = scmp.eq.s32.totalorder %s287, 0
      %s290 = sadd.s32 %s289, 1
      %s291 = scalar_select %p288, %s289, %s290
      %p294 = pneg %p288
      %p295 = scmp.eq.s32.totalorder %s27, 1
      %p296 = por %p294, %p295
      %p297 = scmp.ne.s32.totalorder %s289, %s292
      %p298 = scmp.eq.s32.totalorder %s27, 0
      %p299 = por %p297, %p298
      %p300 = scmp.ne.s32.totalorder %s289, %s292
      %p301 = scmp.eq.s32.totalorder %s32, 1
      %p302 = por %p300, %p301
      %p303 = scmp.ne.s32.totalorder %s292, %s293
      %p304 = scmp.eq.s32.totalorder %s32, 0
      %p305 = por %p303, %p304
      %p306 = scmp.ne.s32.totalorder %s292, %s293
      %p307 = scmp.eq.s32.totalorder %s33, 1
      %p308 = por %p306, %p307
      %p310 = scmp.ne.s32.totalorder %s293, %s309
      %p311 = scmp.eq.s32.totalorder %s33, 0
      %p312 = por %p310, %p311
      %p313 = scmp.le.s32.totalorder 1, %s27
      %p314 = scmp.lt.s32.totalorder %s27, 3
      %p315 = pnand %p313, %p314
      %p316 = pneg %p315
      // Predicated region
      $region9: #{tpu_custom_call.1} parent=5 // pred_check
        _
      $region10: #{tpu_custom_call.1} parent=5 // pred_check_branch
        %318 = sbr.rel (%p315) target = $region12
      $region11: #{tpu_custom_call.1} parent=5 // pred_region
        %s319 = ssub.s32 %s27, 1
        // Predicated region
        $region13: #{tpu_custom_call.1} parent=11 // pred_check
          %p320 = pneg %p151
        $region14: #{tpu_custom_call.1} parent=11 // pred_check_branch
          %322 = sbr.rel (%p320) target = $region16
        $region15: #{tpu_custom_call.1} parent=11 // pred_region
          %s324 = ssub.s32 512, 512
          %325 = vsyncadd [#allocation13], %s324
          %s326 = sshll.u32 [#allocation12], 4
          %s327 = int_to_ptr.vmem [resolvable:$true] %s326
          %332 = dma.hbm_to_vmem [thread:$0]  %s3, 512, %s327, [#allocation13], 128, 128, 8
        $region16: #{tpu_custom_call.1} parent=11 // pred_fallthru
          _
        // Predicated region
        $region17: #{tpu_custom_call.1} parent=11 // pred_check
          %p333 = pneg %p172
        $region18: #{tpu_custom_call.1} parent=11 // pred_check_branch
          %335 = sbr.rel (%p333) target = $region20
        $region19: #{tpu_custom_call.1} parent=11 // pred_region
          _
        $region20: #{tpu_custom_call.1} parent=11 // pred_fallthru
          _
        // Predicated region
        $region21: #{tpu_custom_call.1} parent=11 // pred_check
          %p336 = pneg %p193
        $region22: #{tpu_custom_call.1} parent=11 // pred_check_branch
          %338 = sbr.rel (%p336) target = $region24
        $region23: #{tpu_custom_call.1} parent=11 // pred_region
          %s340 = ssub.s32 512, 512
          %341 = vsyncadd [#allocation13], %s340
          %s342 = sshll.u32 [#allocation14], 4
          %s343 = int_to_ptr.vmem [resolvable:$true] %s342
          %348 = dma.hbm_to_vmem [thread:$0]  %s5, 512, %s343, [#allocation13], 128, 128, 8
        $region24: #{tpu_custom_call.1} parent=11 // pred_fallthru
          _
        // Predicated region
        $region25: #{tpu_custom_call.1} parent=11 // pred_check
          %p349 = pneg %p214
        $region26: #{tpu_custom_call.1} parent=11 // pred_check_branch
          %351 = sbr.rel (%p349) target = $region28
        $region27: #{tpu_custom_call.1} parent=11 // pred_region
          _
        $region28: #{tpu_custom_call.1} parent=11 // pred_fallthru
          _
        // Predicated region
        $region29: #{tpu_custom_call.1} parent=11 // pred_check
          %p352 = pneg %p235
        $region30: #{tpu_custom_call.1} parent=11 // pred_check_branch
          %354 = sbr.rel (%p352) target = $region32
        $region31: #{tpu_custom_call.1} parent=11 // pred_region
          %s356 = ssub.s32 512, 512
          %357 = vsyncadd [#allocation16], %s356
          %s358 = sshll.u32 [#allocation15], 4
          %s359 = int_to_ptr.vmem [resolvable:$true] %s358
          %364 = dma.hbm_to_vmem [thread:$0]  %s7, 512, %s359, [#allocation16], 128, 128, 8
        $region32: #{tpu_custom_call.1} parent=11 // pred_fallthru
          _
        // Predicated region
        $region33: #{tpu_custom_call.1} parent=11 // pred_check
          %p365 = pneg %p256
        $region34: #{tpu_custom_call.1} parent=11 // pred_check_branch
          %367 = sbr.rel (%p365) target = $region36
        $region35: #{tpu_custom_call.1} parent=11 // pred_region
          %s369 = ssub.s32 16, 16
          %370 = vsyncadd [#allocation16], %s369
          %s372 = sshll.u32 [#allocation17], 4
          %s373 = int_to_ptr.vmem [resolvable:$true] %s372
          %375 = dma.hbm_to_vmem [thread:$0]  %s8, 16, %s373, [#allocation16]
        $region36: #{tpu_custom_call.1} parent=11 // pred_fallthru
          _
        // Predicated region
        $region37: #{tpu_custom_call.1} parent=11 // pred_check
          %p376 = pneg %p277
        $region38: #{tpu_custom_call.1} parent=11 // pred_check_branch
          %378 = sbr.rel (%p376) target = $region40
        $region39: #{tpu_custom_call.1} parent=11 // pred_region
          _
        $region40: #{tpu_custom_call.1} parent=11 // pred_fallthru
          _
      $region12: #{tpu_custom_call.1} parent=5 // pred_fallthru
        _
      %p379 = scmp.lt.s32.totalorder %s27, 2
      // Predicated region
      $region41: #{tpu_custom_call.1} parent=5 // pred_check
        %p380 = pneg %p379
      $region42: #{tpu_custom_call.1} parent=5 // pred_check_branch
        %382 = sbr.rel (%p380) target = $region44
      $region43: #{tpu_custom_call.1} parent=5 // pred_region
        // Predicated region
        $region45: #{tpu_custom_call.1} parent=43 // pred_check
          %p383 = pneg %p68
        $region46: #{tpu_custom_call.1} parent=43 // pred_check_branch
          %385 = sbr.rel (%p383) target = $region48
        $region47: #{tpu_custom_call.1} parent=43 // pred_region
          %s386 = sand.u32 %s58, 1
          %s387 = scalar_lea.sflag [#allocation7], %s386
          %s388 = sand.u32 %s58, 1
          %s389 = smul.addr %s388, 8
          %s390 = scalar_lea.vmem [#allocation6], %s389
          %s392 = ssub.s32 128, 128
          %393 = vsyncadd %s387, %s392
          %s394 = sadd.s32 %s35, %s34
          %s395 = smul.addr %s394, 128
          %s396 = scalar_lea.hbm %s0, %s395
          %s398 = sshll.u32 %s390, 4
          %s399 = int_to_ptr.vmem [resolvable:$true] %s398
          %401 = dma.hbm_to_vmem [thread:$0]  %s396, 128, %s399, %s387
        $region48: #{tpu_custom_call.1} parent=43 // pred_fallthru
          _
        // Predicated region
        $region49: #{tpu_custom_call.1} parent=43 // pred_check
          %p402 = pneg %p96
        $region50: #{tpu_custom_call.1} parent=43 // pred_check_branch
          %404 = sbr.rel (%p402) target = $region52
        $region51: #{tpu_custom_call.1} parent=43 // pred_region
          %s405 = sand.u32 %s27, 1
          %s406 = scalar_lea.sflag [#allocation10], %s405
          %s407 = sand.u32 %s86, 1
          %s408 = smul.addr %s407, 8
          %s409 = scalar_lea.vmem [#allocation9], %s408
          %s411 = ssub.s32 128, 128
          %412 = vsyncadd %s406, %s411
          %s413 = sadd.s32 %s36, %s34
          %s414 = smul.addr %s413, 128
          %s415 = scalar_lea.hbm %s1, %s414
          %s417 = sshll.u32 %s409, 4
          %s418 = int_to_ptr.vmem [resolvable:$true] %s417
          %420 = dma.hbm_to_vmem [thread:$0]  %s415, 128, %s418, %s406
        $region52: #{tpu_custom_call.1} parent=43 // pred_fallthru
          _
        // Predicated region
        $region53: #{tpu_custom_call.1} parent=43 // pred_check
          %p421 = pneg %p124
        $region54: #{tpu_custom_call.1} parent=43 // pred_check_branch
          %423 = sbr.rel (%p421) target = $region56
        $region55: #{tpu_custom_call.1} parent=43 // pred_region
          %s424 = sand.u32 %s27, 1
          %s425 = scalar_lea.sflag [#allocation10], %s424
          %s426 = sand.u32 %s114, 1
          %s427 = smul.addr %s426, 8
          %s428 = scalar_lea.vmem [#allocation11], %s427
          %s430 = ssub.s32 128, 128
          %431 = vsyncadd %s425, %s430
          %s432 = sadd.s32 %s36, %s34
          %s433 = smul.addr %s432, 128
          %s434 = scalar_lea.hbm %s2, %s433
          %s436 = sshll.u32 %s428, 4
          %s437 = int_to_ptr.vmem [resolvable:$true] %s436
          %439 = dma.hbm_to_vmem [thread:$0]  %s434, 128, %s437, %s425
        $region56: #{tpu_custom_call.1} parent=43 // pred_fallthru
          _
      $region44: #{tpu_custom_call.1} parent=5 // pred_fallthru
        _
      %p440 = scmp.le.s32.totalorder 1, %s27
      %p441 = scmp.lt.s32.totalorder %s27, 3
      %p442 = pnand %p440, %p441
      %p443 = pneg %p442
      // Predicated region
      $region57: #{tpu_custom_call.1} parent=5 // pred_check
        _
      $region58: #{tpu_custom_call.1} parent=5 // pred_check_branch
        %445 = sbr.rel (%p442) target = $region60
      $region59: #{tpu_custom_call.1} parent=5 // pred_region
        %s446 = ssub.s32 %s27, 1
        %s447 = sand.u32 %s61, 1
        %s448 = scalar_lea.sflag [#allocation7], %s447
        %s449 = sand.u32 %s61, 1
        %s450 = smul.addr %s449, 8
        %s451 = scalar_lea.vmem [#allocation6], %s450
        // Predicated region
        $region61: #{tpu_custom_call.1} parent=59 // pred_check
          %p452 = pneg %p74
        $region62: #{tpu_custom_call.1} parent=59 // pred_check_branch
          %454 = sbr.rel (%p452) target = $region64
        $region63: #{tpu_custom_call.1} parent=59 // pred_region
          %455 = dma.done %s448, 128
        $region64: #{tpu_custom_call.1} parent=59 // pred_fallthru
          _
        %s456 = sand.u32 %s32, 1
        %s457 = scalar_lea.sflag [#allocation10], %s456
        %s458 = sand.u32 %s89, 1
        %s459 = smul.addr %s458, 8
        %s460 = scalar_lea.vmem [#allocation9], %s459
        // Predicated region
        $region65: #{tpu_custom_call.1} parent=59 // pred_check
          %p461 = pneg %p102
        $region66: #{tpu_custom_call.1} parent=59 // pred_check_branch
          %463 = sbr.rel (%p461) target = $region68
        $region67: #{tpu_custom_call.1} parent=59 // pred_region
          %464 = dma.done %s457, 128
        $region68: #{tpu_custom_call.1} parent=59 // pred_fallthru
          _
        %s465 = sand.u32 %s32, 1
        %s466 = scalar_lea.sflag [#allocation10], %s465
        %s467 = sand.u32 %s117, 1
        %s468 = smul.addr %s467, 8
        %s469 = scalar_lea.vmem [#allocation11], %s468
        // Predicated region
        $region69: #{tpu_custom_call.1} parent=59 // pred_check
          %p470 = pneg %p130
        $region70: #{tpu_custom_call.1} parent=59 // pred_check_branch
          %472 = sbr.rel (%p470) target = $region72
        $region71: #{tpu_custom_call.1} parent=59 // pred_region
          %473 = dma.done %s466, 128
        $region72: #{tpu_custom_call.1} parent=59 // pred_fallthru
          _
        // Predicated region
        $region73: #{tpu_custom_call.1} parent=59 // pred_check
          %p474 = pneg %p151
        $region74: #{tpu_custom_call.1} parent=59 // pred_check_branch
          %476 = sbr.rel (%p474) target = $region76
        $region75: #{tpu_custom_call.1} parent=59 // pred_region
          %477 = dma.done [#allocation13], 512
        $region76: #{tpu_custom_call.1} parent=59 // pred_fallthru
          _
        // Predicated region
        $region77: #{tpu_custom_call.1} parent=59 // pred_check
          %p478 = pneg %p193
        $region78: #{tpu_custom_call.1} parent=59 // pred_check_branch
          %480 = sbr.rel (%p478) target = $region80
        $region79: #{tpu_custom_call.1} parent=59 // pred_region
          %481 = dma.done [#allocation13], 512
        $region80: #{tpu_custom_call.1} parent=59 // pred_fallthru
          _
        // Predicated region
        $region81: #{tpu_custom_call.1} parent=59 // pred_check
          %p482 = pneg %p235
        $region82: #{tpu_custom_call.1} parent=59 // pred_check_branch
          %484 = sbr.rel (%p482) target = $region84
        $region83: #{tpu_custom_call.1} parent=59 // pred_region
          %485 = dma.done [#allocation16], 512
        $region84: #{tpu_custom_call.1} parent=59 // pred_fallthru
          _
        // Predicated region
        $region85: #{tpu_custom_call.1} parent=59 // pred_check
          %p486 = pneg %p256
        $region86: #{tpu_custom_call.1} parent=59 // pred_check_branch
          %488 = sbr.rel (%p486) target = $region88
        $region87: #{tpu_custom_call.1} parent=59 // pred_region
          %489 = dma.done [#allocation16], 16
        $region88: #{tpu_custom_call.1} parent=59 // pred_fallthru
          _
        %s490 = sand.u32 %s61, 1
        %s491 = scalar_lea.sflag [#allocation7], %s490
        %s492 = sand.u32 %s61, 1
        %s493 = smul.addr %s492, 8
        %s494 = scalar_lea.vmem [#allocation6], %s493
        %p495 = pneg %p74
        %p496 = pneg %p71
        %s497 = sand.u32 %s32, 1
        %s498 = scalar_lea.sflag [#allocation10], %s497
        %s499 = sand.u32 %s89, 1
        %s500 = smul.addr %s499, 8
        %s501 = scalar_lea.vmem [#allocation9], %s500
        %p502 = pneg %p102
        %p503 = pneg %p99
        %s504 = sand.u32 %s32, 1
        %s505 = scalar_lea.sflag [#allocation10], %s504
        %s506 = sand.u32 %s117, 1
        %s507 = smul.addr %s506, 8
        %s508 = scalar_lea.vmem [#allocation11], %s507
        %p509 = pneg %p130
        %p510 = pneg %p127
        %p511 = pneg %p151
        %p512 = pneg %p148
        %p513 = pneg %p172
        %p514 = pneg %p169
        %p515 = pneg %p193
        %p516 = pneg %p190
        %p517 = pneg %p214
        %p518 = pneg %p211
        %p519 = pneg %p235
        %p520 = pneg %p232
        %p521 = pneg %p256
        %p522 = pneg %p253
        %p523 = pneg %p277
        %p524 = pneg %p274
        %p525 = pneg %p305
        %p526 = pneg %p302
        %s527 = sand.u32 %s292, 1
        %s528 = scalar_lea.sflag [#allocation8], %s527
        %s529 = sand.u32 %s292, 1
        %s530 = smul.addr %s529, 8
        %s531 = scalar_lea.vmem [#allocation18], %s530
        %p532 = scmp.eq.s32.totalorder %s39, 0
        // Predicated region
        $region89: #{tpu_custom_call.1} parent=59 // pred_check
          %p533 = pneg %p532
        $region90: #{tpu_custom_call.1} parent=59 // pred_check_branch
          %535 = sbr.rel (%p533) target = $region92
        $region91: #{tpu_custom_call.1} parent=59 // pred_region
          %vm536 = vcmask 7168
          %537 = vst.msk [vmem:[#allocation3] sm:$0xff] %vm536, -inf
          %538 = vst.msk [vmem:[#allocation3 + $0x8] sm:$0xff] %vm536, -inf
          %539 = vst.msk [vmem:[#allocation3 + $0x10] sm:$0xff] %vm536, -inf
          %540 = vst.msk [vmem:[#allocation3 + $0x18] sm:$0xff] %vm536, -inf
          %541 = vst.msk [vmem:[#allocation3 + $0x20] sm:$0xff] %vm536, -inf
          %542 = vst.msk [vmem:[#allocation3 + $0x28] sm:$0xff] %vm536, -inf
          %543 = vst.msk [vmem:[#allocation3 + $0x30] sm:$0xff] %vm536, -inf
          %544 = vst.msk [vmem:[#allocation3 + $0x38] sm:$0xff] %vm536, -inf
          %545 = vst.msk [vmem:[#allocation4] sm:$0xff] %vm536, 0.0
          %546 = vst.msk [vmem:[#allocation4 + $0x8] sm:$0xff] %vm536, 0.0
          %547 = vst.msk [vmem:[#allocation4 + $0x10] sm:$0xff] %vm536, 0.0
          %548 = vst.msk [vmem:[#allocation4 + $0x18] sm:$0xff] %vm536, 0.0
          %549 = vst.msk [vmem:[#allocation4 + $0x20] sm:$0xff] %vm536, 0.0
          %550 = vst.msk [vmem:[#allocation4 + $0x28] sm:$0xff] %vm536, 0.0
          %551 = vst.msk [vmem:[#allocation4 + $0x30] sm:$0xff] %vm536, 0.0
          %552 = vst.msk [vmem:[#allocation4 + $0x38] sm:$0xff] %vm536, 0.0
          %vm553 = vcmask 31744
          %554 = vst.msk [vmem:[#allocation5] sm:$0xff] %vm553, 0.0
          %555 = vst.msk [vmem:[#allocation5 + $0x8] sm:$0xff] %vm553, 0.0
          %556 = vst.msk [vmem:[#allocation5 + $0x10] sm:$0xff] %vm553, 0.0
          %557 = vst.msk [vmem:[#allocation5 + $0x18] sm:$0xff] %vm553, 0.0
          %558 = vst.msk [vmem:[#allocation5 + $0x20] sm:$0xff] %vm553, 0.0
          %559 = vst.msk [vmem:[#allocation5 + $0x28] sm:$0xff] %vm553, 0.0
          %560 = vst.msk [vmem:[#allocation5 + $0x30] sm:$0xff] %vm553, 0.0
          %561 = vst.msk [vmem:[#allocation5 + $0x38] sm:$0xff] %vm553, 0.0
          %v562 = vld [vmem:[%s451] sm:$0xff]
          %v563 = vld [vmem:[#allocation12] sm:$0xff]
          %v564 = vld [vmem:[#allocation12 + $0x8] sm:$0xff]
          %v565 = vld [vmem:[#allocation12 + $0x10] sm:$0xff]
          %v566 = vld [vmem:[#allocation12 + $0x18] sm:$0xff]
          %v567 = vld [vmem:[%s4] sm:$0x1]
          %v569 = vlaneseq
          %v570 = vshrl.u32 %v569, 7
          %v571 = vsub.s32 0, %v570
          %v572 = vrot.slane %v567, %v571
          %vm574 = vcmask 261120
          %v576 = vsel %vm574, %v562, 0
          %578 = vmatprep.subr.mxu0 0.0
          %579 = vmatpush1.msra.mxu0 %v563
          %580 = vmatprep.subr.mxu0 0.0
          %581 = vmatpush1.msra.mxu0 %v564
          %582 = vmatprep.subr.mxu0 0.0
          %583 = vmatpush1.msra.mxu0 %v565
          %584 = vmatprep.subr.mxu0 0.0
          %585 = vmatpush1.msra.mxu0 %v566
          %586 = vmatprep.subr.mxu0 0.0
          %587 = vmatpush1.msra.mxu0 0.0
          %588 = vmatprep.subr.mxu0 0.0
          %589 = vmatpush1.msra.mxu0 0.0
          %590 = vmatprep.subr.mxu0 0.0
          %591 = vmatpush1.msra.mxu0 0.0
          %592 = vmatprep.subr.mxu0 0.0
          %593 = vmatpush1.msra.mxu0 0.0
          %594 = vmatprep.subr.mxu0 0.0
          %595 = vmatpush1.msra.mxu0 0.0
          %596 = vmatprep.subr.mxu0 0.0
          %597 = vmatpush1.msra.mxu0 0.0
          %598 = vmatprep.subr.mxu0 0.0
          %599 = vmatpush1.msra.mxu0 0.0
          %600 = vmatprep.subr.mxu0 0.0
          %601 = vmatpush1.msra.mxu0 0.0
          %602 = vmatprep.subr.mxu0 0.0
          %603 = vmatpush1.msra.mxu0 0.0
          %604 = vmatprep.subr.mxu0 0.0
          %605 = vmatpush1.msra.mxu0 0.0
          %606 = vmatprep.subr.mxu0 0.0
          %607 = vmatpush1.msra.mxu0 0.0
          %608 = vmatprep.subr.mxu0 0.0
          %609 = vmatpush1.msra.mxu0 0.0
          %610 = vmatprep.subr.mxu0 0.0
          %611 = vmatpush1.msra.mxu0 0.0
          %612 = vmatprep.subr.mxu0 0.0
          %613 = vmatpush1.msra.mxu0 0.0
          %614 = vmatprep.subr.mxu0 0.0
          %615 = vmatpush1.msra.mxu0 0.0
          %616 = vmatprep.subr.mxu0 0.0
          %617 = vmatpush1.msra.mxu0 0.0
          %618 = vmatprep.subr.mxu0 0.0
          %619 = vmatpush1.msra.mxu0 0.0
          %620 = vmatprep.subr.mxu0 0.0
          %621 = vmatpush1.msra.mxu0 0.0
          %622 = vmatprep.subr.mxu0 0.0
          %623 = vmatpush1.msra.mxu0 0.0
          %624 = vmatprep.subr.mxu0 0.0
          %625 = vmatpush1.msra.mxu0 0.0
          %626 = vmatprep.subr.mxu0 0.0
          %627 = vmatpush1.msra.mxu0 0.0
          %628 = vmatprep.subr.mxu0 0.0
          %629 = vmatpush1.msra.mxu0 0.0
          %630 = vmatprep.subr.mxu0 0.0
          %631 = vmatpush1.msra.mxu0 0.0
          %632 = vmatprep.subr.mxu0 0.0
          %633 = vmatpush1.msra.mxu0 0.0
          %634 = vmatprep.subr.mxu0 0.0
          %635 = vmatpush1.msra.mxu0 0.0
          %636 = vmatprep.subr.mxu0 0.0
          %637 = vmatpush1.msra.mxu0 0.0
          %638 = vmatprep.subr.mxu0 0.0
          %639 = vmatpush1.msra.mxu0 0.0
          %640 = vmatprep.subr.mxu0 0.0
          %641 = vmatpush1.msra.mxu0 0.0
          %642 = vmatprep.mubr.f32.mxu0 0.0
          %643 = vmatmul.mubr.f32.gmra.mrb[0].mxu0 %v576
          %v644 = vpop.f32.mrb[0].mxu0
          %v645 = vadd.f32 %v572, %v644
          %v646 = vpop.f32.mrb[0].mxu0
          %647 = vdwg.mxu0
          %648 = vst.msk [vmem:[#allocation2] sm:$0xff] %vm574, %v645
        $region92: #{tpu_custom_call.1} parent=59 // pred_fallthru
          _
        %v649 = vld [vmem:[%s460] sm:$0xff]
        %v650 = vld [vmem:[%s469] sm:$0xff]
        %v651 = vld [vmem:[#allocation14] sm:$0xff]
        %v652 = vld [vmem:[#allocation14 + $0x8] sm:$0xff]
        %v653 = vld [vmem:[#allocation14 + $0x10] sm:$0xff]
        %v654 = vld [vmem:[#allocation14 + $0x18] sm:$0xff]
        %v655 = vld [vmem:[%s6] sm:$0x1]
        %v657 = vlaneseq
        %v658 = vshrl.u32 %v657, 7
        %v659 = vsub.s32 0, %v658
        %v660 = vrot.slane %v655, %v659
        %vm662 = vcmask 261120
        %v664 = vsel %vm662, %v649, 0
        %666 = vmatprep.subr.mxu0 0.0
        %667 = vmatpush1.msra.mxu0 %v651
        %668 = vmatprep.subr.mxu0 0.0
        %669 = vmatpush1.msra.mxu0 %v652
        %670 = vmatprep.subr.mxu0 0.0
        %671 = vmatpush1.msra.mxu0 %v653
        %672 = vmatprep.subr.mxu0 0.0
        %673 = vmatpush1.msra.mxu0 %v654
        %674 = vmatprep.subr.mxu0 0.0
        %675 = vmatpush1.msra.mxu0 0.0
        %676 = vmatprep.subr.mxu0 0.0
        %677 = vmatpush1.msra.mxu0 0.0
        %678 = vmatprep.subr.mxu0 0.0
        %679 = vmatpush1.msra.mxu0 0.0
        %680 = vmatprep.subr.mxu0 0.0
        %681 = vmatpush1.msra.mxu0 0.0
        %682 = vmatprep.subr.mxu0 0.0
        %683 = vmatpush1.msra.mxu0 0.0
        %684 = vmatprep.subr.mxu0 0.0
        %685 = vmatpush1.msra.mxu0 0.0
        %686 = vmatprep.subr.mxu0 0.0
        %687 = vmatpush1.msra.mxu0 0.0
        %688 = vmatprep.subr.mxu0 0.0
        %689 = vmatpush1.msra.mxu0 0.0
        %690 = vmatprep.subr.mxu0 0.0
        %691 = vmatpush1.msra.mxu0 0.0
        %692 = vmatprep.subr.mxu0 0.0
        %693 = vmatpush1.msra.mxu0 0.0
        %694 = vmatprep.subr.mxu0 0.0
        %695 = vmatpush1.msra.mxu0 0.0
        %696 = vmatprep.subr.mxu0 0.0
        %697 = vmatpush1.msra.mxu0 0.0
        %698 = vmatprep.subr.mxu0 0.0
        %699 = vmatpush1.msra.mxu0 0.0
        %700 = vmatprep.subr.mxu0 0.0
        %701 = vmatpush1.msra.mxu0 0.0
        %702 = vmatprep.subr.mxu0 0.0
        %703 = vmatpush1.msra.mxu0 0.0
        %704 = vmatprep.subr.mxu0 0.0
        %705 = vmatpush1.msra.mxu0 0.0
        %706 = vmatprep.subr.mxu0 0.0
        %707 = vmatpush1.msra.mxu0 0.0
        %708 = vmatprep.subr.mxu0 0.0
        %709 = vmatpush1.msra.mxu0 0.0
        %710 = vmatprep.subr.mxu0 0.0
        %711 = vmatpush1.msra.mxu0 0.0
        %712 = vmatprep.subr.mxu0 0.0
        %713 = vmatpush1.msra.mxu0 0.0
        %714 = vmatprep.subr.mxu0 0.0
        %715 = vmatpush1.msra.mxu0 0.0
        %716 = vmatprep.subr.mxu0 0.0
        %717 = vmatpush1.msra.mxu0 0.0
        %718 = vmatprep.subr.mxu0 0.0
        %719 = vmatpush1.msra.mxu0 0.0
        %720 = vmatprep.subr.mxu0 0.0
        %721 = vmatpush1.msra.mxu0 0.0
        %722 = vmatprep.subr.mxu0 0.0
        %723 = vmatpush1.msra.mxu0 0.0
        %724 = vmatprep.subr.mxu0 0.0
        %725 = vmatpush1.msra.mxu0 0.0
        %726 = vmatprep.subr.mxu0 0.0
        %727 = vmatpush1.msra.mxu0 0.0
        %728 = vmatprep.subr.mxu0 0.0
        %729 = vmatpush1.msra.mxu0 0.0
        %730 = vmatprep.mubr.f32.mxu0 0.0
        %731 = vmatmul.mubr.f32.gmra.mrb[0].mxu0 %v664
        %v732 = vpop.f32.mrb[0].mxu0
        %v733 = vadd.f32 %v660, %v732
        %v734 = vpop.f32.mrb[0].mxu0
        %735 = vdwg.mxu0
        %v736 = vld [vmem:[#allocation15] sm:$0xff]
        %v737 = vld [vmem:[#allocation15 + $0x8] sm:$0xff]
        %v738 = vld [vmem:[#allocation15 + $0x10] sm:$0xff]
        %v739 = vld [vmem:[#allocation15 + $0x18] sm:$0xff]
        %v740 = vld [vmem:[#allocation17] sm:$0x1]
        %v742 = vlaneseq
        %v743 = vshrl.u32 %v742, 7
        %v744 = vsub.s32 0, %v743
        %v745 = vrot.slane %v740, %v744
        %v748 = vsel %vm662, %v650, 0
        %750 = vmatprep.subr.mxu0 0.0
        %751 = vmatpush1.msra.mxu0 %v736
        %752 = vmatprep.subr.mxu0 0.0
        %753 = vmatpush1.msra.mxu0 %v737
        %754 = vmatprep.subr.mxu0 0.0
        %755 = vmatpush1.msra.mxu0 %v738
        %756 = vmatprep.subr.mxu0 0.0
        %757 = vmatpush1.msra.mxu0 %v739
        %758 = vmatprep.subr.mxu0 0.0
        %759 = vmatpush1.msra.mxu0 0.0
        %760 = vmatprep.subr.mxu0 0.0
        %761 = vmatpush1.msra.mxu0 0.0
        %762 = vmatprep.subr.mxu0 0.0
        %763 = vmatpush1.msra.mxu0 0.0
        %764 = vmatprep.subr.mxu0 0.0
        %765 = vmatpush1.msra.mxu0 0.0
        %766 = vmatprep.subr.mxu0 0.0
        %767 = vmatpush1.msra.mxu0 0.0
        %768 = vmatprep.subr.mxu0 0.0
        %769 = vmatpush1.msra.mxu0 0.0
        %770 = vmatprep.subr.mxu0 0.0
        %771 = vmatpush1.msra.mxu0 0.0
        %772 = vmatprep.subr.mxu0 0.0
        %773 = vmatpush1.msra.mxu0 0.0
        %774 = vmatprep.subr.mxu0 0.0
        %775 = vmatpush1.msra.mxu0 0.0
        %776 = vmatprep.subr.mxu0 0.0
        %777 = vmatpush1.msra.mxu0 0.0
        %778 = vmatprep.subr.mxu0 0.0
        %779 = vmatpush1.msra.mxu0 0.0
        %780 = vmatprep.subr.mxu0 0.0
        %781 = vmatpush1.msra.mxu0 0.0
        %782 = vmatprep.subr.mxu0 0.0
        %783 = vmatpush1.msra.mxu0 0.0
        %784 = vmatprep.subr.mxu0 0.0
        %785 = vmatpush1.msra.mxu0 0.0
        %786 = vmatprep.subr.mxu0 0.0
        %787 = vmatpush1.msra.mxu0 0.0
        %788 = vmatprep.subr.mxu0 0.0
        %789 = vmatpush1.msra.mxu0 0.0
        %790 = vmatprep.subr.mxu0 0.0
        %791 = vmatpush1.msra.mxu0 0.0
        %792 = vmatprep.subr.mxu0 0.0
        %793 = vmatpush1.msra.mxu0 0.0
        %794 = vmatprep.subr.mxu0 0.0
        %795 = vmatpush1.msra.mxu0 0.0
        %796 = vmatprep.subr.mxu0 0.0
        %797 = vmatpush1.msra.mxu0 0.0
        %798 = vmatprep.subr.mxu0 0.0
        %799 = vmatpush1.msra.mxu0 0.0
        %800 = vmatprep.subr.mxu0 0.0
        %801 = vmatpush1.msra.mxu0 0.0
        %802 = vmatprep.subr.mxu0 0.0
        %803 = vmatpush1.msra.mxu0 0.0
        %804 = vmatprep.subr.mxu0 0.0
        %805 = vmatpush1.msra.mxu0 0.0
        %806 = vmatprep.subr.mxu0 0.0
        %807 = vmatpush1.msra.mxu0 0.0
        %808 = vmatprep.subr.mxu0 0.0
        %809 = vmatpush1.msra.mxu0 0.0
        %810 = vmatprep.subr.mxu0 0.0
        %811 = vmatpush1.msra.mxu0 0.0
        %812 = vmatprep.subr.mxu0 0.0
        %813 = vmatpush1.msra.mxu0 0.0
        %814 = vmatprep.mubr.f32.mxu0 0.0
        %815 = vmatmul.mubr.f32.gmra.mrb[0].mxu0 %v748
        %v816 = vpop.f32.mrb[0].mxu0
        %v817 = vadd.f32 %v745, %v816
        %v818 = vpop.f32.mrb[0].mxu0
        %819 = vdwg.mxu0
        %v820 = vld [vmem:[#allocation2] sm:$0xff]
        %vm821 = vcmask 31744
        %v823 = vsel %vm821, %v820, 0
        %v826 = vsel %vm821, %v733, 0
        %828 = vmatprep.subr.mxu0 0.0
        %829 = vmatpush1.xpose.msra.mxu0 %v826
        %830 = vmatprep.subr.mxu0 0.0
        %831 = vmatpush1.xpose.msra.mxu0 0.0
        %832 = vmatprep.subr.mxu0 0.0
        %833 = vmatpush1.xpose.msra.mxu0 0.0
        %834 = vmatprep.subr.mxu0 0.0
        %835 = vmatpush1.xpose.msra.mxu0 0.0
        %836 = vmatprep.subr.mxu0 0.0
        %837 = vmatpush1.xpose.msra.mxu0 0.0
        %838 = vmatprep.subr.mxu0 0.0
        %839 = vmatpush1.xpose.msra.mxu0 0.0
        %840 = vmatprep.subr.mxu0 0.0
        %841 = vmatpush1.xpose.msra.mxu0 0.0
        %842 = vmatprep.subr.mxu0 0.0
        %843 = vmatpush1.xpose.msra.mxu0 0.0
        %844 = vmatprep.subr.mxu0 0.0
        %845 = vmatpush1.xpose.msra.mxu0 0.0
        %846 = vmatprep.subr.mxu0 0.0
        %847 = vmatpush1.xpose.msra.mxu0 0.0
        %848 = vmatprep.subr.mxu0 0.0
        %849 = vmatpush1.xpose.msra.mxu0 0.0
        %850 = vmatprep.subr.mxu0 0.0
        %851 = vmatpush1.xpose.msra.mxu0 0.0
        %852 = vmatprep.subr.mxu0 0.0
        %853 = vmatpush1.xpose.msra.mxu0 0.0
        %854 = vmatprep.subr.mxu0 0.0
        %855 = vmatpush1.xpose.msra.mxu0 0.0
        %856 = vmatprep.subr.mxu0 0.0
        %857 = vmatpush1.xpose.msra.mxu0 0.0
        %858 = vmatprep.subr.mxu0 0.0
        %859 = vmatpush1.xpose.msra.mxu0 0.0
        %860 = vmatprep.subr.mxu0 0.0
        %861 = vmatpush1.xpose.msra.mxu0 0.0
        %862 = vmatprep.subr.mxu0 0.0
        %863 = vmatpush1.xpose.msra.mxu0 0.0
        %864 = vmatprep.subr.mxu0 0.0
        %865 = vmatpush1.xpose.msra.mxu0 0.0
        %866 = vmatprep.subr.mxu0 0.0
        %867 = vmatpush1.xpose.msra.mxu0 0.0
        %868 = vmatprep.subr.mxu0 0.0
        %869 = vmatpush1.xpose.msra.mxu0 0.0
        %870 = vmatprep.subr.mxu0 0.0
        %871 = vmatpush1.xpose.msra.mxu0 0.0
        %872 = vmatprep.subr.mxu0 0.0
        %873 = vmatpush1.xpose.msra.mxu0 0.0
        %874 = vmatprep.subr.mxu0 0.0
        %875 = vmatpush1.xpose.msra.mxu0 0.0
        %876 = vmatprep.subr.mxu0 0.0
        %877 = vmatpush1.xpose.msra.mxu0 0.0
        %878 = vmatprep.subr.mxu0 0.0
        %879 = vmatpush1.xpose.msra.mxu0 0.0
        %880 = vmatprep.subr.mxu0 0.0
        %881 = vmatpush1.xpose.msra.mxu0 0.0
        %882 = vmatprep.subr.mxu0 0.0
        %883 = vmatpush1.xpose.msra.mxu0 0.0
        %884 = vmatprep.subr.mxu0 0.0
        %885 = vmatpush1.xpose.msra.mxu0 0.0
        %886 = vmatprep.subr.mxu0 0.0
        %887 = vmatpush1.xpose.msra.mxu0 0.0
        %888 = vmatprep.subr.mxu0 0.0
        %889 = vmatpush1.xpose.msra.mxu0 0.0
        %890 = vmatprep.subr.mxu0 0.0
        %891 = vmatpush1.xpose.msra.mxu0 0.0
        %892 = vmatprep.mubr.f32.mxu0 0.0
        %893 = vmatmul.mubr.f32.gmra.mrb[0].mxu0 %v823
        %v894 = vpop.f32.mrb[0].mxu0
        %v895 = vadd.f32 0.0, %v894
        %v896 = vpop.f32.mrb[0].mxu0
        %897 = vdwg.mxu0
        %v898 = vld [vmem:[#allocation3] sm:$0xff]
        %vm899 = vcmask 64512
        %v900 = vsel %vm899, %v895, -inf
        %901 = vmax.xlane.f32.xlu0 %v900
        %v902 = vpop.xlane.xlu0 %901
        %v903 = vmax.f32 %v898, %v902
        %v904 = vsub.f32 %v898, %v903
        %v905 = vmul.f32 %v904, 1.442695
        %v906 = vpow.pop %v905
        %908 = vset.pattern.permute.xlu0 0
        %909 = vperm.xlu0 %908, %v903
        %v910 = vpop.permute.xlu0 %909
        %v912 = vsub.f32 %v895, %v910
        %v913 = vmul.f32 %v912, 1.442695
        %v914 = vpow.pop %v913
        %v915 = vld [vmem:[#allocation4] sm:$0xff]
        %v916 = vmul.f32 %v906, %v915
        %v917 = vsel %vm899, %v914, 0.0
        %918 = vadd.xlane.f32.xlu0 %v917
        %v919 = vpop.xlane.xlu0 %918
        %v920 = vadd.f32 %v916, %v919
        %vm921 = vcmask 7168
        %922 = vst.msk [vmem:[#allocation4] sm:$0xff] %vm921, %v920
        %v923 = vld [vmem:[#allocation5] sm:$0xff]
        %925 = vset.pattern.permute.xlu0 0
        %926 = vperm.xlu0 %925, %v906
        %v927 = vpop.permute.xlu0 %926
        %v929 = vmul.f32 %v927, %v923
        %v931 = vsel %vm899, %v914, 0
        %933 = vmatprep.subr.mxu0 0.0
        %934 = vmatpush1.msra.mxu0 %v817
        %935 = vmatprep.subr.mxu0 0.0
        %936 = vmatpush1.msra.mxu0 0.0
        %937 = vmatprep.subr.mxu0 0.0
        %938 = vmatpush1.msra.mxu0 0.0
        %939 = vmatprep.subr.mxu0 0.0
        %940 = vmatpush1.msra.mxu0 0.0
        %941 = vmatprep.subr.mxu0 0.0
        %942 = vmatpush1.msra.mxu0 0.0
        %943 = vmatprep.subr.mxu0 0.0
        %944 = vmatpush1.msra.mxu0 0.0
        %945 = vmatprep.subr.mxu0 0.0
        %946 = vmatpush1.msra.mxu0 0.0
        %947 = vmatprep.subr.mxu0 0.0
        %948 = vmatpush1.msra.mxu0 0.0
        %949 = vmatprep.subr.mxu0 0.0
        %950 = vmatpush1.msra.mxu0 0.0
        %951 = vmatprep.subr.mxu0 0.0
        %952 = vmatpush1.msra.mxu0 0.0
        %953 = vmatprep.subr.mxu0 0.0
        %954 = vmatpush1.msra.mxu0 0.0
        %955 = vmatprep.subr.mxu0 0.0
        %956 = vmatpush1.msra.mxu0 0.0
        %957 = vmatprep.subr.mxu0 0.0
        %958 = vmatpush1.msra.mxu0 0.0
        %959 = vmatprep.subr.mxu0 0.0
        %960 = vmatpush1.msra.mxu0 0.0
        %961 = vmatprep.subr.mxu0 0.0
        %962 = vmatpush1.msra.mxu0 0.0
        %963 = vmatprep.subr.mxu0 0.0
        %964 = vmatpush1.msra.mxu0 0.0
        %965 = vmatprep.subr.mxu0 0.0
        %966 = vmatpush1.msra.mxu0 0.0
        %967 = vmatprep.subr.mxu0 0.0
        %968 = vmatpush1.msra.mxu0 0.0
        %969 = vmatprep.subr.mxu0 0.0
        %970 = vmatpush1.msra.mxu0 0.0
        %971 = vmatprep.subr.mxu0 0.0
        %972 = vmatpush1.msra.mxu0 0.0
        %973 = vmatprep.subr.mxu0 0.0
        %974 = vmatpush1.msra.mxu0 0.0
        %975 = vmatprep.subr.mxu0 0.0
        %976 = vmatpush1.msra.mxu0 0.0
        %977 = vmatprep.subr.mxu0 0.0
        %978 = vmatpush1.msra.mxu0 0.0
        %979 = vmatprep.subr.mxu0 0.0
        %980 = vmatpush1.msra.mxu0 0.0
        %981 = vmatprep.subr.mxu0 0.0
        %982 = vmatpush1.msra.mxu0 0.0
        %983 = vmatprep.subr.mxu0 0.0
        %984 = vmatpush1.msra.mxu0 0.0
        %985 = vmatprep.subr.mxu0 0.0
        %986 = vmatpush1.msra.mxu0 0.0
        %987 = vmatprep.subr.mxu0 0.0
        %988 = vmatpush1.msra.mxu0 0.0
        %989 = vmatprep.subr.mxu0 0.0
        %990 = vmatpush1.msra.mxu0 0.0
        %991 = vmatprep.subr.mxu0 0.0
        %992 = vmatpush1.msra.mxu0 0.0
        %993 = vmatprep.subr.mxu0 0.0
        %994 = vmatpush1.msra.mxu0 0.0
        %995 = vmatprep.subr.mxu0 0.0
        %996 = vmatpush1.msra.mxu0 0.0
        %997 = vmatprep.mubr.f32.mxu0 0.0
        %998 = vmatmul.mubr.f32.gmra.mrb[0].mxu0 %v931
        %v999 = vpop.f32.mrb[0].mxu0
        %v1000 = vadd.f32 0.0, %v999
        %v1001 = vpop.f32.mrb[0].mxu0
        %1002 = vdwg.mxu0
        %v1003 = vadd.f32 %v929, %v1000
        %1004 = vst.msk [vmem:[#allocation5] sm:$0xff] %vm821, %v1003
        %1005 = vst.msk [vmem:[#allocation3] sm:$0xff] %vm921, %v903
        %1006 = vrot.lane.b32.xlu0 %v820, 124
        %v1007 = vpop.permute.xlu0 %1006
        %1008 = vrot.lane.b32.xlu0 %v733, 124
        %v1009 = vpop.permute.xlu0 %1008
        %v1010 = vsel %vm821, %v1007, 0
        %v1012 = vsel %vm821, %v1009, 0
        %1014 = vmatprep.subr.mxu0 0.0
        %1015 = vmatpush1.xpose.msra.mxu0 %v1012
        %1016 = vmatprep.subr.mxu0 0.0
        %1017 = vmatpush1.xpose.msra.mxu0 0.0
        %1018 = vmatprep.subr.mxu0 0.0
        %1019 = vmatpush1.xpose.msra.mxu0 0.0
        %1020 = vmatprep.subr.mxu0 0.0
        %1021 = vmatpush1.xpose.msra.mxu0 0.0
        %1022 = vmatprep.subr.mxu0 0.0
        %1023 = vmatpush1.xpose.msra.mxu0 0.0
        %1024 = vmatprep.subr.mxu0 0.0
        %1025 = vmatpush1.xpose.msra.mxu0 0.0
        %1026 = vmatprep.subr.mxu0 0.0
        %1027 = vmatpush1.xpose.msra.mxu0 0.0
        %1028 = vmatprep.subr.mxu0 0.0
        %1029 = vmatpush1.xpose.msra.mxu0 0.0
        %1030 = vmatprep.subr.mxu0 0.0
        %1031 = vmatpush1.xpose.msra.mxu0 0.0
        %1032 = vmatprep.subr.mxu0 0.0
        %1033 = vmatpush1.xpose.msra.mxu0 0.0
        %1034 = vmatprep.subr.mxu0 0.0
        %1035 = vmatpush1.xpose.msra.mxu0 0.0
        %1036 = vmatprep.subr.mxu0 0.0
        %1037 = vmatpush1.xpose.msra.mxu0 0.0
        %1038 = vmatprep.subr.mxu0 0.0
        %1039 = vmatpush1.xpose.msra.mxu0 0.0
        %1040 = vmatprep.subr.mxu0 0.0
        %1041 = vmatpush1.xpose.msra.mxu0 0.0
        %1042 = vmatprep.subr.mxu0 0.0
        %1043 = vmatpush1.xpose.msra.mxu0 0.0
        %1044 = vmatprep.subr.mxu0 0.0
        %1045 = vmatpush1.xpose.msra.mxu0 0.0
        %1046 = vmatprep.subr.mxu0 0.0
        %1047 = vmatpush1.xpose.msra.mxu0 0.0
        %1048 = vmatprep.subr.mxu0 0.0
        %1049 = vmatpush1.xpose.msra.mxu0 0.0
        %1050 = vmatprep.subr.mxu0 0.0
        %1051 = vmatpush1.xpose.msra.mxu0 0.0
        %1052 = vmatprep.subr.mxu0 0.0
        %1053 = vmatpush1.xpose.msra.mxu0 0.0
        %1054 = vmatprep.subr.mxu0 0.0
        %1055 = vmatpush1.xpose.msra.mxu0 0.0
        %1056 = vmatprep.subr.mxu0 0.0
        %1057 = vmatpush1.xpose.msra.mxu0 0.0
        %1058 = vmatprep.subr.mxu0 0.0
        %1059 = vmatpush1.xpose.msra.mxu0 0.0
        %1060 = vmatprep.subr.mxu0 0.0
        %1061 = vmatpush1.xpose.msra.mxu0 0.0
        %1062 = vmatprep.subr.mxu0 0.0
        %1063 = vmatpush1.xpose.msra.mxu0 0.0
        %1064 = vmatprep.subr.mxu0 0.0
        %1065 = vmatpush1.xpose.msra.mxu0 0.0
        %1066 = vmatprep.subr.mxu0 0.0
        %1067 = vmatpush1.xpose.msra.mxu0 0.0
        %1068 = vmatprep.subr.mxu0 0.0
        %1069 = vmatpush1.xpose.msra.mxu0 0.0
        %1070 = vmatprep.subr.mxu0 0.0
        %1071 = vmatpush1.xpose.msra.mxu0 0.0
        %1072 = vmatprep.subr.mxu0 0.0
        %1073 = vmatpush1.xpose.msra.mxu0 0.0
        %1074 = vmatprep.subr.mxu0 0.0
        %1075 = vmatpush1.xpose.msra.mxu0 0.0
        %1076 = vmatprep.subr.mxu0 0.0
        %1077 = vmatpush1.xpose.msra.mxu0 0.0
        %1078 = vmatprep.mubr.f32.mxu0 0.0
        %1079 = vmatmul.mubr.f32.gmra.mrb[0].mxu0 %v1010
        %v1080 = vpop.f32.mrb[0].mxu0
        %v1081 = vadd.f32 0.0, %v1080
        %v1082 = vpop.f32.mrb[0].mxu0
        %1083 = vdwg.mxu0
        %s1084 = scalar_lea.vmem [#allocation3], 8
        %v1085 = vld [vmem:[%s1084] sm:$0xff]
        %v1086 = vsel %vm899, %v1081, -inf
        %1087 = vmax.xlane.f32.xlu0 %v1086
        %v1088 = vpop.xlane.xlu0 %1087
        %v1089 = vmax.f32 %v1085, %v1088
        %v1090 = vsub.f32 %v1085, %v1089
        %v1091 = vmul.f32 %v1090, 1.442695
        %v1092 = vpow.pop %v1091
        %1094 = vset.pattern.permute.xlu0 0
        %1095 = vperm.xlu0 %1094, %v1089
        %v1096 = vpop.permute.xlu0 %1095
        %v1098 = vsub.f32 %v1081, %v1096
        %v1099 = vmul.f32 %v1098, 1.442695
        %v1100 = vpow.pop %v1099
        %s1101 = scalar_lea.vmem [#allocation4], 8
        %v1102 = vld [vmem:[%s1101] sm:$0xff]
        %v1103 = vmul.f32 %v1092, %v1102
        %v1104 = vsel %vm899, %v1100, 0.0
        %1105 = vadd.xlane.f32.xlu0 %v1104
        %v1106 = vpop.xlane.xlu0 %1105
        %v1107 = vadd.f32 %v1103, %v1106
        %1108 = vst.msk [vmem:[%s1101] sm:$0xff] %vm921, %v1107
        %s1109 = scalar_lea.vmem [#allocation5], 8
        %v1110 = vld [vmem:[%s1109] sm:$0xff]
        %1112 = vset.pattern.permute.xlu0 0
        %1113 = vperm.xlu0 %1112, %v1092
        %v1114 = vpop.permute.xlu0 %1113
        %v1116 = vmul.f32 %v1114, %v1110
        %1118 = vrot.lane.b32.xlu0 %v817, 124
        %v1119 = vpop.permute.xlu0 %1118
        %v1122 = vsel %vm899, %v1100, 0
        %1124 = vmatprep.subr.mxu0 0.0
        %1125 = vmatpush1.msra.mxu0 %v1119
        %1126 = vmatprep.subr.mxu0 0.0
        %1127 = vmatpush1.msra.mxu0 0.0
        %1128 = vmatprep.subr.mxu0 0.0
        %1129 = vmatpush1.msra.mxu0 0.0
        %1130 = vmatprep.subr.mxu0 0.0
        %1131 = vmatpush1.msra.mxu0 0.0
        %1132 = vmatprep.subr.mxu0 0.0
        %1133 = vmatpush1.msra.mxu0 0.0
        %1134 = vmatprep.subr.mxu0 0.0
        %1135 = vmatpush1.msra.mxu0 0.0
        %1136 = vmatprep.subr.mxu0 0.0
        %1137 = vmatpush1.msra.mxu0 0.0
        %1138 = vmatprep.subr.mxu0 0.0
        %1139 = vmatpush1.msra.mxu0 0.0
        %1140 = vmatprep.subr.mxu0 0.0
        %1141 = vmatpush1.msra.mxu0 0.0
        %1142 = vmatprep.subr.mxu0 0.0
        %1143 = vmatpush1.msra.mxu0 0.0
        %1144 = vmatprep.subr.mxu0 0.0
        %1145 = vmatpush1.msra.mxu0 0.0
        %1146 = vmatprep.subr.mxu0 0.0
        %1147 = vmatpush1.msra.mxu0 0.0
        %1148 = vmatprep.subr.mxu0 0.0
        %1149 = vmatpush1.msra.mxu0 0.0
        %1150 = vmatprep.subr.mxu0 0.0
        %1151 = vmatpush1.msra.mxu0 0.0
        %1152 = vmatprep.subr.mxu0 0.0
        %1153 = vmatpush1.msra.mxu0 0.0
        %1154 = vmatprep.subr.mxu0 0.0
        %1155 = vmatpush1.msra.mxu0 0.0
        %1156 = vmatprep.subr.mxu0 0.0
        %1157 = vmatpush1.msra.mxu0 0.0
        %1158 = vmatprep.subr.mxu0 0.0
        %1159 = vmatpush1.msra.mxu0 0.0
        %1160 = vmatprep.subr.mxu0 0.0
        %1161 = vmatpush1.msra.mxu0 0.0
        %1162 = vmatprep.subr.mxu0 0.0
        %1163 = vmatpush1.msra.mxu0 0.0
        %1164 = vmatprep.subr.mxu0 0.0
        %1165 = vmatpush1.msra.mxu0 0.0
        %1166 = vmatprep.subr.mxu0 0.0
        %1167 = vmatpush1.msra.mxu0 0.0
        %1168 = vmatprep.subr.mxu0 0.0
        %1169 = vmatpush1.msra.mxu0 0.0
        %1170 = vmatprep.subr.mxu0 0.0
        %1171 = vmatpush1.msra.mxu0 0.0
        %1172 = vmatprep.subr.mxu0 0.0
        %1173 = vmatpush1.msra.mxu0 0.0
        %1174 = vmatprep.subr.mxu0 0.0
        %1175 = vmatpush1.msra.mxu0 0.0
        %1176 = vmatprep.subr.mxu0 0.0
        %1177 = vmatpush1.msra.mxu0 0.0
        %1178 = vmatprep.subr.mxu0 0.0
        %1179 = vmatpush1.msra.mxu0 0.0
        %1180 = vmatprep.subr.mxu0 0.0
        %1181 = vmatpush1.msra.mxu0 0.0
        %1182 = vmatprep.subr.mxu0 0.0
        %1183 = vmatpush1.msra.mxu0 0.0
        %1184 = vmatprep.subr.mxu0 0.0
        %1185 = vmatpush1.msra.mxu0 0.0
        %1186 = vmatprep.subr.mxu0 0.0
        %1187 = vmatpush1.msra.mxu0 0.0
        %1188 = vmatprep.mubr.f32.mxu0 0.0
        %1189 = vmatmul.mubr.f32.gmra.mrb[0].mxu0 %v1122
        %v1190 = vpop.f32.mrb[0].mxu0
        %v1191 = vadd.f32 0.0, %v1190
        %v1192 = vpop.f32.mrb[0].mxu0
        %1193 = vdwg.mxu0
        %v1194 = vadd.f32 %v1116, %v1191
        %1195 = vst.msk [vmem:[%s1109] sm:$0xff] %vm821, %v1194
        %1196 = vst.msk [vmem:[%s1084] sm:$0xff] %vm921, %v1089
        %1197 = vrot.lane.b32.xlu0 %v820, 120
        %v1198 = vpop.permute.xlu0 %1197
        %1199 = vrot.lane.b32.xlu0 %v733, 120
        %v1200 = vpop.permute.xlu0 %1199
        %v1201 = vsel %vm821, %v1198, 0
        %v1203 = vsel %vm821, %v1200, 0
        %1205 = vmatprep.subr.mxu0 0.0
        %1206 = vmatpush1.xpose.msra.mxu0 %v1203
        %1207 = vmatprep.subr.mxu0 0.0
        %1208 = vmatpush1.xpose.msra.mxu0 0.0
        %1209 = vmatprep.subr.mxu0 0.0
        %1210 = vmatpush1.xpose.msra.mxu0 0.0
        %1211 = vmatprep.subr.mxu0 0.0
        %1212 = vmatpush1.xpose.msra.mxu0 0.0
        %1213 = vmatprep.subr.mxu0 0.0
        %1214 = vmatpush1.xpose.msra.mxu0 0.0
        %1215 = vmatprep.subr.mxu0 0.0
        %1216 = vmatpush1.xpose.msra.mxu0 0.0
        %1217 = vmatprep.subr.mxu0 0.0
        %1218 = vmatpush1.xpose.msra.mxu0 0.0
        %1219 = vmatprep.subr.mxu0 0.0
        %1220 = vmatpush1.xpose.msra.mxu0 0.0
        %1221 = vmatprep.subr.mxu0 0.0
        %1222 = vmatpush1.xpose.msra.mxu0 0.0
        %1223 = vmatprep.subr.mxu0 0.0
        %1224 = vmatpush1.xpose.msra.mxu0 0.0
        %1225 = vmatprep.subr.mxu0 0.0
        %1226 = vmatpush1.xpose.msra.mxu0 0.0
        %1227 = vmatprep.subr.mxu0 0.0
        %1228 = vmatpush1.xpose.msra.mxu0 0.0
        %1229 = vmatprep.subr.mxu0 0.0
        %1230 = vmatpush1.xpose.msra.mxu0 0.0
        %1231 = vmatprep.subr.mxu0 0.0
        %1232 = vmatpush1.xpose.msra.mxu0 0.0
        %1233 = vmatprep.subr.mxu0 0.0
        %1234 = vmatpush1.xpose.msra.mxu0 0.0
        %1235 = vmatprep.subr.mxu0 0.0
        %1236 = vmatpush1.xpose.msra.mxu0 0.0
        %1237 = vmatprep.subr.mxu0 0.0
        %1238 = vmatpush1.xpose.msra.mxu0 0.0
        %1239 = vmatprep.subr.mxu0 0.0
        %1240 = vmatpush1.xpose.msra.mxu0 0.0
        %1241 = vmatprep.subr.mxu0 0.0
        %1242 = vmatpush1.xpose.msra.mxu0 0.0
        %1243 = vmatprep.subr.mxu0 0.0
        %1244 = vmatpush1.xpose.msra.mxu0 0.0
        %1245 = vmatprep.subr.mxu0 0.0
        %1246 = vmatpush1.xpose.msra.mxu0 0.0
        %1247 = vmatprep.subr.mxu0 0.0
        %1248 = vmatpush1.xpose.msra.mxu0 0.0
        %1249 = vmatprep.subr.mxu0 0.0
        %1250 = vmatpush1.xpose.msra.mxu0 0.0
        %1251 = vmatprep.subr.mxu0 0.0
        %1252 = vmatpush1.xpose.msra.mxu0 0.0
        %1253 = vmatprep.subr.mxu0 0.0
        %1254 = vmatpush1.xpose.msra.mxu0 0.0
        %1255 = vmatprep.subr.mxu0 0.0
        %1256 = vmatpush1.xpose.msra.mxu0 0.0
        %1257 = vmatprep.subr.mxu0 0.0
        %1258 = vmatpush1.xpose.msra.mxu0 0.0
        %1259 = vmatprep.subr.mxu0 0.0
        %1260 = vmatpush1.xpose.msra.mxu0 0.0
        %1261 = vmatprep.subr.mxu0 0.0
        %1262 = vmatpush1.xpose.msra.mxu0 0.0
        %1263 = vmatprep.subr.mxu0 0.0
        %1264 = vmatpush1.xpose.msra.mxu0 0.0
        %1265 = vmatprep.subr.mxu0 0.0
        %1266 = vmatpush1.xpose.msra.mxu0 0.0
        %1267 = vmatprep.subr.mxu0 0.0
        %1268 = vmatpush1.xpose.msra.mxu0 0.0
        %1269 = vmatprep.mubr.f32.mxu0 0.0
        %1270 = vmatmul.mubr.f32.gmra.mrb[0].mxu0 %v1201
        %v1271 = vpop.f32.mrb[0].mxu0
        %v1272 = vadd.f32 0.0, %v1271
        %v1273 = vpop.f32.mrb[0].mxu0
        %1274 = vdwg.mxu0
        %s1275 = scalar_lea.vmem [#allocation3], 16
        %v1276 = vld [vmem:[%s1275] sm:$0xff]
        %v1277 = vsel %vm899, %v1272, -inf
        %1278 = vmax.xlane.f32.xlu0 %v1277
        %v1279 = vpop.xlane.xlu0 %1278
        %v1280 = vmax.f32 %v1276, %v1279
        %v1281 = vsub.f32 %v1276, %v1280
        %v1282 = vmul.f32 %v1281, 1.442695
        %v1283 = vpow.pop %v1282
        %1285 = vset.pattern.permute.xlu0 0
        %1286 = vperm.xlu0 %1285, %v1280
        %v1287 = vpop.permute.xlu0 %1286
        %v1289 = vsub.f32 %v1272, %v1287
        %v1290 = vmul.f32 %v1289, 1.442695
        %v1291 = vpow.pop %v1290
        %s1292 = scalar_lea.vmem [#allocation4], 16
        %v1293 = vld [vmem:[%s1292] sm:$0xff]
        %v1294 = vmul.f32 %v1283, %v1293
        %v1295 = vsel %vm899, %v1291, 0.0
        %1296 = vadd.xlane.f32.xlu0 %v1295
        %v1297 = vpop.xlane.xlu0 %1296
        %v1298 = vadd.f32 %v1294, %v1297
        %1299 = vst.msk [vmem:[%s1292] sm:$0xff] %vm921, %v1298
        %s1300 = scalar_lea.vmem [#allocation5], 16
        %v1301 = vld [vmem:[%s1300] sm:$0xff]
        %1303 = vset.pattern.permute.xlu0 0
        %1304 = vperm.xlu0 %1303, %v1283
        %v1305 = vpop.permute.xlu0 %1304
        %v1307 = vmul.f32 %v1305, %v1301
        %1308 = vrot.lane.b32.xlu0 %v817, 120
        %v1309 = vpop.permute.xlu0 %1308
        %v1312 = vsel %vm899, %v1291, 0
        %1314 = vmatprep.subr.mxu0 0.0
        %1315 = vmatpush1.msra.mxu0 %v1309
        %1316 = vmatprep.subr.mxu0 0.0
        %1317 = vmatpush1.msra.mxu0 0.0
        %1318 = vmatprep.subr.mxu0 0.0
        %1319 = vmatpush1.msra.mxu0 0.0
        %1320 = vmatprep.subr.mxu0 0.0
        %1321 = vmatpush1.msra.mxu0 0.0
        %1322 = vmatprep.subr.mxu0 0.0
        %1323 = vmatpush1.msra.mxu0 0.0
        %1324 = vmatprep.subr.mxu0 0.0
        %1325 = vmatpush1.msra.mxu0 0.0
        %1326 = vmatprep.subr.mxu0 0.0
        %1327 = vmatpush1.msra.mxu0 0.0
        %1328 = vmatprep.subr.mxu0 0.0
        %1329 = vmatpush1.msra.mxu0 0.0
        %1330 = vmatprep.subr.mxu0 0.0
        %1331 = vmatpush1.msra.mxu0 0.0
        %1332 = vmatprep.subr.mxu0 0.0
        %1333 = vmatpush1.msra.mxu0 0.0
        %1334 = vmatprep.subr.mxu0 0.0
        %1335 = vmatpush1.msra.mxu0 0.0
        %1336 = vmatprep.subr.mxu0 0.0
        %1337 = vmatpush1.msra.mxu0 0.0
        %1338 = vmatprep.subr.mxu0 0.0
        %1339 = vmatpush1.msra.mxu0 0.0
        %1340 = vmatprep.subr.mxu0 0.0
        %1341 = vmatpush1.msra.mxu0 0.0
        %1342 = vmatprep.subr.mxu0 0.0
        %1343 = vmatpush1.msra.mxu0 0.0
        %1344 = vmatprep.subr.mxu0 0.0
        %1345 = vmatpush1.msra.mxu0 0.0
        %1346 = vmatprep.subr.mxu0 0.0
        %1347 = vmatpush1.msra.mxu0 0.0
        %1348 = vmatprep.subr.mxu0 0.0
        %1349 = vmatpush1.msra.mxu0 0.0
        %1350 = vmatprep.subr.mxu0 0.0
        %1351 = vmatpush1.msra.mxu0 0.0
        %1352 = vmatprep.subr.mxu0 0.0
        %1353 = vmatpush1.msra.mxu0 0.0
        %1354 = vmatprep.subr.mxu0 0.0
        %1355 = vmatpush1.msra.mxu0 0.0
        %1356 = vmatprep.subr.mxu0 0.0
        %1357 = vmatpush1.msra.mxu0 0.0
        %1358 = vmatprep.subr.mxu0 0.0
        %1359 = vmatpush1.msra.mxu0 0.0
        %1360 = vmatprep.subr.mxu0 0.0
        %1361 = vmatpush1.msra.mxu0 0.0
        %1362 = vmatprep.subr.mxu0 0.0
        %1363 = vmatpush1.msra.mxu0 0.0
        %1364 = vmatprep.subr.mxu0 0.0
        %1365 = vmatpush1.msra.mxu0 0.0
        %1366 = vmatprep.subr.mxu0 0.0
        %1367 = vmatpush1.msra.mxu0 0.0
        %1368 = vmatprep.subr.mxu0 0.0
        %1369 = vmatpush1.msra.mxu0 0.0
        %1370 = vmatprep.subr.mxu0 0.0
        %1371 = vmatpush1.msra.mxu0 0.0
        %1372 = vmatprep.subr.mxu0 0.0
        %1373 = vmatpush1.msra.mxu0 0.0
        %1374 = vmatprep.subr.mxu0 0.0
        %1375 = vmatpush1.msra.mxu0 0.0
        %1376 = vmatprep.subr.mxu0 0.0
        %1377 = vmatpush1.msra.mxu0 0.0
        %1378 = vmatprep.mubr.f32.mxu0 0.0
        %1379 = vmatmul.mubr.f32.gmra.mrb[0].mxu0 %v1312
        %v1380 = vpop.f32.mrb[0].mxu0
        %v1381 = vadd.f32 0.0, %v1380
        %v1382 = vpop.f32.mrb[0].mxu0
        %1383 = vdwg.mxu0
        %v1384 = vadd.f32 %v1307, %v1381
        %1385 = vst.msk [vmem:[%s1300] sm:$0xff] %vm821, %v1384
        %1386 = vst.msk [vmem:[%s1275] sm:$0xff] %vm921, %v1280
        %1387 = vrot.lane.b32.xlu0 %v820, 116
        %v1388 = vpop.permute.xlu0 %1387
        %1389 = vrot.lane.b32.xlu0 %v733, 116
        %v1390 = vpop.permute.xlu0 %1389
        %v1391 = vsel %vm821, %v1388, 0
        %v1393 = vsel %vm821, %v1390, 0
        %1395 = vmatprep.subr.mxu0 0.0
        %1396 = vmatpush1.xpose.msra.mxu0 %v1393
        %1397 = vmatprep.subr.mxu0 0.0
        %1398 = vmatpush1.xpose.msra.mxu0 0.0
        %1399 = vmatprep.subr.mxu0 0.0
        %1400 = vmatpush1.xpose.msra.mxu0 0.0
        %1401 = vmatprep.subr.mxu0 0.0
        %1402 = vmatpush1.xpose.msra.mxu0 0.0
        %1403 = vmatprep.subr.mxu0 0.0
        %1404 = vmatpush1.xpose.msra.mxu0 0.0
        %1405 = vmatprep.subr.mxu0 0.0
        %1406 = vmatpush1.xpose.msra.mxu0 0.0
        %1407 = vmatprep.subr.mxu0 0.0
        %1408 = vmatpush1.xpose.msra.mxu0 0.0
        %1409 = vmatprep.subr.mxu0 0.0
        %1410 = vmatpush1.xpose.msra.mxu0 0.0
        %1411 = vmatprep.subr.mxu0 0.0
        %1412 = vmatpush1.xpose.msra.mxu0 0.0
        %1413 = vmatprep.subr.mxu0 0.0
        %1414 = vmatpush1.xpose.msra.mxu0 0.0
        %1415 = vmatprep.subr.mxu0 0.0
        %1416 = vmatpush1.xpose.msra.mxu0 0.0
        %1417 = vmatprep.subr.mxu0 0.0
        %1418 = vmatpush1.xpose.msra.mxu0 0.0
        %1419 = vmatprep.subr.mxu0 0.0
        %1420 = vmatpush1.xpose.msra.mxu0 0.0
        %1421 = vmatprep.subr.mxu0 0.0
        %1422 = vmatpush1.xpose.msra.mxu0 0.0
        %1423 = vmatprep.subr.mxu0 0.0
        %1424 = vmatpush1.xpose.msra.mxu0 0.0
        %1425 = vmatprep.subr.mxu0 0.0
        %1426 = vmatpush1.xpose.msra.mxu0 0.0
        %1427 = vmatprep.subr.mxu0 0.0
        %1428 = vmatpush1.xpose.msra.mxu0 0.0
        %1429 = vmatprep.subr.mxu0 0.0
        %1430 = vmatpush1.xpose.msra.mxu0 0.0
        %1431 = vmatprep.subr.mxu0 0.0
        %1432 = vmatpush1.xpose.msra.mxu0 0.0
        %1433 = vmatprep.subr.mxu0 0.0
        %1434 = vmatpush1.xpose.msra.mxu0 0.0
        %1435 = vmatprep.subr.mxu0 0.0
        %1436 = vmatpush1.xpose.msra.mxu0 0.0
        %1437 = vmatprep.subr.mxu0 0.0
        %1438 = vmatpush1.xpose.msra.mxu0 0.0
        %1439 = vmatprep.subr.mxu0 0.0
        %1440 = vmatpush1.xpose.msra.mxu0 0.0
        %1441 = vmatprep.subr.mxu0 0.0
        %1442 = vmatpush1.xpose.msra.mxu0 0.0
        %1443 = vmatprep.subr.mxu0 0.0
        %1444 = vmatpush1.xpose.msra.mxu0 0.0
        %1445 = vmatprep.subr.mxu0 0.0
        %1446 = vmatpush1.xpose.msra.mxu0 0.0
        %1447 = vmatprep.subr.mxu0 0.0
        %1448 = vmatpush1.xpose.msra.mxu0 0.0
        %1449 = vmatprep.subr.mxu0 0.0
        %1450 = vmatpush1.xpose.msra.mxu0 0.0
        %1451 = vmatprep.subr.mxu0 0.0
        %1452 = vmatpush1.xpose.msra.mxu0 0.0
        %1453 = vmatprep.subr.mxu0 0.0
        %1454 = vmatpush1.xpose.msra.mxu0 0.0
        %1455 = vmatprep.subr.mxu0 0.0
        %1456 = vmatpush1.xpose.msra.mxu0 0.0
        %1457 = vmatprep.subr.mxu0 0.0
        %1458 = vmatpush1.xpose.msra.mxu0 0.0
        %1459 = vmatprep.mubr.f32.mxu0 0.0
        %1460 = vmatmul.mubr.f32.gmra.mrb[0].mxu0 %v1391
        %v1461 = vpop.f32.mrb[0].mxu0
        %v1462 = vadd.f32 0.0, %v1461
        %v1463 = vpop.f32.mrb[0].mxu0
        %1464 = vdwg.mxu0
        %s1465 = scalar_lea.vmem [#allocation3], 24
        %v1466 = vld [vmem:[%s1465] sm:$0xff]
        %v1467 = vsel %vm899, %v1462, -inf
        %1468 = vmax.xlane.f32.xlu0 %v1467
        %v1469 = vpop.xlane.xlu0 %1468
        %v1470 = vmax.f32 %v1466, %v1469
        %v1471 = vsub.f32 %v1466, %v1470
        %v1472 = vmul.f32 %v1471, 1.442695
        %v1473 = vpow.pop %v1472
        %1475 = vset.pattern.permute.xlu0 0
        %1476 = vperm.xlu0 %1475, %v1470
        %v1477 = vpop.permute.xlu0 %1476
        %v1479 = vsub.f32 %v1462, %v1477
        %v1480 = vmul.f32 %v1479, 1.442695
        %v1481 = vpow.pop %v1480
        %s1482 = scalar_lea.vmem [#allocation4], 24
        %v1483 = vld [vmem:[%s1482] sm:$0xff]
        %v1484 = vmul.f32 %v1473, %v1483
        %v1485 = vsel %vm899, %v1481, 0.0
        %1486 = vadd.xlane.f32.xlu0 %v1485
        %v1487 = vpop.xlane.xlu0 %1486
        %v1488 = vadd.f32 %v1484, %v1487
        %1489 = vst.msk [vmem:[%s1482] sm:$0xff] %vm921, %v1488
        %s1490 = scalar_lea.vmem [#allocation5], 24
        %v1491 = vld [vmem:[%s1490] sm:$0xff]
        %1493 = vset.pattern.permute.xlu0 0
        %1494 = vperm.xlu0 %1493, %v1473
        %v1495 = vpop.permute.xlu0 %1494
        %v1497 = vmul.f32 %v1495, %v1491
        %1498 = vrot.lane.b32.xlu0 %v817, 116
        %v1499 = vpop.permute.xlu0 %1498
        %v1502 = vsel %vm899, %v1481, 0
        %1504 = vmatprep.subr.mxu0 0.0
        %1505 = vmatpush1.msra.mxu0 %v1499
        %1506 = vmatprep.subr.mxu0 0.0
        %1507 = vmatpush1.msra.mxu0 0.0
        %1508 = vmatprep.subr.mxu0 0.0
        %1509 = vmatpush1.msra.mxu0 0.0
        %1510 = vmatprep.subr.mxu0 0.0
        %1511 = vmatpush1.msra.mxu0 0.0
        %1512 = vmatprep.subr.mxu0 0.0
        %1513 = vmatpush1.msra.mxu0 0.0
        %1514 = vmatprep.subr.mxu0 0.0
        %1515 = vmatpush1.msra.mxu0 0.0
        %1516 = vmatprep.subr.mxu0 0.0
        %1517 = vmatpush1.msra.mxu0 0.0
        %1518 = vmatprep.subr.mxu0 0.0
        %1519 = vmatpush1.msra.mxu0 0.0
        %1520 = vmatprep.subr.mxu0 0.0
        %1521 = vmatpush1.msra.mxu0 0.0
        %1522 = vmatprep.subr.mxu0 0.0
        %1523 = vmatpush1.msra.mxu0 0.0
        %1524 = vmatprep.subr.mxu0 0.0
        %1525 = vmatpush1.msra.mxu0 0.0
        %1526 = vmatprep.subr.mxu0 0.0
        %1527 = vmatpush1.msra.mxu0 0.0
        %1528 = vmatprep.subr.mxu0 0.0
        %1529 = vmatpush1.msra.mxu0 0.0
        %1530 = vmatprep.subr.mxu0 0.0
        %1531 = vmatpush1.msra.mxu0 0.0
        %1532 = vmatprep.subr.mxu0 0.0
        %1533 = vmatpush1.msra.mxu0 0.0
        %1534 = vmatprep.subr.mxu0 0.0
        %1535 = vmatpush1.msra.mxu0 0.0
        %1536 = vmatprep.subr.mxu0 0.0
        %1537 = vmatpush1.msra.mxu0 0.0
        %1538 = vmatprep.subr.mxu0 0.0
        %1539 = vmatpush1.msra.mxu0 0.0
        %1540 = vmatprep.subr.mxu0 0.0
        %1541 = vmatpush1.msra.mxu0 0.0
        %1542 = vmatprep.subr.mxu0 0.0
        %1543 = vmatpush1.msra.mxu0 0.0
        %1544 = vmatprep.subr.mxu0 0.0
        %1545 = vmatpush1.msra.mxu0 0.0
        %1546 = vmatprep.subr.mxu0 0.0
        %1547 = vmatpush1.msra.mxu0 0.0
        %1548 = vmatprep.subr.mxu0 0.0
        %1549 = vmatpush1.msra.mxu0 0.0
        %1550 = vmatprep.subr.mxu0 0.0
        %1551 = vmatpush1.msra.mxu0 0.0
        %1552 = vmatprep.subr.mxu0 0.0
        %1553 = vmatpush1.msra.mxu0 0.0
        %1554 = vmatprep.subr.mxu0 0.0
        %1555 = vmatpush1.msra.mxu0 0.0
        %1556 = vmatprep.subr.mxu0 0.0
        %1557 = vmatpush1.msra.mxu0 0.0
        %1558 = vmatprep.subr.mxu0 0.0
        %1559 = vmatpush1.msra.mxu0 0.0
        %1560 = vmatprep.subr.mxu0 0.0
        %1561 = vmatpush1.msra.mxu0 0.0
        %1562 = vmatprep.subr.mxu0 0.0
        %1563 = vmatpush1.msra.mxu0 0.0
        %1564 = vmatprep.subr.mxu0 0.0
        %1565 = vmatpush1.msra.mxu0 0.0
        %1566 = vmatprep.subr.mxu0 0.0
        %1567 = vmatpush1.msra.mxu0 0.0
        %1568 = vmatprep.mubr.f32.mxu0 0.0
        %1569 = vmatmul.mubr.f32.gmra.mrb[0].mxu0 %v1502
        %v1570 = vpop.f32.mrb[0].mxu0
        %v1571 = vadd.f32 0.0, %v1570
        %v1572 = vpop.f32.mrb[0].mxu0
        %1573 = vdwg.mxu0
        %v1574 = vadd.f32 %v1497, %v1571
        %1575 = vst.msk [vmem:[%s1490] sm:$0xff] %vm821, %v1574
        %1576 = vst.msk [vmem:[%s1465] sm:$0xff] %vm921, %v1470
        %1577 = vrot.lane.b32.xlu0 %v820, 112
        %v1578 = vpop.permute.xlu0 %1577
        %1579 = vrot.lane.b32.xlu0 %v733, 112
        %v1580 = vpop.permute.xlu0 %1579
        %v1581 = vsel %vm821, %v1578, 0
        %v1583 = vsel %vm821, %v1580, 0
        %1585 = vmatprep.subr.mxu0 0.0
        %1586 = vmatpush1.xpose.msra.mxu0 %v1583
        %1587 = vmatprep.subr.mxu0 0.0
        %1588 = vmatpush1.xpose.msra.mxu0 0.0
        %1589 = vmatprep.subr.mxu0 0.0
        %1590 = vmatpush1.xpose.msra.mxu0 0.0
        %1591 = vmatprep.subr.mxu0 0.0
        %1592 = vmatpush1.xpose.msra.mxu0 0.0
        %1593 = vmatprep.subr.mxu0 0.0
        %1594 = vmatpush1.xpose.msra.mxu0 0.0
        %1595 = vmatprep.subr.mxu0 0.0
        %1596 = vmatpush1.xpose.msra.mxu0 0.0
        %1597 = vmatprep.subr.mxu0 0.0
        %1598 = vmatpush1.xpose.msra.mxu0 0.0
        %1599 = vmatprep.subr.mxu0 0.0
        %1600 = vmatpush1.xpose.msra.mxu0 0.0
        %1601 = vmatprep.subr.mxu0 0.0
        %1602 = vmatpush1.xpose.msra.mxu0 0.0
        %1603 = vmatprep.subr.mxu0 0.0
        %1604 = vmatpush1.xpose.msra.mxu0 0.0
        %1605 = vmatprep.subr.mxu0 0.0
        %1606 = vmatpush1.xpose.msra.mxu0 0.0
        %1607 = vmatprep.subr.mxu0 0.0
        %1608 = vmatpush1.xpose.msra.mxu0 0.0
        %1609 = vmatprep.subr.mxu0 0.0
        %1610 = vmatpush1.xpose.msra.mxu0 0.0
        %1611 = vmatprep.subr.mxu0 0.0
        %1612 = vmatpush1.xpose.msra.mxu0 0.0
        %1613 = vmatprep.subr.mxu0 0.0
        %1614 = vmatpush1.xpose.msra.mxu0 0.0
        %1615 = vmatprep.subr.mxu0 0.0
        %1616 = vmatpush1.xpose.msra.mxu0 0.0
        %1617 = vmatprep.subr.mxu0 0.0
        %1618 = vmatpush1.xpose.msra.mxu0 0.0
        %1619 = vmatprep.subr.mxu0 0.0
        %1620 = vmatpush1.xpose.msra.mxu0 0.0
        %1621 = vmatprep.subr.mxu0 0.0
        %1622 = vmatpush1.xpose.msra.mxu0 0.0
        %1623 = vmatprep.subr.mxu0 0.0
        %1624 = vmatpush1.xpose.msra.mxu0 0.0
        %1625 = vmatprep.subr.mxu0 0.0
        %1626 = vmatpush1.xpose.msra.mxu0 0.0
        %1627 = vmatprep.subr.mxu0 0.0
        %1628 = vmatpush1.xpose.msra.mxu0 0.0
        %1629 = vmatprep.subr.mxu0 0.0
        %1630 = vmatpush1.xpose.msra.mxu0 0.0
        %1631 = vmatprep.subr.mxu0 0.0
        %1632 = vmatpush1.xpose.msra.mxu0 0.0
        %1633 = vmatprep.subr.mxu0 0.0
        %1634 = vmatpush1.xpose.msra.mxu0 0.0
        %1635 = vmatprep.subr.mxu0 0.0
        %1636 = vmatpush1.xpose.msra.mxu0 0.0
        %1637 = vmatprep.subr.mxu0 0.0
        %1638 = vmatpush1.xpose.msra.mxu0 0.0
        %1639 = vmatprep.subr.mxu0 0.0
        %1640 = vmatpush1.xpose.msra.mxu0 0.0
        %1641 = vmatprep.subr.mxu0 0.0
        %1642 = vmatpush1.xpose.msra.mxu0 0.0
        %1643 = vmatprep.subr.mxu0 0.0
        %1644 = vmatpush1.xpose.msra.mxu0 0.0
        %1645 = vmatprep.subr.mxu0 0.0
        %1646 = vmatpush1.xpose.msra.mxu0 0.0
        %1647 = vmatprep.subr.mxu0 0.0
        %1648 = vmatpush1.xpose.msra.mxu0 0.0
        %1649 = vmatprep.mubr.f32.mxu0 0.0
        %1650 = vmatmul.mubr.f32.gmra.mrb[0].mxu0 %v1581
        %v1651 = vpop.f32.mrb[0].mxu0
        %v1652 = vadd.f32 0.0, %v1651
        %v1653 = vpop.f32.mrb[0].mxu0
        %1654 = vdwg.mxu0
        %s1655 = scalar_lea.vmem [#allocation3], 32
        %v1656 = vld [vmem:[%s1655] sm:$0xff]
        %v1657 = vsel %vm899, %v1652, -inf
        %1658 = vmax.xlane.f32.xlu0 %v1657
        %v1659 = vpop.xlane.xlu0 %1658
        %v1660 = vmax.f32 %v1656, %v1659
        %v1661 = vsub.f32 %v1656, %v1660
        %v1662 = vmul.f32 %v1661, 1.442695
        %v1663 = vpow.pop %v1662
        %1665 = vset.pattern.permute.xlu0 0
        %1666 = vperm.xlu0 %1665, %v1660
        %v1667 = vpop.permute.xlu0 %1666
        %v1669 = vsub.f32 %v1652, %v1667
        %v1670 = vmul.f32 %v1669, 1.442695
        %v1671 = vpow.pop %v1670
        %s1672 = scalar_lea.vmem [#allocation4], 32
        %v1673 = vld [vmem:[%s1672] sm:$0xff]
        %v1674 = vmul.f32 %v1663, %v1673
        %v1675 = vsel %vm899, %v1671, 0.0
        %1676 = vadd.xlane.f32.xlu0 %v1675
        %v1677 = vpop.xlane.xlu0 %1676
        %v1678 = vadd.f32 %v1674, %v1677
        %1679 = vst.msk [vmem:[%s1672] sm:$0xff] %vm921, %v1678
        %s1680 = scalar_lea.vmem [#allocation5], 32
        %v1681 = vld [vmem:[%s1680] sm:$0xff]
        %1683 = vset.pattern.permute.xlu0 0
        %1684 = vperm.xlu0 %1683, %v1663
        %v1685 = vpop.permute.xlu0 %1684
        %v1687 = vmul.f32 %v1685, %v1681
        %1688 = vrot.lane.b32.xlu0 %v817, 112
        %v1689 = vpop.permute.xlu0 %1688
        %v1692 = vsel %vm899, %v1671, 0
        %1694 = vmatprep.subr.mxu0 0.0
        %1695 = vmatpush1.msra.mxu0 %v1689
        %1696 = vmatprep.subr.mxu0 0.0
        %1697 = vmatpush1.msra.mxu0 0.0
        %1698 = vmatprep.subr.mxu0 0.0
        %1699 = vmatpush1.msra.mxu0 0.0
        %1700 = vmatprep.subr.mxu0 0.0
        %1701 = vmatpush1.msra.mxu0 0.0
        %1702 = vmatprep.subr.mxu0 0.0
        %1703 = vmatpush1.msra.mxu0 0.0
        %1704 = vmatprep.subr.mxu0 0.0
        %1705 = vmatpush1.msra.mxu0 0.0
        %1706 = vmatprep.subr.mxu0 0.0
        %1707 = vmatpush1.msra.mxu0 0.0
        %1708 = vmatprep.subr.mxu0 0.0
        %1709 = vmatpush1.msra.mxu0 0.0
        %1710 = vmatprep.subr.mxu0 0.0
        %1711 = vmatpush1.msra.mxu0 0.0
        %1712 = vmatprep.subr.mxu0 0.0
        %1713 = vmatpush1.msra.mxu0 0.0
        %1714 = vmatprep.subr.mxu0 0.0
        %1715 = vmatpush1.msra.mxu0 0.0
        %1716 = vmatprep.subr.mxu0 0.0
        %1717 = vmatpush1.msra.mxu0 0.0
        %1718 = vmatprep.subr.mxu0 0.0
        %1719 = vmatpush1.msra.mxu0 0.0
        %1720 = vmatprep.subr.mxu0 0.0
        %1721 = vmatpush1.msra.mxu0 0.0
        %1722 = vmatprep.subr.mxu0 0.0
        %1723 = vmatpush1.msra.mxu0 0.0
        %1724 = vmatprep.subr.mxu0 0.0
        %1725 = vmatpush1.msra.mxu0 0.0
        %1726 = vmatprep.subr.mxu0 0.0
        %1727 = vmatpush1.msra.mxu0 0.0
        %1728 = vmatprep.subr.mxu0 0.0
        %1729 = vmatpush1.msra.mxu0 0.0
        %1730 = vmatprep.subr.mxu0 0.0
        %1731 = vmatpush1.msra.mxu0 0.0
        %1732 = vmatprep.subr.mxu0 0.0
        %1733 = vmatpush1.msra.mxu0 0.0
        %1734 = vmatprep.subr.mxu0 0.0
        %1735 = vmatpush1.msra.mxu0 0.0
        %1736 = vmatprep.subr.mxu0 0.0
        %1737 = vmatpush1.msra.mxu0 0.0
        %1738 = vmatprep.subr.mxu0 0.0
        %1739 = vmatpush1.msra.mxu0 0.0
        %1740 = vmatprep.subr.mxu0 0.0
        %1741 = vmatpush1.msra.mxu0 0.0
        %1742 = vmatprep.subr.mxu0 0.0
        %1743 = vmatpush1.msra.mxu0 0.0
        %1744 = vmatprep.subr.mxu0 0.0
        %1745 = vmatpush1.msra.mxu0 0.0
        %1746 = vmatprep.subr.mxu0 0.0
        %1747 = vmatpush1.msra.mxu0 0.0
        %1748 = vmatprep.subr.mxu0 0.0
        %1749 = vmatpush1.msra.mxu0 0.0
        %1750 = vmatprep.subr.mxu0 0.0
        %1751 = vmatpush1.msra.mxu0 0.0
        %1752 = vmatprep.subr.mxu0 0.0
        %1753 = vmatpush1.msra.mxu0 0.0
        %1754 = vmatprep.subr.mxu0 0.0
        %1755 = vmatpush1.msra.mxu0 0.0
        %1756 = vmatprep.subr.mxu0 0.0
        %1757 = vmatpush1.msra.mxu0 0.0
        %1758 = vmatprep.mubr.f32.mxu0 0.0
        %1759 = vmatmul.mubr.f32.gmra.mrb[0].mxu0 %v1692
        %v1760 = vpop.f32.mrb[0].mxu0
        %v1761 = vadd.f32 0.0, %v1760
        %v1762 = vpop.f32.mrb[0].mxu0
        %1763 = vdwg.mxu0
        %v1764 = vadd.f32 %v1687, %v1761
        %1765 = vst.msk [vmem:[%s1680] sm:$0xff] %vm821, %v1764
        %1766 = vst.msk [vmem:[%s1655] sm:$0xff] %vm921, %v1660
        %1767 = vrot.lane.b32.xlu0 %v820, 108
        %v1768 = vpop.permute.xlu0 %1767
        %1769 = vrot.lane.b32.xlu0 %v733, 108
        %v1770 = vpop.permute.xlu0 %1769
        %v1771 = vsel %vm821, %v1768, 0
        %v1773 = vsel %vm821, %v1770, 0
        %1775 = vmatprep.subr.mxu0 0.0
        %1776 = vmatpush1.xpose.msra.mxu0 %v1773
        %1777 = vmatprep.subr.mxu0 0.0
        %1778 = vmatpush1.xpose.msra.mxu0 0.0
        %1779 = vmatprep.subr.mxu0 0.0
        %1780 = vmatpush1.xpose.msra.mxu0 0.0
        %1781 = vmatprep.subr.mxu0 0.0
        %1782 = vmatpush1.xpose.msra.mxu0 0.0
        %1783 = vmatprep.subr.mxu0 0.0
        %1784 = vmatpush1.xpose.msra.mxu0 0.0
        %1785 = vmatprep.subr.mxu0 0.0
        %1786 = vmatpush1.xpose.msra.mxu0 0.0
        %1787 = vmatprep.subr.mxu0 0.0
        %1788 = vmatpush1.xpose.msra.mxu0 0.0
        %1789 = vmatprep.subr.mxu0 0.0
        %1790 = vmatpush1.xpose.msra.mxu0 0.0
        %1791 = vmatprep.subr.mxu0 0.0
        %1792 = vmatpush1.xpose.msra.mxu0 0.0
        %1793 = vmatprep.subr.mxu0 0.0
        %1794 = vmatpush1.xpose.msra.mxu0 0.0
        %1795 = vmatprep.subr.mxu0 0.0
        %1796 = vmatpush1.xpose.msra.mxu0 0.0
        %1797 = vmatprep.subr.mxu0 0.0
        %1798 = vmatpush1.xpose.msra.mxu0 0.0
        %1799 = vmatprep.subr.mxu0 0.0
        %1800 = vmatpush1.xpose.msra.mxu0 0.0
        %1801 = vmatprep.subr.mxu0 0.0
        %1802 = vmatpush1.xpose.msra.mxu0 0.0
        %1803 = vmatprep.subr.mxu0 0.0
        %1804 = vmatpush1.xpose.msra.mxu0 0.0
        %1805 = vmatprep.subr.mxu0 0.0
        %1806 = vmatpush1.xpose.msra.mxu0 0.0
        %1807 = vmatprep.subr.mxu0 0.0
        %1808 = vmatpush1.xpose.msra.mxu0 0.0
        %1809 = vmatprep.subr.mxu0 0.0
        %1810 = vmatpush1.xpose.msra.mxu0 0.0
        %1811 = vmatprep.subr.mxu0 0.0
        %1812 = vmatpush1.xpose.msra.mxu0 0.0
        %1813 = vmatprep.subr.mxu0 0.0
        %1814 = vmatpush1.xpose.msra.mxu0 0.0
        %1815 = vmatprep.subr.mxu0 0.0
        %1816 = vmatpush1.xpose.msra.mxu0 0.0
        %1817 = vmatprep.subr.mxu0 0.0
        %1818 = vmatpush1.xpose.msra.mxu0 0.0
        %1819 = vmatprep.subr.mxu0 0.0
        %1820 = vmatpush1.xpose.msra.mxu0 0.0
        %1821 = vmatprep.subr.mxu0 0.0
        %1822 = vmatpush1.xpose.msra.mxu0 0.0
        %1823 = vmatprep.subr.mxu0 0.0
        %1824 = vmatpush1.xpose.msra.mxu0 0.0
        %1825 = vmatprep.subr.mxu0 0.0
        %1826 = vmatpush1.xpose.msra.mxu0 0.0
        %1827 = vmatprep.subr.mxu0 0.0
        %1828 = vmatpush1.xpose.msra.mxu0 0.0
        %1829 = vmatprep.subr.mxu0 0.0
        %1830 = vmatpush1.xpose.msra.mxu0 0.0
        %1831 = vmatprep.subr.mxu0 0.0
        %1832 = vmatpush1.xpose.msra.mxu0 0.0
        %1833 = vmatprep.subr.mxu0 0.0
        %1834 = vmatpush1.xpose.msra.mxu0 0.0
        %1835 = vmatprep.subr.mxu0 0.0
        %1836 = vmatpush1.xpose.msra.mxu0 0.0
        %1837 = vmatprep.subr.mxu0 0.0
        %1838 = vmatpush1.xpose.msra.mxu0 0.0
        %1839 = vmatprep.mubr.f32.mxu0 0.0
        %1840 = vmatmul.mubr.f32.gmra.mrb[0].mxu0 %v1771
        %v1841 = vpop.f32.mrb[0].mxu0
        %v1842 = vadd.f32 0.0, %v1841
        %v1843 = vpop.f32.mrb[0].mxu0
        %1844 = vdwg.mxu0
        %s1845 = scalar_lea.vmem [#allocation3], 40
        %v1846 = vld [vmem:[%s1845] sm:$0xff]
        %v1847 = vsel %vm899, %v1842, -inf
        %1848 = vmax.xlane.f32.xlu0 %v1847
        %v1849 = vpop.xlane.xlu0 %1848
        %v1850 = vmax.f32 %v1846, %v1849
        %v1851 = vsub.f32 %v1846, %v1850
        %v1852 = vmul.f32 %v1851, 1.442695
        %v1853 = vpow.pop %v1852
        %1855 = vset.pattern.permute.xlu0 0
        %1856 = vperm.xlu0 %1855, %v1850
        %v1857 = vpop.permute.xlu0 %1856
        %v1859 = vsub.f32 %v1842, %v1857
        %v1860 = vmul.f32 %v1859, 1.442695
        %v1861 = vpow.pop %v1860
        %s1862 = scalar_lea.vmem [#allocation4], 40
        %v1863 = vld [vmem:[%s1862] sm:$0xff]
        %v1864 = vmul.f32 %v1853, %v1863
        %v1865 = vsel %vm899, %v1861, 0.0
        %1866 = vadd.xlane.f32.xlu0 %v1865
        %v1867 = vpop.xlane.xlu0 %1866
        %v1868 = vadd.f32 %v1864, %v1867
        %1869 = vst.msk [vmem:[%s1862] sm:$0xff] %vm921, %v1868
        %s1870 = scalar_lea.vmem [#allocation5], 40
        %v1871 = vld [vmem:[%s1870] sm:$0xff]
        %1873 = vset.pattern.permute.xlu0 0
        %1874 = vperm.xlu0 %1873, %v1853
        %v1875 = vpop.permute.xlu0 %1874
        %v1877 = vmul.f32 %v1875, %v1871
        %1878 = vrot.lane.b32.xlu0 %v817, 108
        %v1879 = vpop.permute.xlu0 %1878
        %v1882 = vsel %vm899, %v1861, 0
        %1884 = vmatprep.subr.mxu0 0.0
        %1885 = vmatpush1.msra.mxu0 %v1879
        %1886 = vmatprep.subr.mxu0 0.0
        %1887 = vmatpush1.msra.mxu0 0.0
        %1888 = vmatprep.subr.mxu0 0.0
        %1889 = vmatpush1.msra.mxu0 0.0
        %1890 = vmatprep.subr.mxu0 0.0
        %1891 = vmatpush1.msra.mxu0 0.0
        %1892 = vmatprep.subr.mxu0 0.0
        %1893 = vmatpush1.msra.mxu0 0.0
        %1894 = vmatprep.subr.mxu0 0.0
        %1895 = vmatpush1.msra.mxu0 0.0
        %1896 = vmatprep.subr.mxu0 0.0
        %1897 = vmatpush1.msra.mxu0 0.0
        %1898 = vmatprep.subr.mxu0 0.0
        %1899 = vmatpush1.msra.mxu0 0.0
        %1900 = vmatprep.subr.mxu0 0.0
        %1901 = vmatpush1.msra.mxu0 0.0
        %1902 = vmatprep.subr.mxu0 0.0
        %1903 = vmatpush1.msra.mxu0 0.0
        %1904 = vmatprep.subr.mxu0 0.0
        %1905 = vmatpush1.msra.mxu0 0.0
        %1906 = vmatprep.subr.mxu0 0.0
        %1907 = vmatpush1.msra.mxu0 0.0
        %1908 = vmatprep.subr.mxu0 0.0
        %1909 = vmatpush1.msra.mxu0 0.0
        %1910 = vmatprep.subr.mxu0 0.0
        %1911 = vmatpush1.msra.mxu0 0.0
        %1912 = vmatprep.subr.mxu0 0.0
        %1913 = vmatpush1.msra.mxu0 0.0
        %1914 = vmatprep.subr.mxu0 0.0
        %1915 = vmatpush1.msra.mxu0 0.0
        %1916 = vmatprep.subr.mxu0 0.0
        %1917 = vmatpush1.msra.mxu0 0.0
        %1918 = vmatprep.subr.mxu0 0.0
        %1919 = vmatpush1.msra.mxu0 0.0
        %1920 = vmatprep.subr.mxu0 0.0
        %1921 = vmatpush1.msra.mxu0 0.0
        %1922 = vmatprep.subr.mxu0 0.0
        %1923 = vmatpush1.msra.mxu0 0.0
        %1924 = vmatprep.subr.mxu0 0.0
        %1925 = vmatpush1.msra.mxu0 0.0
        %1926 = vmatprep.subr.mxu0 0.0
        %1927 = vmatpush1.msra.mxu0 0.0
        %1928 = vmatprep.subr.mxu0 0.0
        %1929 = vmatpush1.msra.mxu0 0.0
        %1930 = vmatprep.subr.mxu0 0.0
        %1931 = vmatpush1.msra.mxu0 0.0
        %1932 = vmatprep.subr.mxu0 0.0
        %1933 = vmatpush1.msra.mxu0 0.0
        %1934 = vmatprep.subr.mxu0 0.0
        %1935 = vmatpush1.msra.mxu0 0.0
        %1936 = vmatprep.subr.mxu0 0.0
        %1937 = vmatpush1.msra.mxu0 0.0
        %1938 = vmatprep.subr.mxu0 0.0
        %1939 = vmatpush1.msra.mxu0 0.0
        %1940 = vmatprep.subr.mxu0 0.0
        %1941 = vmatpush1.msra.mxu0 0.0
        %1942 = vmatprep.subr.mxu0 0.0
        %1943 = vmatpush1.msra.mxu0 0.0
        %1944 = vmatprep.subr.mxu0 0.0
        %1945 = vmatpush1.msra.mxu0 0.0
        %1946 = vmatprep.subr.mxu0 0.0
        %1947 = vmatpush1.msra.mxu0 0.0
        %1948 = vmatprep.mubr.f32.mxu0 0.0
        %1949 = vmatmul.mubr.f32.gmra.mrb[0].mxu0 %v1882
        %v1950 = vpop.f32.mrb[0].mxu0
        %v1951 = vadd.f32 0.0, %v1950
        %v1952 = vpop.f32.mrb[0].mxu0
        %1953 = vdwg.mxu0
        %v1954 = vadd.f32 %v1877, %v1951
        %1955 = vst.msk [vmem:[%s1870] sm:$0xff] %vm821, %v1954
        %1956 = vst.msk [vmem:[%s1845] sm:$0xff] %vm921, %v1850
        %1957 = vrot.lane.b32.xlu0 %v820, 104
        %v1958 = vpop.permute.xlu0 %1957
        %1959 = vrot.lane.b32.xlu0 %v733, 104
        %v1960 = vpop.permute.xlu0 %1959
        %v1961 = vsel %vm821, %v1958, 0
        %v1963 = vsel %vm821, %v1960, 0
        %1965 = vmatprep.subr.mxu0 0.0
        %1966 = vmatpush1.xpose.msra.mxu0 %v1963
        %1967 = vmatprep.subr.mxu0 0.0
        %1968 = vmatpush1.xpose.msra.mxu0 0.0
        %1969 = vmatprep.subr.mxu0 0.0
        %1970 = vmatpush1.xpose.msra.mxu0 0.0
        %1971 = vmatprep.subr.mxu0 0.0
        %1972 = vmatpush1.xpose.msra.mxu0 0.0
        %1973 = vmatprep.subr.mxu0 0.0
        %1974 = vmatpush1.xpose.msra.mxu0 0.0
        %1975 = vmatprep.subr.mxu0 0.0
        %1976 = vmatpush1.xpose.msra.mxu0 0.0
        %1977 = vmatprep.subr.mxu0 0.0
        %1978 = vmatpush1.xpose.msra.mxu0 0.0
        %1979 = vmatprep.subr.mxu0 0.0
        %1980 = vmatpush1.xpose.msra.mxu0 0.0
        %1981 = vmatprep.subr.mxu0 0.0
        %1982 = vmatpush1.xpose.msra.mxu0 0.0
        %1983 = vmatprep.subr.mxu0 0.0
        %1984 = vmatpush1.xpose.msra.mxu0 0.0
        %1985 = vmatprep.subr.mxu0 0.0
        %1986 = vmatpush1.xpose.msra.mxu0 0.0
        %1987 = vmatprep.subr.mxu0 0.0
        %1988 = vmatpush1.xpose.msra.mxu0 0.0
        %1989 = vmatprep.subr.mxu0 0.0
        %1990 = vmatpush1.xpose.msra.mxu0 0.0
        %1991 = vmatprep.subr.mxu0 0.0
        %1992 = vmatpush1.xpose.msra.mxu0 0.0
        %1993 = vmatprep.subr.mxu0 0.0
        %1994 = vmatpush1.xpose.msra.mxu0 0.0
        %1995 = vmatprep.subr.mxu0 0.0
        %1996 = vmatpush1.xpose.msra.mxu0 0.0
        %1997 = vmatprep.subr.mxu0 0.0
        %1998 = vmatpush1.xpose.msra.mxu0 0.0
        %1999 = vmatprep.subr.mxu0 0.0
        %2000 = vmatpush1.xpose.msra.mxu0 0.0
        %2001 = vmatprep.subr.mxu0 0.0
        %2002 = vmatpush1.xpose.msra.mxu0 0.0
        %2003 = vmatprep.subr.mxu0 0.0
        %2004 = vmatpush1.xpose.msra.mxu0 0.0
        %2005 = vmatprep.subr.mxu0 0.0
        %2006 = vmatpush1.xpose.msra.mxu0 0.0
        %2007 = vmatprep.subr.mxu0 0.0
        %2008 = vmatpush1.xpose.msra.mxu0 0.0
        %2009 = vmatprep.subr.mxu0 0.0
        %2010 = vmatpush1.xpose.msra.mxu0 0.0
        %2011 = vmatprep.subr.mxu0 0.0
        %2012 = vmatpush1.xpose.msra.mxu0 0.0
        %2013 = vmatprep.subr.mxu0 0.0
        %2014 = vmatpush1.xpose.msra.mxu0 0.0
        %2015 = vmatprep.subr.mxu0 0.0
        %2016 = vmatpush1.xpose.msra.mxu0 0.0
        %2017 = vmatprep.subr.mxu0 0.0
        %2018 = vmatpush1.xpose.msra.mxu0 0.0
        %2019 = vmatprep.subr.mxu0 0.0
        %2020 = vmatpush1.xpose.msra.mxu0 0.0
        %2021 = vmatprep.subr.mxu0 0.0
        %2022 = vmatpush1.xpose.msra.mxu0 0.0
        %2023 = vmatprep.subr.mxu0 0.0
        %2024 = vmatpush1.xpose.msra.mxu0 0.0
        %2025 = vmatprep.subr.mxu0 0.0
        %2026 = vmatpush1.xpose.msra.mxu0 0.0
        %2027 = vmatprep.subr.mxu0 0.0
        %2028 = vmatpush1.xpose.msra.mxu0 0.0
        %2029 = vmatprep.mubr.f32.mxu0 0.0
        %2030 = vmatmul.mubr.f32.gmra.mrb[0].mxu0 %v1961
        %v2031 = vpop.f32.mrb[0].mxu0
        %v2032 = vadd.f32 0.0, %v2031
        %v2033 = vpop.f32.mrb[0].mxu0
        %2034 = vdwg.mxu0
        %s2035 = scalar_lea.vmem [#allocation3], 48
        %v2036 = vld [vmem:[%s2035] sm:$0xff]
        %v2037 = vsel %vm899, %v2032, -inf
        %2038 = vmax.xlane.f32.xlu0 %v2037
        %v2039 = vpop.xlane.xlu0 %2038
        %v2040 = vmax.f32 %v2036, %v2039
        %v2041 = vsub.f32 %v2036, %v2040
        %v2042 = vmul.f32 %v2041, 1.442695
        %v2043 = vpow.pop %v2042
        %2045 = vset.pattern.permute.xlu0 0
        %2046 = vperm.xlu0 %2045, %v2040
        %v2047 = vpop.permute.xlu0 %2046
        %v2049 = vsub.f32 %v2032, %v2047
        %v2050 = vmul.f32 %v2049, 1.442695
        %v2051 = vpow.pop %v2050
        %s2052 = scalar_lea.vmem [#allocation4], 48
        %v2053 = vld [vmem:[%s2052] sm:$0xff]
        %v2054 = vmul.f32 %v2043, %v2053
        %v2055 = vsel %vm899, %v2051, 0.0
        %2056 = vadd.xlane.f32.xlu0 %v2055
        %v2057 = vpop.xlane.xlu0 %2056
        %v2058 = vadd.f32 %v2054, %v2057
        %2059 = vst.msk [vmem:[%s2052] sm:$0xff] %vm921, %v2058
        %s2060 = scalar_lea.vmem [#allocation5], 48
        %v2061 = vld [vmem:[%s2060] sm:$0xff]
        %2063 = vset.pattern.permute.xlu0 0
        %2064 = vperm.xlu0 %2063, %v2043
        %v2065 = vpop.permute.xlu0 %2064
        %v2067 = vmul.f32 %v2065, %v2061
        %2068 = vrot.lane.b32.xlu0 %v817, 104
        %v2069 = vpop.permute.xlu0 %2068
        %v2072 = vsel %vm899, %v2051, 0
        %2074 = vmatprep.subr.mxu0 0.0
        %2075 = vmatpush1.msra.mxu0 %v2069
        %2076 = vmatprep.subr.mxu0 0.0
        %2077 = vmatpush1.msra.mxu0 0.0
        %2078 = vmatprep.subr.mxu0 0.0
        %2079 = vmatpush1.msra.mxu0 0.0
        %2080 = vmatprep.subr.mxu0 0.0
        %2081 = vmatpush1.msra.mxu0 0.0
        %2082 = vmatprep.subr.mxu0 0.0
        %2083 = vmatpush1.msra.mxu0 0.0
        %2084 = vmatprep.subr.mxu0 0.0
        %2085 = vmatpush1.msra.mxu0 0.0
        %2086 = vmatprep.subr.mxu0 0.0
        %2087 = vmatpush1.msra.mxu0 0.0
        %2088 = vmatprep.subr.mxu0 0.0
        %2089 = vmatpush1.msra.mxu0 0.0
        %2090 = vmatprep.subr.mxu0 0.0
        %2091 = vmatpush1.msra.mxu0 0.0
        %2092 = vmatprep.subr.mxu0 0.0
        %2093 = vmatpush1.msra.mxu0 0.0
        %2094 = vmatprep.subr.mxu0 0.0
        %2095 = vmatpush1.msra.mxu0 0.0
        %2096 = vmatprep.subr.mxu0 0.0
        %2097 = vmatpush1.msra.mxu0 0.0
        %2098 = vmatprep.subr.mxu0 0.0
        %2099 = vmatpush1.msra.mxu0 0.0
        %2100 = vmatprep.subr.mxu0 0.0
        %2101 = vmatpush1.msra.mxu0 0.0
        %2102 = vmatprep.subr.mxu0 0.0
        %2103 = vmatpush1.msra.mxu0 0.0
        %2104 = vmatprep.subr.mxu0 0.0
        %2105 = vmatpush1.msra.mxu0 0.0
        %2106 = vmatprep.subr.mxu0 0.0
        %2107 = vmatpush1.msra.mxu0 0.0
        %2108 = vmatprep.subr.mxu0 0.0
        %2109 = vmatpush1.msra.mxu0 0.0
        %2110 = vmatprep.subr.mxu0 0.0
        %2111 = vmatpush1.msra.mxu0 0.0
        %2112 = vmatprep.subr.mxu0 0.0
        %2113 = vmatpush1.msra.mxu0 0.0
        %2114 = vmatprep.subr.mxu0 0.0
        %2115 = vmatpush1.msra.mxu0 0.0
        %2116 = vmatprep.subr.mxu0 0.0
        %2117 = vmatpush1.msra.mxu0 0.0
        %2118 = vmatprep.subr.mxu0 0.0
        %2119 = vmatpush1.msra.mxu0 0.0
        %2120 = vmatprep.subr.mxu0 0.0
        %2121 = vmatpush1.msra.mxu0 0.0
        %2122 = vmatprep.subr.mxu0 0.0
        %2123 = vmatpush1.msra.mxu0 0.0
        %2124 = vmatprep.subr.mxu0 0.0
        %2125 = vmatpush1.msra.mxu0 0.0
        %2126 = vmatprep.subr.mxu0 0.0
        %2127 = vmatpush1.msra.mxu0 0.0
        %2128 = vmatprep.subr.mxu0 0.0
        %2129 = vmatpush1.msra.mxu0 0.0
        %2130 = vmatprep.subr.mxu0 0.0
        %2131 = vmatpush1.msra.mxu0 0.0
        %2132 = vmatprep.subr.mxu0 0.0
        %2133 = vmatpush1.msra.mxu0 0.0
        %2134 = vmatprep.subr.mxu0 0.0
        %2135 = vmatpush1.msra.mxu0 0.0
        %2136 = vmatprep.subr.mxu0 0.0
        %2137 = vmatpush1.msra.mxu0 0.0
        %2138 = vmatprep.mubr.f32.mxu0 0.0
        %2139 = vmatmul.mubr.f32.gmra.mrb[0].mxu0 %v2072
        %v2140 = vpop.f32.mrb[0].mxu0
        %v2141 = vadd.f32 0.0, %v2140
        %v2142 = vpop.f32.mrb[0].mxu0
        %2143 = vdwg.mxu0
        %v2144 = vadd.f32 %v2067, %v2141
        %2145 = vst.msk [vmem:[%s2060] sm:$0xff] %vm821, %v2144
        %2146 = vst.msk [vmem:[%s2035] sm:$0xff] %vm921, %v2040
        %2147 = vrot.lane.b32.xlu0 %v820, 100
        %v2148 = vpop.permute.xlu0 %2147
        %2149 = vrot.lane.b32.xlu0 %v733, 100
        %v2150 = vpop.permute.xlu0 %2149
        %v2151 = vsel %vm821, %v2148, 0
        %v2153 = vsel %vm821, %v2150, 0
        %2155 = vmatprep.subr.mxu0 0.0
        %2156 = vmatpush1.xpose.msra.mxu0 %v2153
        %2157 = vmatprep.subr.mxu0 0.0
        %2158 = vmatpush1.xpose.msra.mxu0 0.0
        %2159 = vmatprep.subr.mxu0 0.0
        %2160 = vmatpush1.xpose.msra.mxu0 0.0
        %2161 = vmatprep.subr.mxu0 0.0
        %2162 = vmatpush1.xpose.msra.mxu0 0.0
        %2163 = vmatprep.subr.mxu0 0.0
        %2164 = vmatpush1.xpose.msra.mxu0 0.0
        %2165 = vmatprep.subr.mxu0 0.0
        %2166 = vmatpush1.xpose.msra.mxu0 0.0
        %2167 = vmatprep.subr.mxu0 0.0
        %2168 = vmatpush1.xpose.msra.mxu0 0.0
        %2169 = vmatprep.subr.mxu0 0.0
        %2170 = vmatpush1.xpose.msra.mxu0 0.0
        %2171 = vmatprep.subr.mxu0 0.0
        %2172 = vmatpush1.xpose.msra.mxu0 0.0
        %2173 = vmatprep.subr.mxu0 0.0
        %2174 = vmatpush1.xpose.msra.mxu0 0.0
        %2175 = vmatprep.subr.mxu0 0.0
        %2176 = vmatpush1.xpose.msra.mxu0 0.0
        %2177 = vmatprep.subr.mxu0 0.0
        %2178 = vmatpush1.xpose.msra.mxu0 0.0
        %2179 = vmatprep.subr.mxu0 0.0
        %2180 = vmatpush1.xpose.msra.mxu0 0.0
        %2181 = vmatprep.subr.mxu0 0.0
        %2182 = vmatpush1.xpose.msra.mxu0 0.0
        %2183 = vmatprep.subr.mxu0 0.0
        %2184 = vmatpush1.xpose.msra.mxu0 0.0
        %2185 = vmatprep.subr.mxu0 0.0
        %2186 = vmatpush1.xpose.msra.mxu0 0.0
        %2187 = vmatprep.subr.mxu0 0.0
        %2188 = vmatpush1.xpose.msra.mxu0 0.0
        %2189 = vmatprep.subr.mxu0 0.0
        %2190 = vmatpush1.xpose.msra.mxu0 0.0
        %2191 = vmatprep.subr.mxu0 0.0
        %2192 = vmatpush1.xpose.msra.mxu0 0.0
        %2193 = vmatprep.subr.mxu0 0.0
        %2194 = vmatpush1.xpose.msra.mxu0 0.0
        %2195 = vmatprep.subr.mxu0 0.0
        %2196 = vmatpush1.xpose.msra.mxu0 0.0
        %2197 = vmatprep.subr.mxu0 0.0
        %2198 = vmatpush1.xpose.msra.mxu0 0.0
        %2199 = vmatprep.subr.mxu0 0.0
        %2200 = vmatpush1.xpose.msra.mxu0 0.0
        %2201 = vmatprep.subr.mxu0 0.0
        %2202 = vmatpush1.xpose.msra.mxu0 0.0
        %2203 = vmatprep.subr.mxu0 0.0
        %2204 = vmatpush1.xpose.msra.mxu0 0.0
        %2205 = vmatprep.subr.mxu0 0.0
        %2206 = vmatpush1.xpose.msra.mxu0 0.0
        %2207 = vmatprep.subr.mxu0 0.0
        %2208 = vmatpush1.xpose.msra.mxu0 0.0
        %2209 = vmatprep.subr.mxu0 0.0
        %2210 = vmatpush1.xpose.msra.mxu0 0.0
        %2211 = vmatprep.subr.mxu0 0.0
        %2212 = vmatpush1.xpose.msra.mxu0 0.0
        %2213 = vmatprep.subr.mxu0 0.0
        %2214 = vmatpush1.xpose.msra.mxu0 0.0
        %2215 = vmatprep.subr.mxu0 0.0
        %2216 = vmatpush1.xpose.msra.mxu0 0.0
        %2217 = vmatprep.subr.mxu0 0.0
        %2218 = vmatpush1.xpose.msra.mxu0 0.0
        %2219 = vmatprep.mubr.f32.mxu0 0.0
        %2220 = vmatmul.mubr.f32.gmra.mrb[0].mxu0 %v2151
        %v2221 = vpop.f32.mrb[0].mxu0
        %v2222 = vadd.f32 0.0, %v2221
        %v2223 = vpop.f32.mrb[0].mxu0
        %2224 = vdwg.mxu0
        %s2225 = scalar_lea.vmem [#allocation3], 56
        %v2226 = vld [vmem:[%s2225] sm:$0xff]
        %v2227 = vsel %vm899, %v2222, -inf
        %2228 = vmax.xlane.f32.xlu0 %v2227
        %v2229 = vpop.xlane.xlu0 %2228
        %v2230 = vmax.f32 %v2226, %v2229
        %v2231 = vsub.f32 %v2226, %v2230
        %v2232 = vmul.f32 %v2231, 1.442695
        %v2233 = vpow.pop %v2232
        %2235 = vset.pattern.permute.xlu0 0
        %2236 = vperm.xlu0 %2235, %v2230
        %v2237 = vpop.permute.xlu0 %2236
        %v2239 = vsub.f32 %v2222, %v2237
        %v2240 = vmul.f32 %v2239, 1.442695
        %v2241 = vpow.pop %v2240
        %s2242 = scalar_lea.vmem [#allocation4], 56
        %v2243 = vld [vmem:[%s2242] sm:$0xff]
        %v2244 = vmul.f32 %v2233, %v2243
        %v2245 = vsel %vm899, %v2241, 0.0
        %2246 = vadd.xlane.f32.xlu0 %v2245
        %v2247 = vpop.xlane.xlu0 %2246
        %v2248 = vadd.f32 %v2244, %v2247
        %2249 = vst.msk [vmem:[%s2242] sm:$0xff] %vm921, %v2248
        %s2250 = scalar_lea.vmem [#allocation5], 56
        %v2251 = vld [vmem:[%s2250] sm:$0xff]
        %2253 = vset.pattern.permute.xlu0 0
        %2254 = vperm.xlu0 %2253, %v2233
        %v2255 = vpop.permute.xlu0 %2254
        %v2257 = vmul.f32 %v2255, %v2251
        %2258 = vrot.lane.b32.xlu0 %v817, 100
        %v2259 = vpop.permute.xlu0 %2258
        %v2262 = vsel %vm899, %v2241, 0
        %2264 = vmatprep.subr.mxu0 0.0
        %2265 = vmatpush1.msra.mxu0 %v2259
        %2266 = vmatprep.subr.mxu0 0.0
        %2267 = vmatpush1.msra.mxu0 0.0
        %2268 = vmatprep.subr.mxu0 0.0
        %2269 = vmatpush1.msra.mxu0 0.0
        %2270 = vmatprep.subr.mxu0 0.0
        %2271 = vmatpush1.msra.mxu0 0.0
        %2272 = vmatprep.subr.mxu0 0.0
        %2273 = vmatpush1.msra.mxu0 0.0
        %2274 = vmatprep.subr.mxu0 0.0
        %2275 = vmatpush1.msra.mxu0 0.0
        %2276 = vmatprep.subr.mxu0 0.0
        %2277 = vmatpush1.msra.mxu0 0.0
        %2278 = vmatprep.subr.mxu0 0.0
        %2279 = vmatpush1.msra.mxu0 0.0
        %2280 = vmatprep.subr.mxu0 0.0
        %2281 = vmatpush1.msra.mxu0 0.0
        %2282 = vmatprep.subr.mxu0 0.0
        %2283 = vmatpush1.msra.mxu0 0.0
        %2284 = vmatprep.subr.mxu0 0.0
        %2285 = vmatpush1.msra.mxu0 0.0
        %2286 = vmatprep.subr.mxu0 0.0
        %2287 = vmatpush1.msra.mxu0 0.0
        %2288 = vmatprep.subr.mxu0 0.0
        %2289 = vmatpush1.msra.mxu0 0.0
        %2290 = vmatprep.subr.mxu0 0.0
        %2291 = vmatpush1.msra.mxu0 0.0
        %2292 = vmatprep.subr.mxu0 0.0
        %2293 = vmatpush1.msra.mxu0 0.0
        %2294 = vmatprep.subr.mxu0 0.0
        %2295 = vmatpush1.msra.mxu0 0.0
        %2296 = vmatprep.subr.mxu0 0.0
        %2297 = vmatpush1.msra.mxu0 0.0
        %2298 = vmatprep.subr.mxu0 0.0
        %2299 = vmatpush1.msra.mxu0 0.0
        %2300 = vmatprep.subr.mxu0 0.0
        %2301 = vmatpush1.msra.mxu0 0.0
        %2302 = vmatprep.subr.mxu0 0.0
        %2303 = vmatpush1.msra.mxu0 0.0
        %2304 = vmatprep.subr.mxu0 0.0
        %2305 = vmatpush1.msra.mxu0 0.0
        %2306 = vmatprep.subr.mxu0 0.0
        %2307 = vmatpush1.msra.mxu0 0.0
        %2308 = vmatprep.subr.mxu0 0.0
        %2309 = vmatpush1.msra.mxu0 0.0
        %2310 = vmatprep.subr.mxu0 0.0
        %2311 = vmatpush1.msra.mxu0 0.0
        %2312 = vmatprep.subr.mxu0 0.0
        %2313 = vmatpush1.msra.mxu0 0.0
        %2314 = vmatprep.subr.mxu0 0.0
        %2315 = vmatpush1.msra.mxu0 0.0
        %2316 = vmatprep.subr.mxu0 0.0
        %2317 = vmatpush1.msra.mxu0 0.0
        %2318 = vmatprep.subr.mxu0 0.0
        %2319 = vmatpush1.msra.mxu0 0.0
        %2320 = vmatprep.subr.mxu0 0.0
        %2321 = vmatpush1.msra.mxu0 0.0
        %2322 = vmatprep.subr.mxu0 0.0
        %2323 = vmatpush1.msra.mxu0 0.0
        %2324 = vmatprep.subr.mxu0 0.0
        %2325 = vmatpush1.msra.mxu0 0.0
        %2326 = vmatprep.subr.mxu0 0.0
        %2327 = vmatpush1.msra.mxu0 0.0
        %2328 = vmatprep.mubr.f32.mxu0 0.0
        %2329 = vmatmul.mubr.f32.gmra.mrb[0].mxu0 %v2262
        %v2330 = vpop.f32.mrb[0].mxu0
        %v2331 = vadd.f32 0.0, %v2330
        %v2332 = vpop.f32.mrb[0].mxu0
        %2333 = vdwg.mxu0
        %v2334 = vadd.f32 %v2257, %v2331
        %2335 = vst.msk [vmem:[%s2250] sm:$0xff] %vm821, %v2334
        %2336 = vst.msk [vmem:[%s2225] sm:$0xff] %vm921, %v2230
        // Predicated region
        $region93: #{tpu_custom_call.1} parent=59 // pred_check
          %p2337 = pneg %p532
        $region94: #{tpu_custom_call.1} parent=59 // pred_check_branch
          %2339 = sbr.rel (%p2337) target = $region96
        $region95: #{tpu_custom_call.1} parent=59 // pred_region
          %v2340 = vld [vmem:[#allocation5] sm:$0xff]
          %v2341 = vld [vmem:[#allocation4] sm:$0xff]
          %v2342 = vrcp.pop %v2341
          %2344 = vset.pattern.permute.xlu0 0
          %2345 = vperm.xlu0 %2344, %v2342
          %v2346 = vpop.permute.xlu0 %2345
          %v2348 = vmul.f32 %v2340, %v2346
          %v2349 = vld [vmem:[%s1109] sm:$0xff]
          %v2350 = vld [vmem:[%s1101] sm:$0xff]
          %v2351 = vrcp.pop %v2350
          %2353 = vset.pattern.permute.xlu0 0
          %2354 = vperm.xlu0 %2353, %v2351
          %v2355 = vpop.permute.xlu0 %2354
          %v2357 = vmul.f32 %v2349, %v2355
          %v2358 = vld [vmem:[%s1300] sm:$0xff]
          %v2359 = vld [vmem:[%s1292] sm:$0xff]
          %v2360 = vrcp.pop %v2359
          %2362 = vset.pattern.permute.xlu0 0
          %2363 = vperm.xlu0 %2362, %v2360
          %v2364 = vpop.permute.xlu0 %2363
          %v2366 = vmul.f32 %v2358, %v2364
          %v2367 = vld [vmem:[%s1490] sm:$0xff]
          %v2368 = vld [vmem:[%s1482] sm:$0xff]
          %v2369 = vrcp.pop %v2368
          %2371 = vset.pattern.permute.xlu0 0
          %2372 = vperm.xlu0 %2371, %v2369
          %v2373 = vpop.permute.xlu0 %2372
          %v2375 = vmul.f32 %v2367, %v2373
          %v2376 = vld [vmem:[%s1680] sm:$0xff]
          %v2377 = vld [vmem:[%s1672] sm:$0xff]
          %v2378 = vrcp.pop %v2377
          %2380 = vset.pattern.permute.xlu0 0
          %2381 = vperm.xlu0 %2380, %v2378
          %v2382 = vpop.permute.xlu0 %2381
          %v2384 = vmul.f32 %v2376, %v2382
          %v2385 = vld [vmem:[%s1870] sm:$0xff]
          %v2386 = vld [vmem:[%s1862] sm:$0xff]
          %v2387 = vrcp.pop %v2386
          %2389 = vset.pattern.permute.xlu0 0
          %2390 = vperm.xlu0 %2389, %v2387
          %v2391 = vpop.permute.xlu0 %2390
          %v2393 = vmul.f32 %v2385, %v2391
          %v2394 = vld [vmem:[%s2060] sm:$0xff]
          %v2395 = vld [vmem:[%s2052] sm:$0xff]
          %v2396 = vrcp.pop %v2395
          %2398 = vset.pattern.permute.xlu0 0
          %2399 = vperm.xlu0 %2398, %v2396
          %v2400 = vpop.permute.xlu0 %2399
          %v2402 = vmul.f32 %v2394, %v2400
          %v2403 = vld [vmem:[%s2250] sm:$0xff]
          %v2404 = vld [vmem:[%s2242] sm:$0xff]
          %v2405 = vrcp.pop %v2404
          %2407 = vset.pattern.permute.xlu0 0
          %2408 = vperm.xlu0 %2407, %v2405
          %v2409 = vpop.permute.xlu0 %2408
          %v2411 = vmul.f32 %v2403, %v2409
          %2413 = vrot.lane.b32.xlu0 %v2357, 4
          %v2414 = vpop.permute.xlu0 %2413
          %2417 = vrot.lane.b32.xlu0 %v2366, 8
          %v2418 = vpop.permute.xlu0 %2417
          %2421 = vrot.lane.b32.xlu0 %v2375, 12
          %v2422 = vpop.permute.xlu0 %2421
          %2425 = vrot.lane.b32.xlu0 %v2384, 16
          %v2426 = vpop.permute.xlu0 %2425
          %2429 = vrot.lane.b32.xlu0 %v2393, 20
          %v2430 = vpop.permute.xlu0 %2429
          %2433 = vrot.lane.b32.xlu0 %v2402, 24
          %v2434 = vpop.permute.xlu0 %2433
          %2437 = vrot.lane.b32.xlu0 %v2411, 28
          %v2438 = vpop.permute.xlu0 %2437
          %v2440 = vsel %vm821, %v2348, %v2414
          %v2441 = vsel %vm899, %v2440, %v2418
          %vm2442 = vcmask 97280
          %v2443 = vsel %vm2442, %v2441, %v2422
          %vm2444 = vcmask 130048
          %v2445 = vsel %vm2444, %v2443, %v2426
          %vm2446 = vcmask 162816
          %v2447 = vsel %vm2446, %v2445, %v2430
          %vm2448 = vcmask 195584
          %v2449 = vsel %vm2448, %v2447, %v2434
          %vm2450 = vcmask 228352
          %v2451 = vsel %vm2450, %v2449, %v2438
          %v2452 = vld [vmem:[%s9] sm:$0xff]
          %v2453 = vld [vmem:[%s9 + $0x8] sm:$0xff]
          %v2454 = vld [vmem:[%s9 + $0x10] sm:$0xff]
          %v2455 = vld [vmem:[%s9 + $0x18] sm:$0xff]
          %v2457 = vsel %vm662, %v2451, 0
          %2459 = vmatprep.subr.mxu0 0.0
          %2460 = vmatpush1.msra.mxu0 %v2452
          %2461 = vmatprep.subr.mxu0 0.0
          %2462 = vmatpush1.msra.mxu0 %v2453
          %2463 = vmatprep.subr.mxu0 0.0
          %2464 = vmatpush1.msra.mxu0 %v2454
          %2465 = vmatprep.subr.mxu0 0.0
          %2466 = vmatpush1.msra.mxu0 %v2455
          %2467 = vmatprep.subr.mxu0 0.0
          %2468 = vmatpush1.msra.mxu0 0.0
          %2469 = vmatprep.subr.mxu0 0.0
          %2470 = vmatpush1.msra.mxu0 0.0
          %2471 = vmatprep.subr.mxu0 0.0
          %2472 = vmatpush1.msra.mxu0 0.0
          %2473 = vmatprep.subr.mxu0 0.0
          %2474 = vmatpush1.msra.mxu0 0.0
          %2475 = vmatprep.subr.mxu0 0.0
          %2476 = vmatpush1.msra.mxu0 0.0
          %2477 = vmatprep.subr.mxu0 0.0
          %2478 = vmatpush1.msra.mxu0 0.0
          %2479 = vmatprep.subr.mxu0 0.0
          %2480 = vmatpush1.msra.mxu0 0.0
          %2481 = vmatprep.subr.mxu0 0.0
          %2482 = vmatpush1.msra.mxu0 0.0
          %2483 = vmatprep.subr.mxu0 0.0
          %2484 = vmatpush1.msra.mxu0 0.0
          %2485 = vmatprep.subr.mxu0 0.0
          %2486 = vmatpush1.msra.mxu0 0.0
          %2487 = vmatprep.subr.mxu0 0.0
          %2488 = vmatpush1.msra.mxu0 0.0
          %2489 = vmatprep.subr.mxu0 0.0
          %2490 = vmatpush1.msra.mxu0 0.0
          %2491 = vmatprep.subr.mxu0 0.0
          %2492 = vmatpush1.msra.mxu0 0.0
          %2493 = vmatprep.subr.mxu0 0.0
          %2494 = vmatpush1.msra.mxu0 0.0
          %2495 = vmatprep.subr.mxu0 0.0
          %2496 = vmatpush1.msra.mxu0 0.0
          %2497 = vmatprep.subr.mxu0 0.0
          %2498 = vmatpush1.msra.mxu0 0.0
          %2499 = vmatprep.subr.mxu0 0.0
          %2500 = vmatpush1.msra.mxu0 0.0
          %2501 = vmatprep.subr.mxu0 0.0
          %2502 = vmatpush1.msra.mxu0 0.0
          %2503 = vmatprep.subr.mxu0 0.0
          %2504 = vmatpush1.msra.mxu0 0.0
          %2505 = vmatprep.subr.mxu0 0.0
          %2506 = vmatpush1.msra.mxu0 0.0
          %2507 = vmatprep.subr.mxu0 0.0
          %2508 = vmatpush1.msra.mxu0 0.0
          %2509 = vmatprep.subr.mxu0 0.0
          %2510 = vmatpush1.msra.mxu0 0.0
          %2511 = vmatprep.subr.mxu0 0.0
          %2512 = vmatpush1.msra.mxu0 0.0
          %2513 = vmatprep.subr.mxu0 0.0
          %2514 = vmatpush1.msra.mxu0 0.0
          %2515 = vmatprep.subr.mxu0 0.0
          %2516 = vmatpush1.msra.mxu0 0.0
          %2517 = vmatprep.subr.mxu0 0.0
          %2518 = vmatpush1.msra.mxu0 0.0
          %2519 = vmatprep.subr.mxu0 0.0
          %2520 = vmatpush1.msra.mxu0 0.0
          %2521 = vmatprep.subr.mxu0 0.0
          %2522 = vmatpush1.msra.mxu0 0.0
          %2523 = vmatprep.mubr.f32.mxu0 0.0
          %2524 = vmatmul.mubr.f32.gmra.mrb[0].mxu0 %v2457
          %v2525 = vpop.f32.mrb[0].mxu0
          %v2526 = vadd.f32 0.0, %v2525
          %v2527 = vpop.f32.mrb[0].mxu0
          %2528 = vdwg.mxu0
          %2529 = vst [vmem:[%s531] sm:$0xff] %v2526
        $region96: #{tpu_custom_call.1} parent=59 // pred_fallthru
          _
        %s2530 = sand.u32 %s292, 1
        %s2531 = scalar_lea.sflag [#allocation8], %s2530
        %s2532 = sand.u32 %s292, 1
        %s2533 = smul.addr %s2532, 8
        %s2534 = scalar_lea.vmem [#allocation18], %s2533
        // Predicated region
        $region97: #{tpu_custom_call.1} parent=59 // pred_check
          %p2535 = pneg %p302
        $region98: #{tpu_custom_call.1} parent=59 // pred_check_branch
          %2537 = sbr.rel (%p2535) target = $region100
        $region99: #{tpu_custom_call.1} parent=59 // pred_region
          %s2539 = ssub.s32 128, 128
          %2540 = vsyncadd %s2531, %s2539
          %s2541 = sadd.s32 %s38, %s37
          %s2542 = smul.addr %s2541, 128
          %s2543 = scalar_lea.hbm %s10, %s2542
          %s2545 = sshll.u32 %s2534, 4
          %s2546 = int_to_ptr.vmem [resolvable:$true] %s2545
          %2548 = dma.vmem_to_hbm [thread:$0]  %s2546, 128, %s2543, %s2531
        $region100: #{tpu_custom_call.1} parent=59 // pred_fallthru
          _
      $region60: #{tpu_custom_call.1} parent=5 // pred_fallthru
        _
      %p2549 = scmp.le.s32.totalorder 2, %s27
      // Predicated region
      $region101: #{tpu_custom_call.1} parent=5 // pred_check
        %p2550 = pneg %p2549
      $region102: #{tpu_custom_call.1} parent=5 // pred_check_branch
        %2552 = sbr.rel (%p2550) target = $region104
      $region103: #{tpu_custom_call.1} parent=5 // pred_region
        %s2553 = ssub.s32 %s27, 2
        // Predicated region
        $region105: #{tpu_custom_call.1} parent=103 // pred_check
          %p2554 = pneg %p308
        $region106: #{tpu_custom_call.1} parent=103 // pred_check_branch
          %2556 = sbr.rel (%p2554) target = $region108
        $region107: #{tpu_custom_call.1} parent=103 // pred_region
          %s2557 = sand.u32 %s293, 1
          %s2558 = scalar_lea.sflag [#allocation8], %s2557
          %s2559 = sand.u32 %s293, 1
          %s2560 = smul.addr %s2559, 8
          %s2561 = scalar_lea.vmem [#allocation18], %s2560
          %2562 = dma.done %s2558, 128
        $region108: #{tpu_custom_call.1} parent=103 // pred_fallthru
          _
      $region104: #{tpu_custom_call.1} parent=5 // pred_fallthru
        _
    $region6: #{tpu_custom_call.1} parent=1 // loop_footer
      %s31 = sadd.s32 1, %s27
    $region7: #{tpu_custom_call.1} parent=1 // loop_footer_branch
      %26 = sbr.rel target = $region3
    $region8: #{tpu_custom_call.1} parent=1 // loop_exit
      _
    %2563 = vsyncpa [#allocation7], 1
    %s2564 = scalar_lea.sflag [#allocation7], 1
    %2565 = vsyncpa %s2564, 1
    %2566 = vsyncpa [#allocation10], 1
    %s2567 = scalar_lea.sflag [#allocation10], 1
    %2568 = vsyncpa %s2567, 1
    %2569 = vsyncpa [#allocation13], 1
    %2570 = vsyncpa [#allocation16], 1
    %2571 = vsyncpa [#allocation8], 1
    %s2572 = scalar_lea.sflag [#allocation8], 1
    %2573 = vsyncpa %s2572, 1

</llo_original>
